<compile_context>
chip_gen: v7x
topology: tpu7x:2x2x1
jax: 0.10.0
libtpu: 0.0.40
codegen_flags: <defaults>
</compile_context>

<pallas_src>
import functools
import math

import jax
import jax.numpy as jnp
import numpy as np
from jax.experimental import pallas as pl
from jax.experimental.pallas import tpu as pltpu

HIDDEN_SZ = 20          # matches nn.LSTMCell(_, hidden_sz=20) default
PREPROC_FACTOR = 10.0
LANES = 128


def _round_up(x, m):
  return ((x + m - 1) // m) * m


def _cdiv(a, b):
  return -(-a // b)


def _slab_layout(hidden_sz, in_dim):
  """Row offsets of each weight inside the packed (rows, 128) weight slab."""
  H = hidden_sz
  r_b1, r_b2, r_out = 0, 1, 2
  r_wih1 = 8
  r_whh1 = _round_up(r_wih1 + in_dim, 8)
  # Layer-2 input and hidden weights packed CONTIGUOUSLY so the kernel can run
  # a single fused K=2H matmul: rows [w2, w2+H) = wih2^T, [w2+H, w2+2H) = whh2^T.
  r_w2 = _round_up(r_whh1 + H, 8)
  rows = _round_up(r_w2 + 2 * H, 8)
  return dict(b1=r_b1, b2=r_b2, out=r_out, wih1=r_wih1, whh1=r_whh1,
              w2=r_w2, rows=rows)


def _padded_rows(n, block_rows):
  """Smallest row count >= n that is a multiple of 8 and tiles evenly into
  blocks of ~block_rows rows (so no phantom rows beyond one block's worth)."""
  n8 = _round_up(max(n, 1), 8)
  nb = max(1, _cdiv(n8, block_rows))
  br = _round_up(_cdiv(n8, nb), 8)
  return br * nb


def _pick_block_rows(rows, block_rows):
  """Largest multiple of 8 <= block_rows that divides rows (rows % 8 == 0)."""
  br = min(_round_up(min(block_rows, rows), 8), rows)
  while rows % br:
    br -= 8
  return max(br, 8)


# ----------------------------- kernel -----------------------------
def _optimizer_kernel(in_ref, w_ref, out_ref, *, preproc, preproc_factor,
                      hidden_sz, layout):
  H = hidden_sz
  G = 4 * H

  packed = in_ref[...]                                   # (P, 128) lane-dense load
  g = packed[:, 0:1]
  h0 = packed[:, 1:1 + H]
  c0 = packed[:, 1 + H:1 + 2 * H]
  h1 = packed[:, 1 + 2 * H:1 + 3 * H]
  c1 = packed[:, 1 + 3 * H:1 + 4 * H]

  b1 = w_ref[layout['b1']:layout['b1'] + 1, 0:G]          # (1, 4H) = b_ih + b_hh
  b2 = w_ref[layout['b2']:layout['b2'] + 1, 0:G]
  wout = w_ref[layout['out']:layout['out'] + 1, 0:H]      # (1, H)
  bout = w_ref[layout['out']:layout['out'] + 1, H:H + 1]  # (1, 1)

  # ---- optional log/sign preprocessing (matches the PyTorch branch) ----
  rx = layout['wih1']
  if preproc:
    absg = jnp.abs(g)
    keep = absg >= jnp.float32(math.exp(-preproc_factor))
    col0 = jnp.where(keep, jnp.log(absg + 1e-8) / jnp.float32(preproc_factor),
                     jnp.float32(-1.0))
    col1 = jnp.where(keep, jnp.sign(g),
                     jnp.float32(math.exp(preproc_factor)) * g)
    # K=2 "matmul" as VPU broadcast-mul (avoids a near-empty MXU pass)
    gates1_x = col0 * w_ref[rx:rx + 1, 0:G] + col1 * w_ref[rx + 1:rx + 2, 0:G]
  else:
    gates1_x = g * w_ref[rx:rx + 1, 0:G]

  def cell(gates, c):
    # Gate columns were permuted at pack time to [i, f, o, g]:
    # one fused sigmoid over 3H lanes + one tanh over H lanes.
    sig = jax.nn.sigmoid(gates[:, 0:3 * H])
    i_g = sig[:, 0:H]
    f_g = sig[:, H:2 * H]
    o_g = sig[:, 2 * H:3 * H]
    g_g = jnp.tanh(gates[:, 3 * H:4 * H])
    c_new = f_g * c + i_g * g_g
    h_new = o_g * jnp.tanh(c_new)
    return h_new, c_new

  rh1 = layout['whh1']
  gates1 = (gates1_x
            + jnp.dot(h0, w_ref[rh1:rh1 + H, 0:G],
                      preferred_element_type=jnp.float32)
            + b1)
  h0n, c0n = cell(gates1, c0)

  # Layer 2: single fused K=2H matmul (wih2 and whh2 packed contiguously).
  rw2 = layout['w2']
  lhs2 = jnp.concatenate([h0n, h1], axis=1)               # (P, 2H)
  gates2 = (jnp.dot(lhs2, w_ref[rw2:rw2 + 2 * H, 0:G],
                    preferred_element_type=jnp.float32)
            + b2)
  h1n, c1n = cell(gates2, c1)

  # 20 -> 1 projection on the VPU + lane reduce (no 1-lane-wide MXU result).
  upd = jnp.sum(h1n * wout, axis=1, keepdims=True) + bout

  # Direct sub-slice stores; pad lanes [1+4H, 128) are intentionally NOT
  # written (their HBM contents are unspecified but never read by callers).
  out_ref[:, 0:1] = upd
  out_ref[:, 1:1 + H] = h0n
  out_ref[:, 1 + H:1 + 2 * H] = c0n
  out_ref[:, 1 + 2 * H:1 + 3 * H] = h1n
  out_ref[:, 1 + 3 * H:1 + 4 * H] = c1n


# ----------------------------- slab API (hot path) -----------------------------
def pack_state(inp, h0, c0, h1, c1, *, hidden_sz=HIDDEN_SZ, block_rows=2048):
  """ONE-TIME conversion of (grad, states) into the resident (rows, 128) slab."""
  N = inp.shape[0]
  H = hidden_sz
  width = 1 + 4 * H
  rows = _padded_rows(N, block_rows)
  slab = jnp.concatenate(
      [inp.reshape(N, 1).astype(jnp.float32),
       h0.astype(jnp.float32), c0.astype(jnp.float32),
       h1.astype(jnp.float32), c1.astype(jnp.float32)], axis=1)
  return jnp.pad(slab, ((0, rows - N), (0, LANES - width)))


def unpack_state(slab, n, *, hidden_sz=HIDDEN_SZ):
  """ONE-TIME conversion back to (update, h0, c0, h1, c1)."""
  H = hidden_sz
  return (slab[:n, 0:1],
          slab[:n, 1:1 + H], slab[:n, 1 + H:1 + 2 * H],
          slab[:n, 1 + 2 * H:1 + 3 * H], slab[:n, 1 + 3 * H:1 + 4 * H])


def optimizer_step_slab(slab, weight_slab, *, preproc=False,
                        preproc_factor=PREPROC_FACTOR, hidden_sz=HIDDEN_SZ,
                        block_rows=2048, in_place=True):
  """One Optimizer.forward over a resident state slab.

  slab: (rows, 128) f32, rows % 8 == 0; lane 0 = grad, lanes 1..1+4H = states.
  Returns a slab of the same shape: lane 0 = update, lanes 1..1+4H = new states.
  With in_place=True the input slab buffer is donated (updated in place).
  """
  rows, lanes = slab.shape
  assert lanes == LANES and rows % 8 == 0
  H = hidden_sz
  G = 4 * H
  in_dim = 2 if preproc else 1
  layout = _slab_layout(H, in_dim)
  assert weight_slab.shape == (layout['rows'], LANES)

  br = _pick_block_rows(rows, block_rows)
  grid = rows // br

  kernel = functools.partial(_optimizer_kernel, preproc=preproc,
                             preproc_factor=preproc_factor,
                             hidden_sz=H, layout=layout)

  weight_bytes = layout['rows'] * LANES * 4
  io_block_bytes = br * LANES * 4
  vmem_est = 4 * io_block_bytes + 2 * weight_bytes + 16 * br * G * 4
  vmem_limit = int(min(max(2 * vmem_est, 32 << 20), 64 << 20))

  flops_per_row = 2 * (in_dim * G + H * G + 2 * H * G) + 12 * G + 2 * H
  transc_per_row = 2 * (3 * H + 2 * H) + (2 if preproc else 0)
  cost = pl.CostEstimate(
      flops=int(rows * flops_per_row),
      transcendentals=int(rows * transc_per_row),
      bytes_accessed=int(2 * rows * LANES * 4 + weight_bytes))

  return pl.pallas_call(
      kernel,
      out_shape=jax.ShapeDtypeStruct((rows, LANES), jnp.float32),
      grid_spec=pltpu.PrefetchScalarGridSpec(
          num_scalar_prefetch=0,
          grid=(grid,),
          in_specs=[
              pl.BlockSpec((br, LANES), lambda i: (i, 0)),              # state slab
              pl.BlockSpec((layout['rows'], LANES), lambda i: (0, 0)),  # weights
          ],
          out_specs=pl.BlockSpec((br, LANES), lambda i: (i, 0)),
      ),
      compiler_params=pltpu.CompilerParams(
          dimension_semantics=("parallel",),
          vmem_limit_bytes=vmem_limit),
      cost_estimate=cost,
      input_output_aliases={0: 0} if in_place else {},
  )(slab, weight_slab)


def optimizer_forward(inp, h0, c0, h1, c1, weight_slab, *,
                      preproc=False, preproc_factor=PREPROC_FACTOR,
                      hidden_sz=HIDDEN_SZ, block_rows=2048):
  """Convenience one-off wrapper (pack -> step -> unpack).

  NOTE: for multi-step use, keep the state resident with
  pack_state()/optimizer_step_slab() instead of calling this per step
  (avoids re-streaming the state through HBM for pack/unpack every step).
  """
  N = inp.shape[0]
  slab = pack_state(inp, h0, c0, h1, c1, hidden_sz=hidden_sz,
                    block_rows=block_rows)
  slab = optimizer_step_slab(slab, weight_slab, preproc=preproc,
                             preproc_factor=preproc_factor,
                             hidden_sz=hidden_sz, block_rows=block_rows)
  return unpack_state(slab, N, hidden_sz=hidden_sz)


# -------- parameter init (PyTorch nn.LSTMCell / nn.Linear layout) --------
def init_torch_params(key, hidden_sz=HIDDEN_SZ, preproc=False):
  H = hidden_sz
  in_dim = 2 if preproc else 1
  ks = jax.random.split(key, 10)

  def u(k, shape, bound):
    return jax.random.uniform(k, shape, jnp.float32, -bound, bound)

  b = 1.0 / math.sqrt(H)
  wih1 = u(ks[0], (4 * H, in_dim), b)   # LSTMCell #1, PyTorch (4H, in) layout
  whh1 = u(ks[1], (4 * H, H), b)
  bih1 = u(ks[2], (4 * H,), b)
  bhh1 = u(ks[3], (4 * H,), b)
  wih2 = u(ks[4], (4 * H, H), b)        # LSTMCell #2
  whh2 = u(ks[5], (4 * H, H), b)
  bih2 = u(ks[6], (4 * H,), b)
  bhh2 = u(ks[7], (4 * H,), b)
  wout = u(ks[8], (1, H), b)            # Linear(H, 1)
  bout = u(ks[9], (1,), b)
  return (wih1, whh1, bih1, bhh1, wih2, whh2, bih2, bhh2, wout, bout)


def pack_params(torch_params, hidden_sz=HIDDEN_SZ, preproc=False):
  """Build the (rows, 128) weight slab consumed by the kernel."""
  H = hidden_sz
  G = 4 * H
  in_dim = 2 if preproc else 1
  layout = _slab_layout(H, in_dim)
  (wih1, whh1, bih1, bhh1, wih2, whh2, bih2, bhh2, wout, bout) = torch_params

  # Permute gate blocks from PyTorch (i, f, g, o) -> (i, f, o, g) so the kernel
  # runs one fused sigmoid over the first 3H gate lanes.
  perm = jnp.asarray(np.concatenate([np.arange(0, 2 * H),
                                     np.arange(3 * H, 4 * H),
                                     np.arange(2 * H, 3 * H)]))

  def w_t(w):          # (4H, K) -> (K, 4H), permuted gate columns
    return jnp.transpose(w)[:, perm]

  def b_sum(bi, bh):   # pre-summed b_ih + b_hh, permuted
    return (bi + bh)[perm][None, :]

  slab = jnp.zeros((layout['rows'], LANES), jnp.float32)
  slab = slab.at[layout['b1']:layout['b1'] + 1, 0:G].set(b_sum(bih1, bhh1))
  slab = slab.at[layout['b2']:layout['b2'] + 1, 0:G].set(b_sum(bih2, bhh2))
  slab = slab.at[layout['out']:layout['out'] + 1, 0:H].set(wout)
  slab = slab.at[layout['out'], H].set(bout[0])
  slab = slab.at[layout['wih1']:layout['wih1'] + in_dim, 0:G].set(w_t(wih1))
  slab = slab.at[layout['whh1']:layout['whh1'] + H, 0:G].set(w_t(whh1))
  # Layer-2 weights contiguous: [wih2^T ; whh2^T] for the fused K=2H dot.
  slab = slab.at[layout['w2']:layout['w2'] + H, 0:G].set(w_t(wih2))
  slab = slab.at[layout['w2'] + H:layout['w2'] + 2 * H, 0:G].set(w_t(whh2))
  return slab


# -------- pure-JAX reference (PyTorch math, PyTorch layout) --------
def reference_forward(inp, h0, c0, h1, c1, torch_params, *, preproc,
                      preproc_factor, hidden_sz):
  H = hidden_sz
  (wih1, whh1, bih1, bhh1, wih2, whh2, bih2, bhh2, wout, bout) = torch_params
  x = inp
  if preproc:
    g = x[:, 0:1]
    absg = jnp.abs(g)
    keep = absg >= math.exp(-preproc_factor)
    col0 = jnp.where(keep, jnp.log(absg + 1e-8) / preproc_factor, -1.0)
    col1 = jnp.where(keep, jnp.sign(g), math.exp(preproc_factor) * g)
    x = jnp.concatenate([col0, col1], axis=1)

  def cell(xin, h, c, wih, whh, bih, bhh):
    gates = xin @ wih.T + bih + h @ whh.T + bhh
    i_g = jax.nn.sigmoid(gates[:, 0:H])
    f_g = jax.nn.sigmoid(gates[:, H:2 * H])
    g_g = jnp.tanh(gates[:, 2 * H:3 * H])
    o_g = jax.nn.sigmoid(gates[:, 3 * H:4 * H])
    c_new = f_g * c + i_g * g_g
    return o_g * jnp.tanh(c_new), c_new

  nh0, nc0 = cell(x, h0, c0, wih1, whh1, bih1, bhh1)
  nh1, nc1 = cell(nh0, h1, c1, wih2, whh2, bih2, bhh2)
  out = nh1 @ wout.T + bout
  return out, nh0, nc0, nh1, nc1


# TODO(synk): meta_optimize() (training loop / OptimizerBatchManager) is host-side
# orchestration, not a kernel; only the per-coordinate forward is implemented here.

if __name__ == "__main__":
  H = HIDDEN_SZ
  key = jax.random.PRNGKey(0)
  k_inp, k_h0, k_c0, k_h1, k_c1, k_par, k_g2 = jax.random.split(key, 7)

  def close(a, b):
    return np.allclose(np.asarray(a), np.asarray(b), rtol=1e-5, atol=1e-5)

  ok = True
  # Small shapes: one multi-step grid, one non-multiple N (exercises padding /
  # block-divisor selection). block_rows is the sweepable tile knob.
  for N, block_rows in ((1024, 256), (1000, 512)):
    inp = 0.01 * jax.random.normal(k_inp, (N, 1), jnp.float32)   # gradients
    h0 = 0.1 * jax.random.normal(k_h0, (N, H), jnp.float32)
    c0 = 0.1 * jax.random.normal(k_c0, (N, H), jnp.float32)
    h1 = 0.1 * jax.random.normal(k_h1, (N, H), jnp.float32)
    c1 = 0.1 * jax.random.normal(k_c1, (N, H), jnp.float32)

    for preproc in (False, True):
      tparams = init_torch_params(k_par, hidden_sz=H, preproc=preproc)
      wslab = pack_params(tparams, hidden_sz=H, preproc=preproc)

      # Hot-path flow: pack once, step on the resident slab (in place).
      slab = pack_state(inp, h0, c0, h1, c1, hidden_sz=H, block_rows=block_rows)
      slab = optimizer_step_slab(slab, wslab, preproc=preproc,
                                 preproc_factor=PREPROC_FACTOR, hidden_sz=H,
                                 block_rows=block_rows)
      slab = jax.block_until_ready(slab)
      outs = unpack_state(slab, N, hidden_sz=H)
      refs = reference_forward(inp, h0, c0, h1, c1, tparams, preproc=preproc,
                               preproc_factor=PREPROC_FACTOR, hidden_sz=H)
      for o, r in zip(outs, refs):
        if not close(o, r):
          ok = False

  # Chained 2-step check: state stays resident in the slab between steps,
  # only the gradient lane is refreshed.
  N, block_rows, preproc = 1024, 256, True
  inp = 0.01 * jax.random.normal(k_inp, (N, 1), jnp.float32)
  h0 = 0.1 * jax.random.normal(k_h0, (N, H), jnp.float32)
  c0 = 0.1 * jax.random.normal(k_c0, (N, H), jnp.float32)
  h1 = 0.1 * jax.random.normal(k_h1, (N, H), jnp.float32)
  c1 = 0.1 * jax.random.normal(k_c1, (N, H), jnp.float32)
  grad2 = 0.02 * jax.random.normal(k_g2, (N, 1), jnp.float32)
  tparams = init_torch_params(k_par, hidden_sz=H, preproc=preproc)
  wslab = pack_params(tparams, hidden_sz=H, preproc=preproc)

  slab = pack_state(inp, h0, c0, h1, c1, hidden_sz=H, block_rows=block_rows)
  slab = optimizer_step_slab(slab, wslab, preproc=preproc, hidden_sz=H,
                             block_rows=block_rows)
  slab = slab.at[:N, 0:1].set(grad2)          # refresh gradient lane only
  slab = optimizer_step_slab(slab, wslab, preproc=preproc, hidden_sz=H,
                             block_rows=block_rows)
  slab = jax.block_until_ready(slab)
  outs2 = unpack_state(slab, N, hidden_sz=H)

  r1 = reference_forward(inp, h0, c0, h1, c1, tparams, preproc=preproc,
                         preproc_factor=PREPROC_FACTOR, hidden_sz=H)
  r2 = reference_forward(grad2, r1[1], r1[2], r1[3], r1[4], tparams,
                         preproc=preproc, preproc_factor=PREPROC_FACTOR,
                         hidden_sz=H)
  for o, r in zip(outs2, r2):
    if not close(o, r):
      ok = False

  if ok:
    print("KERNEL_OK")
  else:
    raise SystemExit("mismatch vs reference")
</pallas_src>

<mosaic_0001>
module attributes {stable_mosaic.version = 11 : i64} {
  func.func @_optimizer_kernel(%arg0: i32, %arg1: memref<256x128xf32, #tpu.memory_space<vmem>>, %arg2: memref<80x128xf32, #tpu.memory_space<vmem>>, %arg3: memref<256x128xf32, #tpu.memory_space<vmem>>) attributes {dimension_semantics = [#tpu.dimension_semantics<parallel>], iteration_bounds = array<i64: 4>, scalar_prefetch = 0 : i64, scratch_operands = 0 : i64, tpu.core_type = #tpu.core_type<tc>, window_params = [{transform_indices = @transform_0, window_bounds = array<i64: 256, 128>}, {pipeline_mode = #tpu.pipeline_mode<synchronous>, transform_indices = @transform_1, window_bounds = array<i64: 80, 128>}, {transform_indices = @transform_2, window_bounds = array<i64: 256, 128>}]} {
    %c0 = arith.constant 0 : index
    %c0_0 = arith.constant 0 : index
    %0 = vector.load %arg1[%c0, %c0_0] : memref<256x128xf32, #tpu.memory_space<vmem>>, vector<256x128xf32>
    %1 = vector.extract_strided_slice %0 {offsets = [0, 0], sizes = [256, 1], strides = [1, 1]} : vector<256x128xf32> to vector<256x1xf32>
    %2 = vector.extract_strided_slice %0 {offsets = [0, 1], sizes = [256, 20], strides = [1, 1]} : vector<256x128xf32> to vector<256x20xf32>
    %3 = vector.extract_strided_slice %0 {offsets = [0, 21], sizes = [256, 20], strides = [1, 1]} : vector<256x128xf32> to vector<256x20xf32>
    %4 = vector.extract_strided_slice %0 {offsets = [0, 41], sizes = [256, 20], strides = [1, 1]} : vector<256x128xf32> to vector<256x20xf32>
    %5 = vector.extract_strided_slice %0 {offsets = [0, 61], sizes = [256, 20], strides = [1, 1]} : vector<256x128xf32> to vector<256x20xf32>
    %c0_1 = arith.constant 0 : index
    %c0_2 = arith.constant 0 : index
    %6 = vector.load %arg2[%c0_1, %c0_2] : memref<80x128xf32, #tpu.memory_space<vmem>>, vector<1x80xf32>
    %c1 = arith.constant 1 : index
    %c0_3 = arith.constant 0 : index
    %7 = vector.load %arg2[%c1, %c0_3] : memref<80x128xf32, #tpu.memory_space<vmem>>, vector<1x80xf32>
    %c2 = arith.constant 2 : index
    %c0_4 = arith.constant 0 : index
    %8 = vector.load %arg2[%c2, %c0_4] : memref<80x128xf32, #tpu.memory_space<vmem>>, vector<1x20xf32>
    %c2_5 = arith.constant 2 : index
    %c20 = arith.constant 20 : index
    %9 = vector.load %arg2[%c2_5, %c20] : memref<80x128xf32, #tpu.memory_space<vmem>>, vector<1x1xf32>
    %c8 = arith.constant 8 : index
    %c0_6 = arith.constant 0 : index
    %10 = vector.load %arg2[%c8, %c0_6] : memref<80x128xf32, #tpu.memory_space<vmem>>, vector<1x80xf32>
    %11 = vector.broadcast %1 : vector<256x1xf32> to vector<256x80xf32>
    %12 = vector.broadcast %10 : vector<1x80xf32> to vector<256x80xf32>
    %13 = arith.mulf %11, %12 : vector<256x80xf32>
    %c16 = arith.constant 16 : index
    %c0_7 = arith.constant 0 : index
    %14 = vector.load %arg2[%c16, %c0_7] : memref<80x128xf32, #tpu.memory_space<vmem>>, vector<20x80xf32>
    %cst = arith.constant dense<0.000000e+00> : vector<256x80xf32>
    %15 = tpu.matmul %2, %14, %cst {dimension_numbers = #tpu.dot_dimension_numbers<[1], [0], [0], [1], [0, 0, 1, 1], [], []>} : vector<256x20xf32>, vector<20x80xf32>, vector<256x80xf32> -> vector<256x80xf32>
    %16 = arith.addf %13, %15 : vector<256x80xf32>
    %17 = vector.broadcast %6 : vector<1x80xf32> to vector<256x80xf32>
    %18 = arith.addf %16, %17 : vector<256x80xf32>
    %19 = vector.extract_strided_slice %18 {offsets = [0, 0], sizes = [256, 60], strides = [1, 1]} : vector<256x80xf32> to vector<256x60xf32>
    %20 = arith.negf %19 : vector<256x60xf32>
    %21 = math.exp %20 : vector<256x60xf32>
    %cst_8 = arith.constant 1.000000e+00 : f32
    %22 = vector.broadcast %cst_8 : f32 to vector<256x60xf32>
    %23 = arith.addf %22, %21 : vector<256x60xf32>
    %24 = arith.divf %22, %23 : vector<256x60xf32>
    %25 = vector.extract_strided_slice %24 {offsets = [0, 0], sizes = [256, 20], strides = [1, 1]} : vector<256x60xf32> to vector<256x20xf32>
    %26 = vector.extract_strided_slice %24 {offsets = [0, 20], sizes = [256, 20], strides = [1, 1]} : vector<256x60xf32> to vector<256x20xf32>
    %27 = vector.extract_strided_slice %24 {offsets = [0, 40], sizes = [256, 20], strides = [1, 1]} : vector<256x60xf32> to vector<256x20xf32>
    %28 = vector.extract_strided_slice %18 {offsets = [0, 60], sizes = [256, 20], strides = [1, 1]} : vector<256x80xf32> to vector<256x20xf32>
    %29 = math.tanh %28 : vector<256x20xf32>
    %30 = arith.mulf %26, %3 : vector<256x20xf32>
    %31 = arith.mulf %25, %29 : vector<256x20xf32>
    %32 = arith.addf %30, %31 : vector<256x20xf32>
    %33 = math.tanh %32 : vector<256x20xf32>
    %34 = arith.mulf %27, %33 : vector<256x20xf32>
    %35 = tpu.concatenate %34, %4 in 1 : vector<256x20xf32>, vector<256x20xf32> -> vector<256x40xf32>
    %c40 = arith.constant 40 : index
    %c0_9 = arith.constant 0 : index
    %36 = vector.load %arg2[%c40, %c0_9] : memref<80x128xf32, #tpu.memory_space<vmem>>, vector<40x80xf32>
    %cst_10 = arith.constant dense<0.000000e+00> : vector<256x80xf32>
    %37 = tpu.matmul %35, %36, %cst_10 {dimension_numbers = #tpu.dot_dimension_numbers<[1], [0], [0], [1], [0, 0, 1, 1], [], []>} : vector<256x40xf32>, vector<40x80xf32>, vector<256x80xf32> -> vector<256x80xf32>
    %38 = vector.broadcast %7 : vector<1x80xf32> to vector<256x80xf32>
    %39 = arith.addf %37, %38 : vector<256x80xf32>
    %40 = vector.extract_strided_slice %39 {offsets = [0, 0], sizes = [256, 60], strides = [1, 1]} : vector<256x80xf32> to vector<256x60xf32>
    %41 = arith.negf %40 : vector<256x60xf32>
    %42 = math.exp %41 : vector<256x60xf32>
    %cst_11 = arith.constant 1.000000e+00 : f32
    %43 = vector.broadcast %cst_11 : f32 to vector<256x60xf32>
    %44 = arith.addf %43, %42 : vector<256x60xf32>
    %45 = arith.divf %43, %44 : vector<256x60xf32>
    %46 = vector.extract_strided_slice %45 {offsets = [0, 0], sizes = [256, 20], strides = [1, 1]} : vector<256x60xf32> to vector<256x20xf32>
    %47 = vector.extract_strided_slice %45 {offsets = [0, 20], sizes = [256, 20], strides = [1, 1]} : vector<256x60xf32> to vector<256x20xf32>
    %48 = vector.extract_strided_slice %45 {offsets = [0, 40], sizes = [256, 20], strides = [1, 1]} : vector<256x60xf32> to vector<256x20xf32>
    %49 = vector.extract_strided_slice %39 {offsets = [0, 60], sizes = [256, 20], strides = [1, 1]} : vector<256x80xf32> to vector<256x20xf32>
    %50 = math.tanh %49 : vector<256x20xf32>
    %51 = arith.mulf %47, %5 : vector<256x20xf32>
    %52 = arith.mulf %46, %50 : vector<256x20xf32>
    %53 = arith.addf %51, %52 : vector<256x20xf32>
    %54 = math.tanh %53 : vector<256x20xf32>
    %55 = arith.mulf %48, %54 : vector<256x20xf32>
    %56 = vector.broadcast %8 : vector<1x20xf32> to vector<256x20xf32>
    %57 = arith.mulf %55, %56 : vector<256x20xf32>
    %cst_12 = arith.constant dense<0.000000e+00> : vector<256xf32>
    %58 = vector.multi_reduction <add>, %57, %cst_12 [1] : vector<256x20xf32> to vector<256xf32>
    %59 = vector.shape_cast %58 : vector<256xf32> to vector<256x1xf32>
    %60 = vector.broadcast %9 : vector<1x1xf32> to vector<256x1xf32>
    %61 = arith.addf %59, %60 : vector<256x1xf32>
    %c0_13 = arith.constant 0 : index
    %c0_14 = arith.constant 0 : index
    %62 = vector.load %arg3[%c0_13, %c0_14] : memref<256x128xf32, #tpu.memory_space<vmem>>, vector<256x1xf32>
    tpu.vector_store %arg3[%c0_13, %c0_14], %61 {strides = array<i32>} : memref<256x128xf32, #tpu.memory_space<vmem>>, vector<256x1xf32>,
    %c0_15 = arith.constant 0 : index
    %c1_16 = arith.constant 1 : index
    %63 = vector.load %arg3[%c0_15, %c1_16] : memref<256x128xf32, #tpu.memory_space<vmem>>, vector<256x20xf32>
    tpu.vector_store %arg3[%c0_15, %c1_16], %34 {strides = array<i32>} : memref<256x128xf32, #tpu.memory_space<vmem>>, vector<256x20xf32>,
    %c0_17 = arith.constant 0 : index
    %c21 = arith.constant 21 : index
    %64 = vector.load %arg3[%c0_17, %c21] : memref<256x128xf32, #tpu.memory_space<vmem>>, vector<256x20xf32>
    tpu.vector_store %arg3[%c0_17, %c21], %32 {strides = array<i32>} : memref<256x128xf32, #tpu.memory_space<vmem>>, vector<256x20xf32>,
    %c0_18 = arith.constant 0 : index
    %c41 = arith.constant 41 : index
    %65 = vector.load %arg3[%c0_18, %c41] : memref<256x128xf32, #tpu.memory_space<vmem>>, vector<256x20xf32>
    tpu.vector_store %arg3[%c0_18, %c41], %55 {strides = array<i32>} : memref<256x128xf32, #tpu.memory_space<vmem>>, vector<256x20xf32>,
    %c0_19 = arith.constant 0 : index
    %c61 = arith.constant 61 : index
    %66 = vector.load %arg3[%c0_19, %c61] : memref<256x128xf32, #tpu.memory_space<vmem>>, vector<256x20xf32>
    tpu.vector_store %arg3[%c0_19, %c61], %53 {strides = array<i32>} : memref<256x128xf32, #tpu.memory_space<vmem>>, vector<256x20xf32>,
    return
  }
  func.func @transform_0(%arg0: i32) -> (i32, i32) {
    %c0_i32 = arith.constant 0 : i32
    %c0_i32_0 = arith.constant 0 : i32
    return %arg0, %c0_i32 : i32, i32
  }
  func.func @transform_1(%arg0: i32) -> (i32, i32) {
    %c0_i32 = arith.constant 0 : i32
    %c0_i32_0 = arith.constant 0 : i32
    %c0_i32_1 = arith.constant 0 : i32
    return %c0_i32, %c0_i32_0 : i32, i32
  }
  func.func @transform_2(%arg0: i32) -> (i32, i32) {
    %c0_i32 = arith.constant 0 : i32
    %c0_i32_0 = arith.constant 0 : i32
    return %arg0, %c0_i32 : i32, i32
  }
}

</mosaic_0001>

<llo_original>
// kernel: tpu_custom_call.1
$region0: #{tpu_custom_call.1}
  #allocation0 [shape = 'u32[]', space=smem, size = 0x4, offset = 0x4, fixed_abs, tag = 'smem constant byte address 0x4 - core index']
  #allocation1 [shape = 'u32[144,128]{1,0:T(1,128)}', space=vmem, size = 0x12000, scoped, tag = 'internal scratch']
  %s0 = inlined_call_operand.hbm [shape: f32[1024,128], index: 0, kind: input, shape index: {}, may-alias: {0,2}]
  %s1 = inlined_call_operand.vmem [shape: f32[80,128], index: 1, kind: input, shape index: {}]
  %s2 = inlined_call_operand.hbm [shape: f32[1024,128], index: 2, kind: output, shape index: {}, may-alias: {0,2}]
  %s3 = sld [smem:[#allocation0]]
  $region45: #{tpu_custom_call.1} parent=0
    _
  %s5 = ssub.s32 1, %s3
  %s6 = scalar_select 0, %s5, %s3
  $region1: #{tpu_custom_call.1} parent=0
    #allocation2 [shape = 'u8[262144]{0}', space=vmem, size = 0x40000, scoped, tag = 'input window, operand 0']
    #allocation3 [shape = 's32[2]{0}', space=sflag, size = 0x8, scoped, tag = 'scoped memory for tpu_custom_call.1']
    #allocation4 [shape = 's32[2]{0}', space=sflag, size = 0x8, scoped, tag = 'scoped memory for tpu_custom_call.1']
    #allocation5 [shape = 'u8[262144]{0}', space=vmem, size = 0x40000, scoped, tag = 'output window, operand 0']
    %7 = vsyncpa [#allocation3], 0
    %s8 = scalar_lea.sflag [#allocation3], 1
    %9 = vsyncpa %s8, 0
    %10 = vsyncpa [#allocation4], 0
    %s11 = scalar_lea.sflag [#allocation4], 1
    %12 = vsyncpa %s11, 0
    loop: start=0, step=1, limit=6
    $region2: #{tpu_custom_call.1} parent=1 // loop_pre_header
      _
    $region3: #{tpu_custom_call.1} parent=1 // loop_header
      %s14 = sphi 0, %s18
      %p15 = scmp.ge.s32.totalorder %s14, 6
      %s24 = sphi 0, %s26
      %s27 = sphi 0, %s24
      %s28 = sphi 0, %s27
      %s44 = sphi 0, %s28
      %s48 = sphi 0, %s48
      %s50 = sphi 0, %s48
      %s51 = sphi 0, %s50
      %s65 = sphi 0, %s51
      %s71 = sphi 0, %s73
      %s74 = sphi 0, %s71
      %s75 = sphi 0, %s74
      %s91 = sphi 0, %s75
    $region4: #{tpu_custom_call.1} parent=1 // loop_header_branch
      %17 = sbr.rel (%p15) target = $region8
    $region5: #{tpu_custom_call.1} parent=1 // loop_body
      %s19 = ssub.s32 %s14, 1
      %s20 = ssub.s32 %s14, 2
      %s21 = sadd.s32 %s14, 1
      %s22 = ssub.s32 %s14, %s21
      %p23 = scmp.eq.s32.totalorder %s22, 0
      %s25 = sadd.s32 %s24, 1
      %s26 = scalar_select %p23, %s24, %s25
      %p29 = pneg %p23
      %p30 = scmp.eq.s32.totalorder %s14, 3
      %p31 = por %p29, %p30
      %p32 = scmp.ne.s32.totalorder %s24, %s27
      %p33 = scmp.eq.s32.totalorder %s14, 0
      %p34 = por %p32, %p33
      %p35 = scmp.ne.s32.totalorder %s24, %s27
      %p36 = scmp.eq.s32.totalorder %s19, 3
      %p37 = por %p35, %p36
      %p38 = scmp.ne.s32.totalorder %s27, %s28
      %p39 = scmp.eq.s32.totalorder %s19, 0
      %p40 = por %p38, %p39
      %p41 = scmp.ne.s32.totalorder %s27, %s28
      %p42 = scmp.eq.s32.totalorder %s20, 3
      %p43 = por %p41, %p42
      %p45 = scmp.ne.s32.totalorder %s28, %s44
      %p46 = scmp.eq.s32.totalorder %s20, 0
      %p47 = por %p45, %p46
      %s49 = sadd.s32 %s48, 1
      %p52 = scmp.eq.s32.totalorder %s14, 3
      %p53 = scmp.ne.s32.totalorder %s48, %s50
      %p54 = scmp.eq.s32.totalorder %s14, 0
      %p55 = por %p53, %p54
      %p56 = scmp.ne.s32.totalorder %s48, %s50
      %p57 = scmp.eq.s32.totalorder %s19, 3
      %p58 = por %p56, %p57
      %p59 = scmp.ne.s32.totalorder %s50, %s51
      %p60 = scmp.eq.s32.totalorder %s19, 0
      %p61 = por %p59, %p60
      %p62 = scmp.ne.s32.totalorder %s50, %s51
      %p63 = scmp.eq.s32.totalorder %s20, 3
      %p64 = por %p62, %p63
      %p66 = scmp.ne.s32.totalorder %s51, %s65
      %p67 = scmp.eq.s32.totalorder %s20, 0
      %p68 = por %p66, %p67
      %s69 = ssub.s32 %s14, %s21
      %p70 = scmp.eq.s32.totalorder %s69, 0
      %s72 = sadd.s32 %s71, 1
      %s73 = scalar_select %p70, %s71, %s72
      %p76 = pneg %p70
      %p77 = scmp.eq.s32.totalorder %s14, 3
      %p78 = por %p76, %p77
      %p79 = scmp.ne.s32.totalorder %s71, %s74
      %p80 = scmp.eq.s32.totalorder %s14, 0
      %p81 = por %p79, %p80
      %p82 = scmp.ne.s32.totalorder %s71, %s74
      %p83 = scmp.eq.s32.totalorder %s19, 3
      %p84 = por %p82, %p83
      %p85 = scmp.ne.s32.totalorder %s74, %s75
      %p86 = scmp.eq.s32.totalorder %s19, 0
      %p87 = por %p85, %p86
      %p88 = scmp.ne.s32.totalorder %s74, %s75
      %p89 = scmp.eq.s32.totalorder %s20, 3
      %p90 = por %p88, %p89
      %p92 = scmp.ne.s32.totalorder %s75, %s91
      %p93 = scmp.eq.s32.totalorder %s20, 0
      %p94 = por %p92, %p93
      %p95 = scmp.le.s32.totalorder 1, %s14
      %p96 = scmp.lt.s32.totalorder %s14, 5
      %p97 = pnand %p95, %p96
      %p98 = pneg %p97
      // Predicated region
      $region9: #{tpu_custom_call.1} parent=5 // pred_check
        _
      $region10: #{tpu_custom_call.1} parent=5 // pred_check_branch
        %100 = sbr.rel (%p97) target = $region12
      $region11: #{tpu_custom_call.1} parent=5 // pred_region
        %s101 = ssub.s32 %s14, 1
        // Predicated region
        $region13: #{tpu_custom_call.1} parent=11 // pred_check
          %p102 = pneg %p61
        $region14: #{tpu_custom_call.1} parent=11 // pred_check_branch
          %104 = sbr.rel (%p102) target = $region16
        $region15: #{tpu_custom_call.1} parent=11 // pred_region
          _
        $region16: #{tpu_custom_call.1} parent=11 // pred_fallthru
          _
      $region12: #{tpu_custom_call.1} parent=5 // pred_fallthru
        _
      %p105 = scmp.lt.s32.totalorder %s14, 4
      // Predicated region
      $region17: #{tpu_custom_call.1} parent=5 // pred_check
        %p106 = pneg %p105
      $region18: #{tpu_custom_call.1} parent=5 // pred_check_branch
        %108 = sbr.rel (%p106) target = $region20
      $region19: #{tpu_custom_call.1} parent=5 // pred_region
        // Predicated region
        $region21: #{tpu_custom_call.1} parent=19 // pred_check
          %p109 = pneg %p34
        $region22: #{tpu_custom_call.1} parent=19 // pred_check_branch
          %111 = sbr.rel (%p109) target = $region24
        $region23: #{tpu_custom_call.1} parent=19 // pred_region
          %s112 = sand.u32 %s24, 1
          %s113 = scalar_lea.sflag [#allocation3], %s112
          %s114 = sand.u32 %s24, 1
          %s115 = smul.addr %s114, 256
          %s116 = scalar_lea.vmem [#allocation2], %s115
          %s117 = smul.u32 32, %s14
          %s119 = ssub.s32 4096, 4096
          %120 = vsyncadd %s113, %s119
          %s121 = smul.addr %s117, 128
          %s122 = scalar_lea.hbm %s0, %s121
          %s123 = sshll.u32 %s116, 4
          %s124 = int_to_ptr.vmem [resolvable:$true] %s123
          %129 = dma.hbm_to_vmem [thread:$0]  %s122, 4096, %s124, %s113, 128, 128, 8
        $region24: #{tpu_custom_call.1} parent=19 // pred_fallthru
          _
      $region20: #{tpu_custom_call.1} parent=5 // pred_fallthru
        _
      %p130 = scmp.le.s32.totalorder 1, %s14
      %p131 = scmp.lt.s32.totalorder %s14, 5
      %p132 = pnand %p130, %p131
      %p133 = pneg %p132
      // Predicated region
      $region25: #{tpu_custom_call.1} parent=5 // pred_check
        _
      $region26: #{tpu_custom_call.1} parent=5 // pred_check_branch
        %135 = sbr.rel (%p132) target = $region28
      $region27: #{tpu_custom_call.1} parent=5 // pred_region
        %s136 = ssub.s32 %s14, 1
        %s137 = sand.u32 %s27, 1
        %s138 = scalar_lea.sflag [#allocation3], %s137
        %s139 = sand.u32 %s27, 1
        %s140 = smul.addr %s139, 256
        %s141 = scalar_lea.vmem [#allocation2], %s140
        // Predicated region
        $region29: #{tpu_custom_call.1} parent=27 // pred_check
          %p142 = pneg %p40
        $region30: #{tpu_custom_call.1} parent=27 // pred_check_branch
          %144 = sbr.rel (%p142) target = $region32
        $region31: #{tpu_custom_call.1} parent=27 // pred_region
          %145 = dma.done %s138, 4096
        $region32: #{tpu_custom_call.1} parent=27 // pred_fallthru
          _
        %s146 = sand.u32 %s27, 1
        %s147 = scalar_lea.sflag [#allocation3], %s146
        %s148 = sand.u32 %s27, 1
        %s149 = smul.addr %s148, 256
        %s150 = scalar_lea.vmem [#allocation2], %s149
        %p151 = pneg %p40
        %p152 = pneg %p37
        %p153 = pneg %p61
        %p154 = pneg %p58
        %p155 = pneg %p87
        %p156 = pneg %p84
        %s157 = sand.u32 %s74, 1
        %s158 = scalar_lea.sflag [#allocation4], %s157
        %s159 = sand.u32 %s74, 1
        %s160 = smul.addr %s159, 256
        %s161 = scalar_lea.vmem [#allocation5], %s160
        %s162 = smul.u32 32, %s19
        %s163 = smul.u32 32, %s19
        %v164 = vld [vmem:[%s141] sm:$0xff]
        %v165 = vld [vmem:[%s141 + $0x8] sm:$0xff]
        %v166 = vld [vmem:[%s141 + $0x10] sm:$0xff]
        %v167 = vld [vmem:[%s141 + $0x18] sm:$0xff]
        %v168 = vld [vmem:[%s141 + $0x20] sm:$0xff]
        %v169 = vld [vmem:[%s141 + $0x28] sm:$0xff]
        %v170 = vld [vmem:[%s141 + $0x30] sm:$0xff]
        %v171 = vld [vmem:[%s141 + $0x38] sm:$0xff]
        %v172 = vld [vmem:[%s141 + $0x40] sm:$0xff]
        %v173 = vld [vmem:[%s141 + $0x48] sm:$0xff]
        %v174 = vld [vmem:[%s141 + $0x50] sm:$0xff]
        %v175 = vld [vmem:[%s141 + $0x58] sm:$0xff]
        %v176 = vld [vmem:[%s141 + $0x60] sm:$0xff]
        %v177 = vld [vmem:[%s141 + $0x68] sm:$0xff]
        %v178 = vld [vmem:[%s141 + $0x70] sm:$0xff]
        %v179 = vld [vmem:[%s141 + $0x78] sm:$0xff]
        %v180 = vld [vmem:[%s141 + $0x80] sm:$0xff]
        %v181 = vld [vmem:[%s141 + $0x88] sm:$0xff]
        %v182 = vld [vmem:[%s141 + $0x90] sm:$0xff]
        %v183 = vld [vmem:[%s141 + $0x98] sm:$0xff]
        %v184 = vld [vmem:[%s141 + $0xa0] sm:$0xff]
        %v185 = vld [vmem:[%s141 + $0xa8] sm:$0xff]
        %v186 = vld [vmem:[%s141 + $0xb0] sm:$0xff]
        %v187 = vld [vmem:[%s141 + $0xb8] sm:$0xff]
        %v188 = vld [vmem:[%s141 + $0xc0] sm:$0xff]
        %v189 = vld [vmem:[%s141 + $0xc8] sm:$0xff]
        %v190 = vld [vmem:[%s141 + $0xd0] sm:$0xff]
        %v191 = vld [vmem:[%s141 + $0xd8] sm:$0xff]
        %v192 = vld [vmem:[%s141 + $0xe0] sm:$0xff]
        %v193 = vld [vmem:[%s141 + $0xe8] sm:$0xff]
        %v194 = vld [vmem:[%s141 + $0xf0] sm:$0xff]
        %v195 = vld [vmem:[%s141 + $0xf8] sm:$0xff]
        %v196 = vld [vmem:[%s1] sm:$0x1]
        %v197 = vld [vmem:[%s1 + $0x1] sm:$0x1]
        %v198 = vld [vmem:[%s1 + $0x2] sm:$0x1]
        %v199 = vld [vmem:[%s1 + $0x8] sm:$0x1]
        %201 = vset.pattern.permute.xlu0 0
        %202 = vperm.xlu0 %201, %v164
        %v203 = vpop.permute.xlu0 %202
        %206 = vset.pattern.permute.xlu0 0
        %207 = vperm.xlu0 %206, %v165
        %v208 = vpop.permute.xlu0 %207
        %211 = vset.pattern.permute.xlu0 0
        %212 = vperm.xlu0 %211, %v166
        %v213 = vpop.permute.xlu0 %212
        %216 = vset.pattern.permute.xlu0 0
        %217 = vperm.xlu0 %216, %v167
        %v218 = vpop.permute.xlu0 %217
        %221 = vset.pattern.permute.xlu0 0
        %222 = vperm.xlu0 %221, %v168
        %v223 = vpop.permute.xlu0 %222
        %226 = vset.pattern.permute.xlu0 0
        %227 = vperm.xlu0 %226, %v169
        %v228 = vpop.permute.xlu0 %227
        %231 = vset.pattern.permute.xlu0 0
        %232 = vperm.xlu0 %231, %v170
        %v233 = vpop.permute.xlu0 %232
        %236 = vset.pattern.permute.xlu0 0
        %237 = vperm.xlu0 %236, %v171
        %v238 = vpop.permute.xlu0 %237
        %241 = vset.pattern.permute.xlu0 0
        %242 = vperm.xlu0 %241, %v172
        %v243 = vpop.permute.xlu0 %242
        %246 = vset.pattern.permute.xlu0 0
        %247 = vperm.xlu0 %246, %v173
        %v248 = vpop.permute.xlu0 %247
        %251 = vset.pattern.permute.xlu0 0
        %252 = vperm.xlu0 %251, %v174
        %v253 = vpop.permute.xlu0 %252
        %256 = vset.pattern.permute.xlu0 0
        %257 = vperm.xlu0 %256, %v175
        %v258 = vpop.permute.xlu0 %257
        %261 = vset.pattern.permute.xlu0 0
        %262 = vperm.xlu0 %261, %v176
        %v263 = vpop.permute.xlu0 %262
        %266 = vset.pattern.permute.xlu0 0
        %267 = vperm.xlu0 %266, %v177
        %v268 = vpop.permute.xlu0 %267
        %271 = vset.pattern.permute.xlu0 0
        %272 = vperm.xlu0 %271, %v178
        %v273 = vpop.permute.xlu0 %272
        %276 = vset.pattern.permute.xlu0 0
        %277 = vperm.xlu0 %276, %v179
        %v278 = vpop.permute.xlu0 %277
        %281 = vset.pattern.permute.xlu0 0
        %282 = vperm.xlu0 %281, %v180
        %v283 = vpop.permute.xlu0 %282
        %286 = vset.pattern.permute.xlu0 0
        %287 = vperm.xlu0 %286, %v181
        %v288 = vpop.permute.xlu0 %287
        %291 = vset.pattern.permute.xlu0 0
        %292 = vperm.xlu0 %291, %v182
        %v293 = vpop.permute.xlu0 %292
        %296 = vset.pattern.permute.xlu0 0
        %297 = vperm.xlu0 %296, %v183
        %v298 = vpop.permute.xlu0 %297
        %301 = vset.pattern.permute.xlu0 0
        %302 = vperm.xlu0 %301, %v184
        %v303 = vpop.permute.xlu0 %302
        %306 = vset.pattern.permute.xlu0 0
        %307 = vperm.xlu0 %306, %v185
        %v308 = vpop.permute.xlu0 %307
        %311 = vset.pattern.permute.xlu0 0
        %312 = vperm.xlu0 %311, %v186
        %v313 = vpop.permute.xlu0 %312
        %316 = vset.pattern.permute.xlu0 0
        %317 = vperm.xlu0 %316, %v187
        %v318 = vpop.permute.xlu0 %317
        %321 = vset.pattern.permute.xlu0 0
        %322 = vperm.xlu0 %321, %v188
        %v323 = vpop.permute.xlu0 %322
        %326 = vset.pattern.permute.xlu0 0
        %327 = vperm.xlu0 %326, %v189
        %v328 = vpop.permute.xlu0 %327
        %331 = vset.pattern.permute.xlu0 0
        %332 = vperm.xlu0 %331, %v190
        %v333 = vpop.permute.xlu0 %332
        %336 = vset.pattern.permute.xlu0 0
        %337 = vperm.xlu0 %336, %v191
        %v338 = vpop.permute.xlu0 %337
        %341 = vset.pattern.permute.xlu0 0
        %342 = vperm.xlu0 %341, %v192
        %v343 = vpop.permute.xlu0 %342
        %346 = vset.pattern.permute.xlu0 0
        %347 = vperm.xlu0 %346, %v193
        %v348 = vpop.permute.xlu0 %347
        %351 = vset.pattern.permute.xlu0 0
        %352 = vperm.xlu0 %351, %v194
        %v353 = vpop.permute.xlu0 %352
        %356 = vset.pattern.permute.xlu0 0
        %357 = vperm.xlu0 %356, %v195
        %v358 = vpop.permute.xlu0 %357
        %v360 = vlaneseq
        %v361 = vshrl.u32 %v360, 7
        %v362 = vsub.s32 0, %v361
        %v363 = vrot.slane %v199, %v362
        %v364 = vmul.f32 %v203, %v363
        %v365 = vmul.f32 %v208, %v363
        %v366 = vmul.f32 %v213, %v363
        %v367 = vmul.f32 %v218, %v363
        %v368 = vmul.f32 %v223, %v363
        %v369 = vmul.f32 %v228, %v363
        %v370 = vmul.f32 %v233, %v363
        %v371 = vmul.f32 %v238, %v363
        %v372 = vmul.f32 %v243, %v363
        %v373 = vmul.f32 %v248, %v363
        %v374 = vmul.f32 %v253, %v363
        %v375 = vmul.f32 %v258, %v363
        %v376 = vmul.f32 %v263, %v363
        %v377 = vmul.f32 %v268, %v363
        %v378 = vmul.f32 %v273, %v363
        %v379 = vmul.f32 %v278, %v363
        %v380 = vmul.f32 %v283, %v363
        %v381 = vmul.f32 %v288, %v363
        %v382 = vmul.f32 %v293, %v363
        %v383 = vmul.f32 %v298, %v363
        %v384 = vmul.f32 %v303, %v363
        %v385 = vmul.f32 %v308, %v363
        %v386 = vmul.f32 %v313, %v363
        %v387 = vmul.f32 %v318, %v363
        %v388 = vmul.f32 %v323, %v363
        %v389 = vmul.f32 %v328, %v363
        %v390 = vmul.f32 %v333, %v363
        %v391 = vmul.f32 %v338, %v363
        %v392 = vmul.f32 %v343, %v363
        %v393 = vmul.f32 %v348, %v363
        %v394 = vmul.f32 %v353, %v363
        %v395 = vmul.f32 %v358, %v363
        %v396 = vld [vmem:[%s1 + $0x10] sm:$0xff]
        %v397 = vld [vmem:[%s1 + $0x18] sm:$0xff]
        %v398 = vld [vmem:[%s1 + $0x20] sm:$0xf]
        %399 = vrot.lane.b32.xlu0 %v164, 127
        %v400 = vpop.permute.xlu0 %399
        %401 = vrot.lane.b32.xlu0 %v165, 127
        %v402 = vpop.permute.xlu0 %401
        %403 = vrot.lane.b32.xlu0 %v166, 127
        %v404 = vpop.permute.xlu0 %403
        %405 = vrot.lane.b32.xlu0 %v167, 127
        %v406 = vpop.permute.xlu0 %405
        %407 = vrot.lane.b32.xlu0 %v168, 127
        %v408 = vpop.permute.xlu0 %407
        %409 = vrot.lane.b32.xlu0 %v169, 127
        %v410 = vpop.permute.xlu0 %409
        %411 = vrot.lane.b32.xlu0 %v170, 127
        %v412 = vpop.permute.xlu0 %411
        %413 = vrot.lane.b32.xlu0 %v171, 127
        %v414 = vpop.permute.xlu0 %413
        %415 = vrot.lane.b32.xlu0 %v172, 127
        %v416 = vpop.permute.xlu0 %415
        %417 = vrot.lane.b32.xlu0 %v173, 127
        %v418 = vpop.permute.xlu0 %417
        %419 = vrot.lane.b32.xlu0 %v174, 127
        %v420 = vpop.permute.xlu0 %419
        %421 = vrot.lane.b32.xlu0 %v175, 127
        %v422 = vpop.permute.xlu0 %421
        %423 = vrot.lane.b32.xlu0 %v176, 127
        %v424 = vpop.permute.xlu0 %423
        %425 = vrot.lane.b32.xlu0 %v177, 127
        %v426 = vpop.permute.xlu0 %425
        %427 = vrot.lane.b32.xlu0 %v178, 127
        %v428 = vpop.permute.xlu0 %427
        %429 = vrot.lane.b32.xlu0 %v179, 127
        %v430 = vpop.permute.xlu0 %429
        %431 = vrot.lane.b32.xlu0 %v180, 127
        %v432 = vpop.permute.xlu0 %431
        %433 = vrot.lane.b32.xlu0 %v181, 127
        %v434 = vpop.permute.xlu0 %433
        %435 = vrot.lane.b32.xlu0 %v182, 127
        %v436 = vpop.permute.xlu0 %435
        %437 = vrot.lane.b32.xlu0 %v183, 127
        %v438 = vpop.permute.xlu0 %437
        %439 = vrot.lane.b32.xlu0 %v184, 127
        %v440 = vpop.permute.xlu0 %439
        %441 = vrot.lane.b32.xlu0 %v185, 127
        %v442 = vpop.permute.xlu0 %441
        %443 = vrot.lane.b32.xlu0 %v186, 127
        %v444 = vpop.permute.xlu0 %443
        %445 = vrot.lane.b32.xlu0 %v187, 127
        %v446 = vpop.permute.xlu0 %445
        %447 = vrot.lane.b32.xlu0 %v188, 127
        %v448 = vpop.permute.xlu0 %447
        %449 = vrot.lane.b32.xlu0 %v189, 127
        %v450 = vpop.permute.xlu0 %449
        %451 = vrot.lane.b32.xlu0 %v190, 127
        %v452 = vpop.permute.xlu0 %451
        %453 = vrot.lane.b32.xlu0 %v191, 127
        %v454 = vpop.permute.xlu0 %453
        %455 = vrot.lane.b32.xlu0 %v192, 127
        %v456 = vpop.permute.xlu0 %455
        %457 = vrot.lane.b32.xlu0 %v193, 127
        %v458 = vpop.permute.xlu0 %457
        %459 = vrot.lane.b32.xlu0 %v194, 127
        %v460 = vpop.permute.xlu0 %459
        %461 = vrot.lane.b32.xlu0 %v195, 127
        %v462 = vpop.permute.xlu0 %461
        %vm463 = vcmask 162816
        %v464 = vsel %vm463, %v400, 0
        %v466 = vsel %vm463, %v402, 0
        %v468 = vsel %vm463, %v404, 0
        %v470 = vsel %vm463, %v406, 0
        %v472 = vsel %vm463, %v408, 0
        %v474 = vsel %vm463, %v410, 0
        %v476 = vsel %vm463, %v412, 0
        %v478 = vsel %vm463, %v414, 0
        %v480 = vsel %vm463, %v416, 0
        %v482 = vsel %vm463, %v418, 0
        %v484 = vsel %vm463, %v420, 0
        %v486 = vsel %vm463, %v422, 0
        %v488 = vsel %vm463, %v424, 0
        %v490 = vsel %vm463, %v426, 0
        %v492 = vsel %vm463, %v428, 0
        %v494 = vsel %vm463, %v430, 0
        %v496 = vsel %vm463, %v432, 0
        %v498 = vsel %vm463, %v434, 0
        %v500 = vsel %vm463, %v436, 0
        %v502 = vsel %vm463, %v438, 0
        %v504 = vsel %vm463, %v440, 0
        %v506 = vsel %vm463, %v442, 0
        %v508 = vsel %vm463, %v444, 0
        %v510 = vsel %vm463, %v446, 0
        %v512 = vsel %vm463, %v448, 0
        %v514 = vsel %vm463, %v450, 0
        %v516 = vsel %vm463, %v452, 0
        %v518 = vsel %vm463, %v454, 0
        %v520 = vsel %vm463, %v456, 0
        %v522 = vsel %vm463, %v458, 0
        %v524 = vsel %vm463, %v460, 0
        %v526 = vsel %vm463, %v462, 0
        %vm528 = vcmask 1043456
        %v530 = vsel %vm528, %v398, 0
        %532 = vmatprep.subr.mxu0 0.0
        %533 = vmatpush1.msra.mxu0 %v396
        %534 = vmatprep.subr.mxu0 0.0
        %535 = vmatpush1.msra.mxu0 %v397
        %536 = vmatprep.subr.mxu0 0.0
        %537 = vmatpush1.msra.mxu0 %v530
        %538 = vmatprep.subr.mxu0 0.0
        %539 = vmatpush1.msra.mxu0 0.0
        %540 = vmatprep.subr.mxu0 0.0
        %541 = vmatpush1.msra.mxu0 0.0
        %542 = vmatprep.subr.mxu0 0.0
        %543 = vmatpush1.msra.mxu0 0.0
        %544 = vmatprep.subr.mxu0 0.0
        %545 = vmatpush1.msra.mxu0 0.0
        %546 = vmatprep.subr.mxu0 0.0
        %547 = vmatpush1.msra.mxu0 0.0
        %548 = vmatprep.subr.mxu0 0.0
        %549 = vmatpush1.msra.mxu0 0.0
        %550 = vmatprep.subr.mxu0 0.0
        %551 = vmatpush1.msra.mxu0 0.0
        %552 = vmatprep.subr.mxu0 0.0
        %553 = vmatpush1.msra.mxu0 0.0
        %554 = vmatprep.subr.mxu0 0.0
        %555 = vmatpush1.msra.mxu0 0.0
        %556 = vmatprep.subr.mxu0 0.0
        %557 = vmatpush1.msra.mxu0 0.0
        %558 = vmatprep.subr.mxu0 0.0
        %559 = vmatpush1.msra.mxu0 0.0
        %560 = vmatprep.subr.mxu0 0.0
        %561 = vmatpush1.msra.mxu0 0.0
        %562 = vmatprep.subr.mxu0 0.0
        %563 = vmatpush1.msra.mxu0 0.0
        %564 = vmatprep.subr.mxu0 0.0
        %565 = vmatpush1.msra.mxu0 0.0
        %566 = vmatprep.subr.mxu0 0.0
        %567 = vmatpush1.msra.mxu0 0.0
        %568 = vmatprep.subr.mxu0 0.0
        %569 = vmatpush1.msra.mxu0 0.0
        %570 = vmatprep.subr.mxu0 0.0
        %571 = vmatpush1.msra.mxu0 0.0
        %572 = vmatprep.subr.mxu0 0.0
        %573 = vmatpush1.msra.mxu0 0.0
        %574 = vmatprep.subr.mxu0 0.0
        %575 = vmatpush1.msra.mxu0 0.0
        %576 = vmatprep.subr.mxu0 0.0
        %577 = vmatpush1.msra.mxu0 0.0
        %578 = vmatprep.subr.mxu0 0.0
        %579 = vmatpush1.msra.mxu0 0.0
        %580 = vmatprep.subr.mxu0 0.0
        %581 = vmatpush1.msra.mxu0 0.0
        %582 = vmatprep.subr.mxu0 0.0
        %583 = vmatpush1.msra.mxu0 0.0
        %584 = vmatprep.subr.mxu0 0.0
        %585 = vmatpush1.msra.mxu0 0.0
        %586 = vmatprep.subr.mxu0 0.0
        %587 = vmatpush1.msra.mxu0 0.0
        %588 = vmatprep.subr.mxu0 0.0
        %589 = vmatpush1.msra.mxu0 0.0
        %590 = vmatprep.subr.mxu0 0.0
        %591 = vmatpush1.msra.mxu0 0.0
        %592 = vmatprep.subr.mxu0 0.0
        %593 = vmatpush1.msra.mxu0 0.0
        %594 = vmatprep.subr.mxu0 0.0
        %595 = vmatpush1.msra.mxu0 0.0
        %596 = vmatprep.mubr.f32.mxu0 0.0
        %597 = vmatmul.mubr.f32.gmra.mrb[0].mxu0 %v464
        %v598 = vpop.f32.mrb[0].mxu0
        %v599 = vadd.f32 0.0, %v598
        %v600 = vpop.f32.mrb[0].mxu0
        %601 = vmatprep.mubr.f32.mxu0 0.0
        %602 = vmatmul.mubr.f32.gmra.mrb[0].mxu0 %v466
        %v603 = vpop.f32.mrb[0].mxu0
        %v604 = vadd.f32 0.0, %v603
        %v605 = vpop.f32.mrb[0].mxu0
        %606 = vmatprep.mubr.f32.mxu0 0.0
        %607 = vmatmul.mubr.f32.gmra.mrb[0].mxu0 %v468
        %v608 = vpop.f32.mrb[0].mxu0
        %v609 = vadd.f32 0.0, %v608
        %v610 = vpop.f32.mrb[0].mxu0
        %611 = vmatprep.mubr.f32.mxu0 0.0
        %612 = vmatmul.mubr.f32.gmra.mrb[0].mxu0 %v470
        %v613 = vpop.f32.mrb[0].mxu0
        %v614 = vadd.f32 0.0, %v613
        %v615 = vpop.f32.mrb[0].mxu0
        %616 = vmatprep.mubr.f32.mxu0 0.0
        %617 = vmatmul.mubr.f32.gmra.mrb[0].mxu0 %v472
        %v618 = vpop.f32.mrb[0].mxu0
        %v619 = vadd.f32 0.0, %v618
        %v620 = vpop.f32.mrb[0].mxu0
        %621 = vmatprep.mubr.f32.mxu0 0.0
        %622 = vmatmul.mubr.f32.gmra.mrb[0].mxu0 %v474
        %v623 = vpop.f32.mrb[0].mxu0
        %v624 = vadd.f32 0.0, %v623
        %v625 = vpop.f32.mrb[0].mxu0
        %626 = vmatprep.mubr.f32.mxu0 0.0
        %627 = vmatmul.mubr.f32.gmra.mrb[0].mxu0 %v476
        %v628 = vpop.f32.mrb[0].mxu0
        %v629 = vadd.f32 0.0, %v628
        %v630 = vpop.f32.mrb[0].mxu0
        %631 = vmatprep.mubr.f32.mxu0 0.0
        %632 = vmatmul.mubr.f32.gmra.mrb[0].mxu0 %v478
        %v633 = vpop.f32.mrb[0].mxu0
        %v634 = vadd.f32 0.0, %v633
        %v635 = vpop.f32.mrb[0].mxu0
        %636 = vmatprep.mubr.f32.mxu0 0.0
        %637 = vmatmul.mubr.f32.gmra.mrb[0].mxu0 %v480
        %v638 = vpop.f32.mrb[0].mxu0
        %v639 = vadd.f32 0.0, %v638
        %v640 = vpop.f32.mrb[0].mxu0
        %641 = vmatprep.mubr.f32.mxu0 0.0
        %642 = vmatmul.mubr.f32.gmra.mrb[0].mxu0 %v482
        %v643 = vpop.f32.mrb[0].mxu0
        %v644 = vadd.f32 0.0, %v643
        %v645 = vpop.f32.mrb[0].mxu0
        %646 = vmatprep.mubr.f32.mxu0 0.0
        %647 = vmatmul.mubr.f32.gmra.mrb[0].mxu0 %v484
        %v648 = vpop.f32.mrb[0].mxu0
        %v649 = vadd.f32 0.0, %v648
        %v650 = vpop.f32.mrb[0].mxu0
        %651 = vmatprep.mubr.f32.mxu0 0.0
        %652 = vmatmul.mubr.f32.gmra.mrb[0].mxu0 %v486
        %v653 = vpop.f32.mrb[0].mxu0
        %v654 = vadd.f32 0.0, %v653
        %v655 = vpop.f32.mrb[0].mxu0
        %656 = vmatprep.mubr.f32.mxu0 0.0
        %657 = vmatmul.mubr.f32.gmra.mrb[0].mxu0 %v488
        %v658 = vpop.f32.mrb[0].mxu0
        %v659 = vadd.f32 0.0, %v658
        %v660 = vpop.f32.mrb[0].mxu0
        %661 = vmatprep.mubr.f32.mxu0 0.0
        %662 = vmatmul.mubr.f32.gmra.mrb[0].mxu0 %v490
        %v663 = vpop.f32.mrb[0].mxu0
        %v664 = vadd.f32 0.0, %v663
        %v665 = vpop.f32.mrb[0].mxu0
        %666 = vmatprep.mubr.f32.mxu0 0.0
        %667 = vmatmul.mubr.f32.gmra.mrb[0].mxu0 %v492
        %v668 = vpop.f32.mrb[0].mxu0
        %v669 = vadd.f32 0.0, %v668
        %v670 = vpop.f32.mrb[0].mxu0
        %671 = vmatprep.mubr.f32.mxu0 0.0
        %672 = vmatmul.mubr.f32.gmra.mrb[0].mxu0 %v494
        %v673 = vpop.f32.mrb[0].mxu0
        %v674 = vadd.f32 0.0, %v673
        %v675 = vpop.f32.mrb[0].mxu0
        %676 = vmatprep.mubr.f32.mxu0 0.0
        %677 = vmatmul.mubr.f32.gmra.mrb[0].mxu0 %v496
        %v678 = vpop.f32.mrb[0].mxu0
        %v679 = vadd.f32 0.0, %v678
        %v680 = vpop.f32.mrb[0].mxu0
        %681 = vmatprep.mubr.f32.mxu0 0.0
        %682 = vmatmul.mubr.f32.gmra.mrb[0].mxu0 %v498
        %v683 = vpop.f32.mrb[0].mxu0
        %v684 = vadd.f32 0.0, %v683
        %v685 = vpop.f32.mrb[0].mxu0
        %686 = vmatprep.mubr.f32.mxu0 0.0
        %687 = vmatmul.mubr.f32.gmra.mrb[0].mxu0 %v500
        %v688 = vpop.f32.mrb[0].mxu0
        %v689 = vadd.f32 0.0, %v688
        %v690 = vpop.f32.mrb[0].mxu0
        %691 = vmatprep.mubr.f32.mxu0 0.0
        %692 = vmatmul.mubr.f32.gmra.mrb[0].mxu0 %v502
        %v693 = vpop.f32.mrb[0].mxu0
        %v694 = vadd.f32 0.0, %v693
        %v695 = vpop.f32.mrb[0].mxu0
        %696 = vmatprep.mubr.f32.mxu0 0.0
        %697 = vmatmul.mubr.f32.gmra.mrb[0].mxu0 %v504
        %v698 = vpop.f32.mrb[0].mxu0
        %v699 = vadd.f32 0.0, %v698
        %v700 = vpop.f32.mrb[0].mxu0
        %701 = vmatprep.mubr.f32.mxu0 0.0
        %702 = vmatmul.mubr.f32.gmra.mrb[0].mxu0 %v506
        %v703 = vpop.f32.mrb[0].mxu0
        %v704 = vadd.f32 0.0, %v703
        %v705 = vpop.f32.mrb[0].mxu0
        %706 = vmatprep.mubr.f32.mxu0 0.0
        %707 = vmatmul.mubr.f32.gmra.mrb[0].mxu0 %v508
        %v708 = vpop.f32.mrb[0].mxu0
        %v709 = vadd.f32 0.0, %v708
        %v710 = vpop.f32.mrb[0].mxu0
        %711 = vmatprep.mubr.f32.mxu0 0.0
        %712 = vmatmul.mubr.f32.gmra.mrb[0].mxu0 %v510
        %v713 = vpop.f32.mrb[0].mxu0
        %v714 = vadd.f32 0.0, %v713
        %v715 = vpop.f32.mrb[0].mxu0
        %716 = vmatprep.mubr.f32.mxu0 0.0
        %717 = vmatmul.mubr.f32.gmra.mrb[0].mxu0 %v512
        %v718 = vpop.f32.mrb[0].mxu0
        %v719 = vadd.f32 0.0, %v718
        %v720 = vpop.f32.mrb[0].mxu0
        %721 = vmatprep.mubr.f32.mxu0 0.0
        %722 = vmatmul.mubr.f32.gmra.mrb[0].mxu0 %v514
        %v723 = vpop.f32.mrb[0].mxu0
        %v724 = vadd.f32 0.0, %v723
        %v725 = vpop.f32.mrb[0].mxu0
        %726 = vmatprep.mubr.f32.mxu0 0.0
        %727 = vmatmul.mubr.f32.gmra.mrb[0].mxu0 %v516
        %v728 = vpop.f32.mrb[0].mxu0
        %v729 = vadd.f32 0.0, %v728
        %v730 = vpop.f32.mrb[0].mxu0
        %731 = vmatprep.mubr.f32.mxu0 0.0
        %732 = vmatmul.mubr.f32.gmra.mrb[0].mxu0 %v518
        %v733 = vpop.f32.mrb[0].mxu0
        %v734 = vadd.f32 0.0, %v733
        %v735 = vpop.f32.mrb[0].mxu0
        %736 = vmatprep.mubr.f32.mxu0 0.0
        %737 = vmatmul.mubr.f32.gmra.mrb[0].mxu0 %v520
        %v738 = vpop.f32.mrb[0].mxu0
        %v739 = vadd.f32 0.0, %v738
        %v740 = vpop.f32.mrb[0].mxu0
        %741 = vmatprep.mubr.f32.mxu0 0.0
        %742 = vmatmul.mubr.f32.gmra.mrb[0].mxu0 %v522
        %v743 = vpop.f32.mrb[0].mxu0
        %v744 = vadd.f32 0.0, %v743
        %v745 = vpop.f32.mrb[0].mxu0
        %746 = vmatprep.mubr.f32.mxu0 0.0
        %747 = vmatmul.mubr.f32.gmra.mrb[0].mxu0 %v524
        %v748 = vpop.f32.mrb[0].mxu0
        %v749 = vadd.f32 0.0, %v748
        %v750 = vpop.f32.mrb[0].mxu0
        %751 = vmatprep.mubr.f32.mxu0 0.0
        %752 = vmatmul.mubr.f32.gmra.mrb[0].mxu0 %v526
        %v753 = vpop.f32.mrb[0].mxu0
        %v754 = vadd.f32 0.0, %v753
        %v755 = vpop.f32.mrb[0].mxu0
        %756 = vdwg.mxu0
        %v757 = vadd.f32 %v364, %v599
        %v758 = vadd.f32 %v365, %v604
        %v759 = vadd.f32 %v366, %v609
        %v760 = vadd.f32 %v367, %v614
        %v761 = vadd.f32 %v368, %v619
        %v762 = vadd.f32 %v369, %v624
        %v763 = vadd.f32 %v370, %v629
        %v764 = vadd.f32 %v371, %v634
        %v765 = vadd.f32 %v372, %v639
        %v766 = vadd.f32 %v373, %v644
        %v767 = vadd.f32 %v374, %v649
        %v768 = vadd.f32 %v375, %v654
        %v769 = vadd.f32 %v376, %v659
        %v770 = vadd.f32 %v377, %v664
        %v771 = vadd.f32 %v378, %v669
        %v772 = vadd.f32 %v379, %v674
        %v773 = vadd.f32 %v380, %v679
        %v774 = vadd.f32 %v381, %v684
        %v775 = vadd.f32 %v382, %v689
        %v776 = vadd.f32 %v383, %v694
        %v777 = vadd.f32 %v384, %v699
        %v778 = vadd.f32 %v385, %v704
        %v779 = vadd.f32 %v386, %v709
        %v780 = vadd.f32 %v387, %v714
        %v781 = vadd.f32 %v388, %v719
        %v782 = vadd.f32 %v389, %v724
        %v783 = vadd.f32 %v390, %v729
        %v784 = vadd.f32 %v391, %v734
        %v785 = vadd.f32 %v392, %v739
        %v786 = vadd.f32 %v393, %v744
        %v787 = vadd.f32 %v394, %v749
        %v788 = vadd.f32 %v395, %v754
        %v789 = vlaneseq
        %v790 = vshrl.u32 %v789, 7
        %v791 = vsub.s32 0, %v790
        %v792 = vrot.slane %v196, %v791
        %v793 = vadd.f32 %v757, %v792
        %v794 = vadd.f32 %v758, %v792
        %v795 = vadd.f32 %v759, %v792
        %v796 = vadd.f32 %v760, %v792
        %v797 = vadd.f32 %v761, %v792
        %v798 = vadd.f32 %v762, %v792
        %v799 = vadd.f32 %v763, %v792
        %v800 = vadd.f32 %v764, %v792
        %v801 = vadd.f32 %v765, %v792
        %v802 = vadd.f32 %v766, %v792
        %v803 = vadd.f32 %v767, %v792
        %v804 = vadd.f32 %v768, %v792
        %v805 = vadd.f32 %v769, %v792
        %v806 = vadd.f32 %v770, %v792
        %v807 = vadd.f32 %v771, %v792
        %v808 = vadd.f32 %v772, %v792
        %v809 = vadd.f32 %v773, %v792
        %v810 = vadd.f32 %v774, %v792
        %v811 = vadd.f32 %v775, %v792
        %v812 = vadd.f32 %v776, %v792
        %v813 = vadd.f32 %v777, %v792
        %v814 = vadd.f32 %v778, %v792
        %v815 = vadd.f32 %v779, %v792
        %v816 = vadd.f32 %v780, %v792
        %v817 = vadd.f32 %v781, %v792
        %v818 = vadd.f32 %v782, %v792
        %v819 = vadd.f32 %v783, %v792
        %v820 = vadd.f32 %v784, %v792
        %v821 = vadd.f32 %v785, %v792
        %v822 = vadd.f32 %v786, %v792
        %v823 = vadd.f32 %v787, %v792
        %v824 = vadd.f32 %v788, %v792
        %v825 = vxor.u32 %v793, 2147483648
        %v826 = vxor.u32 %v794, 2147483648
        %v827 = vxor.u32 %v795, 2147483648
        %v828 = vxor.u32 %v796, 2147483648
        %v829 = vxor.u32 %v797, 2147483648
        %v830 = vxor.u32 %v798, 2147483648
        %v831 = vxor.u32 %v799, 2147483648
        %v832 = vxor.u32 %v800, 2147483648
        %v833 = vxor.u32 %v801, 2147483648
        %v834 = vxor.u32 %v802, 2147483648
        %v835 = vxor.u32 %v803, 2147483648
        %v836 = vxor.u32 %v804, 2147483648
        %v837 = vxor.u32 %v805, 2147483648
        %v838 = vxor.u32 %v806, 2147483648
        %v839 = vxor.u32 %v807, 2147483648
        %v840 = vxor.u32 %v808, 2147483648
        %v841 = vxor.u32 %v809, 2147483648
        %v842 = vxor.u32 %v810, 2147483648
        %v843 = vxor.u32 %v811, 2147483648
        %v844 = vxor.u32 %v812, 2147483648
        %v845 = vxor.u32 %v813, 2147483648
        %v846 = vxor.u32 %v814, 2147483648
        %v847 = vxor.u32 %v815, 2147483648
        %v848 = vxor.u32 %v816, 2147483648
        %v849 = vxor.u32 %v817, 2147483648
        %v850 = vxor.u32 %v818, 2147483648
        %v851 = vxor.u32 %v819, 2147483648
        %v852 = vxor.u32 %v820, 2147483648
        %v853 = vxor.u32 %v821, 2147483648
        %v854 = vxor.u32 %v822, 2147483648
        %v855 = vxor.u32 %v823, 2147483648
        %v856 = vxor.u32 %v824, 2147483648
        %v857 = vmul.f32 %v825, 1.442695
        %v858 = vpow.pop %v857
        %v859 = vmul.f32 %v826, 1.442695
        %v860 = vpow.pop %v859
        %v861 = vmul.f32 %v827, 1.442695
        %v862 = vpow.pop %v861
        %v863 = vmul.f32 %v828, 1.442695
        %v864 = vpow.pop %v863
        %v865 = vmul.f32 %v829, 1.442695
        %v866 = vpow.pop %v865
        %v867 = vmul.f32 %v830, 1.442695
        %v868 = vpow.pop %v867
        %v869 = vmul.f32 %v831, 1.442695
        %v870 = vpow.pop %v869
        %v871 = vmul.f32 %v832, 1.442695
        %v872 = vpow.pop %v871
        %v873 = vmul.f32 %v833, 1.442695
        %v874 = vpow.pop %v873
        %v875 = vmul.f32 %v834, 1.442695
        %v876 = vpow.pop %v875
        %v877 = vmul.f32 %v835, 1.442695
        %v878 = vpow.pop %v877
        %v879 = vmul.f32 %v836, 1.442695
        %v880 = vpow.pop %v879
        %v881 = vmul.f32 %v837, 1.442695
        %v882 = vpow.pop %v881
        %v883 = vmul.f32 %v838, 1.442695
        %v884 = vpow.pop %v883
        %v885 = vmul.f32 %v839, 1.442695
        %v886 = vpow.pop %v885
        %v887 = vmul.f32 %v840, 1.442695
        %v888 = vpow.pop %v887
        %v889 = vmul.f32 %v841, 1.442695
        %v890 = vpow.pop %v889
        %v891 = vmul.f32 %v842, 1.442695
        %v892 = vpow.pop %v891
        %v893 = vmul.f32 %v843, 1.442695
        %v894 = vpow.pop %v893
        %v895 = vmul.f32 %v844, 1.442695
        %v896 = vpow.pop %v895
        %v897 = vmul.f32 %v845, 1.442695
        %v898 = vpow.pop %v897
        %v899 = vmul.f32 %v846, 1.442695
        %v900 = vpow.pop %v899
        %v901 = vmul.f32 %v847, 1.442695
        %v902 = vpow.pop %v901
        %v903 = vmul.f32 %v848, 1.442695
        %v904 = vpow.pop %v903
        %v905 = vmul.f32 %v849, 1.442695
        %v906 = vpow.pop %v905
        %v907 = vmul.f32 %v850, 1.442695
        %v908 = vpow.pop %v907
        %v909 = vmul.f32 %v851, 1.442695
        %v910 = vpow.pop %v909
        %v911 = vmul.f32 %v852, 1.442695
        %v912 = vpow.pop %v911
        %v913 = vmul.f32 %v853, 1.442695
        %v914 = vpow.pop %v913
        %v915 = vmul.f32 %v854, 1.442695
        %v916 = vpow.pop %v915
        %v917 = vmul.f32 %v855, 1.442695
        %v918 = vpow.pop %v917
        %v919 = vmul.f32 %v856, 1.442695
        %v920 = vpow.pop %v919
        %v921 = vadd.f32 %v858, 1.0
        %v922 = vadd.f32 %v860, 1.0
        %v923 = vadd.f32 %v862, 1.0
        %v924 = vadd.f32 %v864, 1.0
        %v925 = vadd.f32 %v866, 1.0
        %v926 = vadd.f32 %v868, 1.0
        %v927 = vadd.f32 %v870, 1.0
        %v928 = vadd.f32 %v872, 1.0
        %v929 = vadd.f32 %v874, 1.0
        %v930 = vadd.f32 %v876, 1.0
        %v931 = vadd.f32 %v878, 1.0
        %v932 = vadd.f32 %v880, 1.0
        %v933 = vadd.f32 %v882, 1.0
        %v934 = vadd.f32 %v884, 1.0
        %v935 = vadd.f32 %v886, 1.0
        %v936 = vadd.f32 %v888, 1.0
        %v937 = vadd.f32 %v890, 1.0
        %v938 = vadd.f32 %v892, 1.0
        %v939 = vadd.f32 %v894, 1.0
        %v940 = vadd.f32 %v896, 1.0
        %v941 = vadd.f32 %v898, 1.0
        %v942 = vadd.f32 %v900, 1.0
        %v943 = vadd.f32 %v902, 1.0
        %v944 = vadd.f32 %v904, 1.0
        %v945 = vadd.f32 %v906, 1.0
        %v946 = vadd.f32 %v908, 1.0
        %v947 = vadd.f32 %v910, 1.0
        %v948 = vadd.f32 %v912, 1.0
        %v949 = vadd.f32 %v914, 1.0
        %v950 = vadd.f32 %v916, 1.0
        %v951 = vadd.f32 %v918, 1.0
        %v952 = vadd.f32 %v920, 1.0
        %v953 = vrcp.pop %v921
        %v954 = vmul.f32 1.0, %v953
        %v955 = vrcp.pop %v922
        %v956 = vmul.f32 1.0, %v955
        %v957 = vrcp.pop %v923
        %v958 = vmul.f32 1.0, %v957
        %v959 = vrcp.pop %v924
        %v960 = vmul.f32 1.0, %v959
        %v961 = vrcp.pop %v925
        %v962 = vmul.f32 1.0, %v961
        %v963 = vrcp.pop %v926
        %v964 = vmul.f32 1.0, %v963
        %v965 = vrcp.pop %v927
        %v966 = vmul.f32 1.0, %v965
        %v967 = vrcp.pop %v928
        %v968 = vmul.f32 1.0, %v967
        %v969 = vrcp.pop %v929
        %v970 = vmul.f32 1.0, %v969
        %v971 = vrcp.pop %v930
        %v972 = vmul.f32 1.0, %v971
        %v973 = vrcp.pop %v931
        %v974 = vmul.f32 1.0, %v973
        %v975 = vrcp.pop %v932
        %v976 = vmul.f32 1.0, %v975
        %v977 = vrcp.pop %v933
        %v978 = vmul.f32 1.0, %v977
        %v979 = vrcp.pop %v934
        %v980 = vmul.f32 1.0, %v979
        %v981 = vrcp.pop %v935
        %v982 = vmul.f32 1.0, %v981
        %v983 = vrcp.pop %v936
        %v984 = vmul.f32 1.0, %v983
        %v985 = vrcp.pop %v937
        %v986 = vmul.f32 1.0, %v985
        %v987 = vrcp.pop %v938
        %v988 = vmul.f32 1.0, %v987
        %v989 = vrcp.pop %v939
        %v990 = vmul.f32 1.0, %v989
        %v991 = vrcp.pop %v940
        %v992 = vmul.f32 1.0, %v991
        %v993 = vrcp.pop %v941
        %v994 = vmul.f32 1.0, %v993
        %v995 = vrcp.pop %v942
        %v996 = vmul.f32 1.0, %v995
        %v997 = vrcp.pop %v943
        %v998 = vmul.f32 1.0, %v997
        %v999 = vrcp.pop %v944
        %v1000 = vmul.f32 1.0, %v999
        %v1001 = vrcp.pop %v945
        %v1002 = vmul.f32 1.0, %v1001
        %v1003 = vrcp.pop %v946
        %v1004 = vmul.f32 1.0, %v1003
        %v1005 = vrcp.pop %v947
        %v1006 = vmul.f32 1.0, %v1005
        %v1007 = vrcp.pop %v948
        %v1008 = vmul.f32 1.0, %v1007
        %v1009 = vrcp.pop %v949
        %v1010 = vmul.f32 1.0, %v1009
        %v1011 = vrcp.pop %v950
        %v1012 = vmul.f32 1.0, %v1011
        %v1013 = vrcp.pop %v951
        %v1014 = vmul.f32 1.0, %v1013
        %v1015 = vrcp.pop %v952
        %v1016 = vmul.f32 1.0, %v1015
        %v1017 = vtanh.pop %v793
        %v1018 = vtanh.pop %v794
        %v1019 = vtanh.pop %v795
        %v1020 = vtanh.pop %v796
        %v1021 = vtanh.pop %v797
        %v1022 = vtanh.pop %v798
        %v1023 = vtanh.pop %v799
        %v1024 = vtanh.pop %v800
        %v1025 = vtanh.pop %v801
        %v1026 = vtanh.pop %v802
        %v1027 = vtanh.pop %v803
        %v1028 = vtanh.pop %v804
        %v1029 = vtanh.pop %v805
        %v1030 = vtanh.pop %v806
        %v1031 = vtanh.pop %v807
        %v1032 = vtanh.pop %v808
        %v1033 = vtanh.pop %v809
        %v1034 = vtanh.pop %v810
        %v1035 = vtanh.pop %v811
        %v1036 = vtanh.pop %v812
        %v1037 = vtanh.pop %v813
        %v1038 = vtanh.pop %v814
        %v1039 = vtanh.pop %v815
        %v1040 = vtanh.pop %v816
        %v1041 = vtanh.pop %v817
        %v1042 = vtanh.pop %v818
        %v1043 = vtanh.pop %v819
        %v1044 = vtanh.pop %v820
        %v1045 = vtanh.pop %v821
        %v1046 = vtanh.pop %v822
        %v1047 = vtanh.pop %v823
        %v1048 = vtanh.pop %v824
        %v1081 = vmul.f32 %v954, %v400
        %v1082 = vmul.f32 %v956, %v402
        %v1083 = vmul.f32 %v958, %v404
        %v1084 = vmul.f32 %v960, %v406
        %v1085 = vmul.f32 %v962, %v408
        %v1086 = vmul.f32 %v964, %v410
        %v1087 = vmul.f32 %v966, %v412
        %v1088 = vmul.f32 %v968, %v414
        %v1089 = vmul.f32 %v970, %v416
        %v1090 = vmul.f32 %v972, %v418
        %v1091 = vmul.f32 %v974, %v420
        %v1092 = vmul.f32 %v976, %v422
        %v1093 = vmul.f32 %v978, %v424
        %v1094 = vmul.f32 %v980, %v426
        %v1095 = vmul.f32 %v982, %v428
        %v1096 = vmul.f32 %v984, %v430
        %v1097 = vmul.f32 %v986, %v432
        %v1098 = vmul.f32 %v988, %v434
        %v1099 = vmul.f32 %v990, %v436
        %v1100 = vmul.f32 %v992, %v438
        %v1101 = vmul.f32 %v994, %v440
        %v1102 = vmul.f32 %v996, %v442
        %v1103 = vmul.f32 %v998, %v444
        %v1104 = vmul.f32 %v1000, %v446
        %v1105 = vmul.f32 %v1002, %v448
        %v1106 = vmul.f32 %v1004, %v450
        %v1107 = vmul.f32 %v1006, %v452
        %v1108 = vmul.f32 %v1008, %v454
        %v1109 = vmul.f32 %v1010, %v456
        %v1110 = vmul.f32 %v1012, %v458
        %v1111 = vmul.f32 %v1014, %v460
        %v1112 = vmul.f32 %v1016, %v462
        %1145 = vrot.lane.b32.xlu0 %v1017, 68
        %v1146 = vpop.permute.xlu0 %1145
        %1147 = vrot.lane.b32.xlu0 %v1018, 68
        %v1148 = vpop.permute.xlu0 %1147
        %1149 = vrot.lane.b32.xlu0 %v1019, 68
        %v1150 = vpop.permute.xlu0 %1149
        %1151 = vrot.lane.b32.xlu0 %v1020, 68
        %v1152 = vpop.permute.xlu0 %1151
        %1153 = vrot.lane.b32.xlu0 %v1021, 68
        %v1154 = vpop.permute.xlu0 %1153
        %1155 = vrot.lane.b32.xlu0 %v1022, 68
        %v1156 = vpop.permute.xlu0 %1155
        %1157 = vrot.lane.b32.xlu0 %v1023, 68
        %v1158 = vpop.permute.xlu0 %1157
        %1159 = vrot.lane.b32.xlu0 %v1024, 68
        %v1160 = vpop.permute.xlu0 %1159
        %1161 = vrot.lane.b32.xlu0 %v1025, 68
        %v1162 = vpop.permute.xlu0 %1161
        %1163 = vrot.lane.b32.xlu0 %v1026, 68
        %v1164 = vpop.permute.xlu0 %1163
        %1165 = vrot.lane.b32.xlu0 %v1027, 68
        %v1166 = vpop.permute.xlu0 %1165
        %1167 = vrot.lane.b32.xlu0 %v1028, 68
        %v1168 = vpop.permute.xlu0 %1167
        %1169 = vrot.lane.b32.xlu0 %v1029, 68
        %v1170 = vpop.permute.xlu0 %1169
        %1171 = vrot.lane.b32.xlu0 %v1030, 68
        %v1172 = vpop.permute.xlu0 %1171
        %1173 = vrot.lane.b32.xlu0 %v1031, 68
        %v1174 = vpop.permute.xlu0 %1173
        %1175 = vrot.lane.b32.xlu0 %v1032, 68
        %v1176 = vpop.permute.xlu0 %1175
        %1177 = vrot.lane.b32.xlu0 %v1033, 68
        %v1178 = vpop.permute.xlu0 %1177
        %1179 = vrot.lane.b32.xlu0 %v1034, 68
        %v1180 = vpop.permute.xlu0 %1179
        %1181 = vrot.lane.b32.xlu0 %v1035, 68
        %v1182 = vpop.permute.xlu0 %1181
        %1183 = vrot.lane.b32.xlu0 %v1036, 68
        %v1184 = vpop.permute.xlu0 %1183
        %1185 = vrot.lane.b32.xlu0 %v1037, 68
        %v1186 = vpop.permute.xlu0 %1185
        %1187 = vrot.lane.b32.xlu0 %v1038, 68
        %v1188 = vpop.permute.xlu0 %1187
        %1189 = vrot.lane.b32.xlu0 %v1039, 68
        %v1190 = vpop.permute.xlu0 %1189
        %1191 = vrot.lane.b32.xlu0 %v1040, 68
        %v1192 = vpop.permute.xlu0 %1191
        %1193 = vrot.lane.b32.xlu0 %v1041, 68
        %v1194 = vpop.permute.xlu0 %1193
        %1195 = vrot.lane.b32.xlu0 %v1042, 68
        %v1196 = vpop.permute.xlu0 %1195
        %1197 = vrot.lane.b32.xlu0 %v1043, 68
        %v1198 = vpop.permute.xlu0 %1197
        %1199 = vrot.lane.b32.xlu0 %v1044, 68
        %v1200 = vpop.permute.xlu0 %1199
        %1201 = vrot.lane.b32.xlu0 %v1045, 68
        %v1202 = vpop.permute.xlu0 %1201
        %1203 = vrot.lane.b32.xlu0 %v1046, 68
        %v1204 = vpop.permute.xlu0 %1203
        %1205 = vrot.lane.b32.xlu0 %v1047, 68
        %v1206 = vpop.permute.xlu0 %1205
        %1207 = vrot.lane.b32.xlu0 %v1048, 68
        %v1208 = vpop.permute.xlu0 %1207
        %v1241 = vmul.f32 %v954, %v1146
        %v1242 = vmul.f32 %v956, %v1148
        %v1243 = vmul.f32 %v958, %v1150
        %v1244 = vmul.f32 %v960, %v1152
        %v1245 = vmul.f32 %v962, %v1154
        %v1246 = vmul.f32 %v964, %v1156
        %v1247 = vmul.f32 %v966, %v1158
        %v1248 = vmul.f32 %v968, %v1160
        %v1249 = vmul.f32 %v970, %v1162
        %v1250 = vmul.f32 %v972, %v1164
        %v1251 = vmul.f32 %v974, %v1166
        %v1252 = vmul.f32 %v976, %v1168
        %v1253 = vmul.f32 %v978, %v1170
        %v1254 = vmul.f32 %v980, %v1172
        %v1255 = vmul.f32 %v982, %v1174
        %v1256 = vmul.f32 %v984, %v1176
        %v1257 = vmul.f32 %v986, %v1178
        %v1258 = vmul.f32 %v988, %v1180
        %v1259 = vmul.f32 %v990, %v1182
        %v1260 = vmul.f32 %v992, %v1184
        %v1261 = vmul.f32 %v994, %v1186
        %v1262 = vmul.f32 %v996, %v1188
        %v1263 = vmul.f32 %v998, %v1190
        %v1264 = vmul.f32 %v1000, %v1192
        %v1265 = vmul.f32 %v1002, %v1194
        %v1266 = vmul.f32 %v1004, %v1196
        %v1267 = vmul.f32 %v1006, %v1198
        %v1268 = vmul.f32 %v1008, %v1200
        %v1269 = vmul.f32 %v1010, %v1202
        %v1270 = vmul.f32 %v1012, %v1204
        %v1271 = vmul.f32 %v1014, %v1206
        %v1272 = vmul.f32 %v1016, %v1208
        %1305 = vrot.lane.b32.xlu0 %v1241, 20
        %v1306 = vpop.permute.xlu0 %1305
        %1307 = vrot.lane.b32.xlu0 %v1242, 20
        %v1308 = vpop.permute.xlu0 %1307
        %1309 = vrot.lane.b32.xlu0 %v1243, 20
        %v1310 = vpop.permute.xlu0 %1309
        %1311 = vrot.lane.b32.xlu0 %v1244, 20
        %v1312 = vpop.permute.xlu0 %1311
        %1313 = vrot.lane.b32.xlu0 %v1245, 20
        %v1314 = vpop.permute.xlu0 %1313
        %1315 = vrot.lane.b32.xlu0 %v1246, 20
        %v1316 = vpop.permute.xlu0 %1315
        %1317 = vrot.lane.b32.xlu0 %v1247, 20
        %v1318 = vpop.permute.xlu0 %1317
        %1319 = vrot.lane.b32.xlu0 %v1248, 20
        %v1320 = vpop.permute.xlu0 %1319
        %1321 = vrot.lane.b32.xlu0 %v1249, 20
        %v1322 = vpop.permute.xlu0 %1321
        %1323 = vrot.lane.b32.xlu0 %v1250, 20
        %v1324 = vpop.permute.xlu0 %1323
        %1325 = vrot.lane.b32.xlu0 %v1251, 20
        %v1326 = vpop.permute.xlu0 %1325
        %1327 = vrot.lane.b32.xlu0 %v1252, 20
        %v1328 = vpop.permute.xlu0 %1327
        %1329 = vrot.lane.b32.xlu0 %v1253, 20
        %v1330 = vpop.permute.xlu0 %1329
        %1331 = vrot.lane.b32.xlu0 %v1254, 20
        %v1332 = vpop.permute.xlu0 %1331
        %1333 = vrot.lane.b32.xlu0 %v1255, 20
        %v1334 = vpop.permute.xlu0 %1333
        %1335 = vrot.lane.b32.xlu0 %v1256, 20
        %v1336 = vpop.permute.xlu0 %1335
        %1337 = vrot.lane.b32.xlu0 %v1257, 20
        %v1338 = vpop.permute.xlu0 %1337
        %1339 = vrot.lane.b32.xlu0 %v1258, 20
        %v1340 = vpop.permute.xlu0 %1339
        %1341 = vrot.lane.b32.xlu0 %v1259, 20
        %v1342 = vpop.permute.xlu0 %1341
        %1343 = vrot.lane.b32.xlu0 %v1260, 20
        %v1344 = vpop.permute.xlu0 %1343
        %1345 = vrot.lane.b32.xlu0 %v1261, 20
        %v1346 = vpop.permute.xlu0 %1345
        %1347 = vrot.lane.b32.xlu0 %v1262, 20
        %v1348 = vpop.permute.xlu0 %1347
        %1349 = vrot.lane.b32.xlu0 %v1263, 20
        %v1350 = vpop.permute.xlu0 %1349
        %1351 = vrot.lane.b32.xlu0 %v1264, 20
        %v1352 = vpop.permute.xlu0 %1351
        %1353 = vrot.lane.b32.xlu0 %v1265, 20
        %v1354 = vpop.permute.xlu0 %1353
        %1355 = vrot.lane.b32.xlu0 %v1266, 20
        %v1356 = vpop.permute.xlu0 %1355
        %1357 = vrot.lane.b32.xlu0 %v1267, 20
        %v1358 = vpop.permute.xlu0 %1357
        %1359 = vrot.lane.b32.xlu0 %v1268, 20
        %v1360 = vpop.permute.xlu0 %1359
        %1361 = vrot.lane.b32.xlu0 %v1269, 20
        %v1362 = vpop.permute.xlu0 %1361
        %1363 = vrot.lane.b32.xlu0 %v1270, 20
        %v1364 = vpop.permute.xlu0 %1363
        %1365 = vrot.lane.b32.xlu0 %v1271, 20
        %v1366 = vpop.permute.xlu0 %1365
        %1367 = vrot.lane.b32.xlu0 %v1272, 20
        %v1368 = vpop.permute.xlu0 %1367
        %v1401 = vadd.f32 %v1081, %v1306
        %v1402 = vadd.f32 %v1082, %v1308
        %v1403 = vadd.f32 %v1083, %v1310
        %v1404 = vadd.f32 %v1084, %v1312
        %v1405 = vadd.f32 %v1085, %v1314
        %v1406 = vadd.f32 %v1086, %v1316
        %v1407 = vadd.f32 %v1087, %v1318
        %v1408 = vadd.f32 %v1088, %v1320
        %v1409 = vadd.f32 %v1089, %v1322
        %v1410 = vadd.f32 %v1090, %v1324
        %v1411 = vadd.f32 %v1091, %v1326
        %v1412 = vadd.f32 %v1092, %v1328
        %v1413 = vadd.f32 %v1093, %v1330
        %v1414 = vadd.f32 %v1094, %v1332
        %v1415 = vadd.f32 %v1095, %v1334
        %v1416 = vadd.f32 %v1096, %v1336
        %v1417 = vadd.f32 %v1097, %v1338
        %v1418 = vadd.f32 %v1098, %v1340
        %v1419 = vadd.f32 %v1099, %v1342
        %v1420 = vadd.f32 %v1100, %v1344
        %v1421 = vadd.f32 %v1101, %v1346
        %v1422 = vadd.f32 %v1102, %v1348
        %v1423 = vadd.f32 %v1103, %v1350
        %v1424 = vadd.f32 %v1104, %v1352
        %v1425 = vadd.f32 %v1105, %v1354
        %v1426 = vadd.f32 %v1106, %v1356
        %v1427 = vadd.f32 %v1107, %v1358
        %v1428 = vadd.f32 %v1108, %v1360
        %v1429 = vadd.f32 %v1109, %v1362
        %v1430 = vadd.f32 %v1110, %v1364
        %v1431 = vadd.f32 %v1111, %v1366
        %v1432 = vadd.f32 %v1112, %v1368
        %v1433 = vtanh.pop %v1401
        %v1434 = vtanh.pop %v1402
        %v1435 = vtanh.pop %v1403
        %v1436 = vtanh.pop %v1404
        %v1437 = vtanh.pop %v1405
        %v1438 = vtanh.pop %v1406
        %v1439 = vtanh.pop %v1407
        %v1440 = vtanh.pop %v1408
        %v1441 = vtanh.pop %v1409
        %v1442 = vtanh.pop %v1410
        %v1443 = vtanh.pop %v1411
        %v1444 = vtanh.pop %v1412
        %v1445 = vtanh.pop %v1413
        %v1446 = vtanh.pop %v1414
        %v1447 = vtanh.pop %v1415
        %v1448 = vtanh.pop %v1416
        %v1449 = vtanh.pop %v1417
        %v1450 = vtanh.pop %v1418
        %v1451 = vtanh.pop %v1419
        %v1452 = vtanh.pop %v1420
        %v1453 = vtanh.pop %v1421
        %v1454 = vtanh.pop %v1422
        %v1455 = vtanh.pop %v1423
        %v1456 = vtanh.pop %v1424
        %v1457 = vtanh.pop %v1425
        %v1458 = vtanh.pop %v1426
        %v1459 = vtanh.pop %v1427
        %v1460 = vtanh.pop %v1428
        %v1461 = vtanh.pop %v1429
        %v1462 = vtanh.pop %v1430
        %v1463 = vtanh.pop %v1431
        %v1464 = vtanh.pop %v1432
        %1497 = vrot.lane.b32.xlu0 %v1433, 20
        %v1498 = vpop.permute.xlu0 %1497
        %1499 = vrot.lane.b32.xlu0 %v1434, 20
        %v1500 = vpop.permute.xlu0 %1499
        %1501 = vrot.lane.b32.xlu0 %v1435, 20
        %v1502 = vpop.permute.xlu0 %1501
        %1503 = vrot.lane.b32.xlu0 %v1436, 20
        %v1504 = vpop.permute.xlu0 %1503
        %1505 = vrot.lane.b32.xlu0 %v1437, 20
        %v1506 = vpop.permute.xlu0 %1505
        %1507 = vrot.lane.b32.xlu0 %v1438, 20
        %v1508 = vpop.permute.xlu0 %1507
        %1509 = vrot.lane.b32.xlu0 %v1439, 20
        %v1510 = vpop.permute.xlu0 %1509
        %1511 = vrot.lane.b32.xlu0 %v1440, 20
        %v1512 = vpop.permute.xlu0 %1511
        %1513 = vrot.lane.b32.xlu0 %v1441, 20
        %v1514 = vpop.permute.xlu0 %1513
        %1515 = vrot.lane.b32.xlu0 %v1442, 20
        %v1516 = vpop.permute.xlu0 %1515
        %1517 = vrot.lane.b32.xlu0 %v1443, 20
        %v1518 = vpop.permute.xlu0 %1517
        %1519 = vrot.lane.b32.xlu0 %v1444, 20
        %v1520 = vpop.permute.xlu0 %1519
        %1521 = vrot.lane.b32.xlu0 %v1445, 20
        %v1522 = vpop.permute.xlu0 %1521
        %1523 = vrot.lane.b32.xlu0 %v1446, 20
        %v1524 = vpop.permute.xlu0 %1523
        %1525 = vrot.lane.b32.xlu0 %v1447, 20
        %v1526 = vpop.permute.xlu0 %1525
        %1527 = vrot.lane.b32.xlu0 %v1448, 20
        %v1528 = vpop.permute.xlu0 %1527
        %1529 = vrot.lane.b32.xlu0 %v1449, 20
        %v1530 = vpop.permute.xlu0 %1529
        %1531 = vrot.lane.b32.xlu0 %v1450, 20
        %v1532 = vpop.permute.xlu0 %1531
        %1533 = vrot.lane.b32.xlu0 %v1451, 20
        %v1534 = vpop.permute.xlu0 %1533
        %1535 = vrot.lane.b32.xlu0 %v1452, 20
        %v1536 = vpop.permute.xlu0 %1535
        %1537 = vrot.lane.b32.xlu0 %v1453, 20
        %v1538 = vpop.permute.xlu0 %1537
        %1539 = vrot.lane.b32.xlu0 %v1454, 20
        %v1540 = vpop.permute.xlu0 %1539
        %1541 = vrot.lane.b32.xlu0 %v1455, 20
        %v1542 = vpop.permute.xlu0 %1541
        %1543 = vrot.lane.b32.xlu0 %v1456, 20
        %v1544 = vpop.permute.xlu0 %1543
        %1545 = vrot.lane.b32.xlu0 %v1457, 20
        %v1546 = vpop.permute.xlu0 %1545
        %1547 = vrot.lane.b32.xlu0 %v1458, 20
        %v1548 = vpop.permute.xlu0 %1547
        %1549 = vrot.lane.b32.xlu0 %v1459, 20
        %v1550 = vpop.permute.xlu0 %1549
        %1551 = vrot.lane.b32.xlu0 %v1460, 20
        %v1552 = vpop.permute.xlu0 %1551
        %1553 = vrot.lane.b32.xlu0 %v1461, 20
        %v1554 = vpop.permute.xlu0 %1553
        %1555 = vrot.lane.b32.xlu0 %v1462, 20
        %v1556 = vpop.permute.xlu0 %1555
        %1557 = vrot.lane.b32.xlu0 %v1463, 20
        %v1558 = vpop.permute.xlu0 %1557
        %1559 = vrot.lane.b32.xlu0 %v1464, 20
        %v1560 = vpop.permute.xlu0 %1559
        %v1593 = vmul.f32 %v954, %v1498
        %v1594 = vmul.f32 %v956, %v1500
        %v1595 = vmul.f32 %v958, %v1502
        %v1596 = vmul.f32 %v960, %v1504
        %v1597 = vmul.f32 %v962, %v1506
        %v1598 = vmul.f32 %v964, %v1508
        %v1599 = vmul.f32 %v966, %v1510
        %v1600 = vmul.f32 %v968, %v1512
        %v1601 = vmul.f32 %v970, %v1514
        %v1602 = vmul.f32 %v972, %v1516
        %v1603 = vmul.f32 %v974, %v1518
        %v1604 = vmul.f32 %v976, %v1520
        %v1605 = vmul.f32 %v978, %v1522
        %v1606 = vmul.f32 %v980, %v1524
        %v1607 = vmul.f32 %v982, %v1526
        %v1608 = vmul.f32 %v984, %v1528
        %v1609 = vmul.f32 %v986, %v1530
        %v1610 = vmul.f32 %v988, %v1532
        %v1611 = vmul.f32 %v990, %v1534
        %v1612 = vmul.f32 %v992, %v1536
        %v1613 = vmul.f32 %v994, %v1538
        %v1614 = vmul.f32 %v996, %v1540
        %v1615 = vmul.f32 %v998, %v1542
        %v1616 = vmul.f32 %v1000, %v1544
        %v1617 = vmul.f32 %v1002, %v1546
        %v1618 = vmul.f32 %v1004, %v1548
        %v1619 = vmul.f32 %v1006, %v1550
        %v1620 = vmul.f32 %v1008, %v1552
        %v1621 = vmul.f32 %v1010, %v1554
        %v1622 = vmul.f32 %v1012, %v1556
        %v1623 = vmul.f32 %v1014, %v1558
        %v1624 = vmul.f32 %v1016, %v1560
        %1657 = vrot.lane.b32.xlu0 %v1593, 88
        %v1658 = vpop.permute.xlu0 %1657
        %1659 = vrot.lane.b32.xlu0 %v1594, 88
        %v1660 = vpop.permute.xlu0 %1659
        %1661 = vrot.lane.b32.xlu0 %v1595, 88
        %v1662 = vpop.permute.xlu0 %1661
        %1663 = vrot.lane.b32.xlu0 %v1596, 88
        %v1664 = vpop.permute.xlu0 %1663
        %1665 = vrot.lane.b32.xlu0 %v1597, 88
        %v1666 = vpop.permute.xlu0 %1665
        %1667 = vrot.lane.b32.xlu0 %v1598, 88
        %v1668 = vpop.permute.xlu0 %1667
        %1669 = vrot.lane.b32.xlu0 %v1599, 88
        %v1670 = vpop.permute.xlu0 %1669
        %1671 = vrot.lane.b32.xlu0 %v1600, 88
        %v1672 = vpop.permute.xlu0 %1671
        %1673 = vrot.lane.b32.xlu0 %v1601, 88
        %v1674 = vpop.permute.xlu0 %1673
        %1675 = vrot.lane.b32.xlu0 %v1602, 88
        %v1676 = vpop.permute.xlu0 %1675
        %1677 = vrot.lane.b32.xlu0 %v1603, 88
        %v1678 = vpop.permute.xlu0 %1677
        %1679 = vrot.lane.b32.xlu0 %v1604, 88
        %v1680 = vpop.permute.xlu0 %1679
        %1681 = vrot.lane.b32.xlu0 %v1605, 88
        %v1682 = vpop.permute.xlu0 %1681
        %1683 = vrot.lane.b32.xlu0 %v1606, 88
        %v1684 = vpop.permute.xlu0 %1683
        %1685 = vrot.lane.b32.xlu0 %v1607, 88
        %v1686 = vpop.permute.xlu0 %1685
        %1687 = vrot.lane.b32.xlu0 %v1608, 88
        %v1688 = vpop.permute.xlu0 %1687
        %1689 = vrot.lane.b32.xlu0 %v1609, 88
        %v1690 = vpop.permute.xlu0 %1689
        %1691 = vrot.lane.b32.xlu0 %v1610, 88
        %v1692 = vpop.permute.xlu0 %1691
        %1693 = vrot.lane.b32.xlu0 %v1611, 88
        %v1694 = vpop.permute.xlu0 %1693
        %1695 = vrot.lane.b32.xlu0 %v1612, 88
        %v1696 = vpop.permute.xlu0 %1695
        %1697 = vrot.lane.b32.xlu0 %v1613, 88
        %v1698 = vpop.permute.xlu0 %1697
        %1699 = vrot.lane.b32.xlu0 %v1614, 88
        %v1700 = vpop.permute.xlu0 %1699
        %1701 = vrot.lane.b32.xlu0 %v1615, 88
        %v1702 = vpop.permute.xlu0 %1701
        %1703 = vrot.lane.b32.xlu0 %v1616, 88
        %v1704 = vpop.permute.xlu0 %1703
        %1705 = vrot.lane.b32.xlu0 %v1617, 88
        %v1706 = vpop.permute.xlu0 %1705
        %1707 = vrot.lane.b32.xlu0 %v1618, 88
        %v1708 = vpop.permute.xlu0 %1707
        %1709 = vrot.lane.b32.xlu0 %v1619, 88
        %v1710 = vpop.permute.xlu0 %1709
        %1711 = vrot.lane.b32.xlu0 %v1620, 88
        %v1712 = vpop.permute.xlu0 %1711
        %1713 = vrot.lane.b32.xlu0 %v1621, 88
        %v1714 = vpop.permute.xlu0 %1713
        %1715 = vrot.lane.b32.xlu0 %v1622, 88
        %v1716 = vpop.permute.xlu0 %1715
        %1717 = vrot.lane.b32.xlu0 %v1623, 88
        %v1718 = vpop.permute.xlu0 %1717
        %1719 = vrot.lane.b32.xlu0 %v1624, 88
        %v1720 = vpop.permute.xlu0 %1719
        %1753 = vrot.lane.b32.xlu0 %v164, 107
        %v1754 = vpop.permute.xlu0 %1753
        %1755 = vrot.lane.b32.xlu0 %v165, 107
        %v1756 = vpop.permute.xlu0 %1755
        %1757 = vrot.lane.b32.xlu0 %v166, 107
        %v1758 = vpop.permute.xlu0 %1757
        %1759 = vrot.lane.b32.xlu0 %v167, 107
        %v1760 = vpop.permute.xlu0 %1759
        %1761 = vrot.lane.b32.xlu0 %v168, 107
        %v1762 = vpop.permute.xlu0 %1761
        %1763 = vrot.lane.b32.xlu0 %v169, 107
        %v1764 = vpop.permute.xlu0 %1763
        %1765 = vrot.lane.b32.xlu0 %v170, 107
        %v1766 = vpop.permute.xlu0 %1765
        %1767 = vrot.lane.b32.xlu0 %v171, 107
        %v1768 = vpop.permute.xlu0 %1767
        %1769 = vrot.lane.b32.xlu0 %v172, 107
        %v1770 = vpop.permute.xlu0 %1769
        %1771 = vrot.lane.b32.xlu0 %v173, 107
        %v1772 = vpop.permute.xlu0 %1771
        %1773 = vrot.lane.b32.xlu0 %v174, 107
        %v1774 = vpop.permute.xlu0 %1773
        %1775 = vrot.lane.b32.xlu0 %v175, 107
        %v1776 = vpop.permute.xlu0 %1775
        %1777 = vrot.lane.b32.xlu0 %v176, 107
        %v1778 = vpop.permute.xlu0 %1777
        %1779 = vrot.lane.b32.xlu0 %v177, 107
        %v1780 = vpop.permute.xlu0 %1779
        %1781 = vrot.lane.b32.xlu0 %v178, 107
        %v1782 = vpop.permute.xlu0 %1781
        %1783 = vrot.lane.b32.xlu0 %v179, 107
        %v1784 = vpop.permute.xlu0 %1783
        %1785 = vrot.lane.b32.xlu0 %v180, 107
        %v1786 = vpop.permute.xlu0 %1785
        %1787 = vrot.lane.b32.xlu0 %v181, 107
        %v1788 = vpop.permute.xlu0 %1787
        %1789 = vrot.lane.b32.xlu0 %v182, 107
        %v1790 = vpop.permute.xlu0 %1789
        %1791 = vrot.lane.b32.xlu0 %v183, 107
        %v1792 = vpop.permute.xlu0 %1791
        %1793 = vrot.lane.b32.xlu0 %v184, 107
        %v1794 = vpop.permute.xlu0 %1793
        %1795 = vrot.lane.b32.xlu0 %v185, 107
        %v1796 = vpop.permute.xlu0 %1795
        %1797 = vrot.lane.b32.xlu0 %v186, 107
        %v1798 = vpop.permute.xlu0 %1797
        %1799 = vrot.lane.b32.xlu0 %v187, 107
        %v1800 = vpop.permute.xlu0 %1799
        %1801 = vrot.lane.b32.xlu0 %v188, 107
        %v1802 = vpop.permute.xlu0 %1801
        %1803 = vrot.lane.b32.xlu0 %v189, 107
        %v1804 = vpop.permute.xlu0 %1803
        %1805 = vrot.lane.b32.xlu0 %v190, 107
        %v1806 = vpop.permute.xlu0 %1805
        %1807 = vrot.lane.b32.xlu0 %v191, 107
        %v1808 = vpop.permute.xlu0 %1807
        %1809 = vrot.lane.b32.xlu0 %v192, 107
        %v1810 = vpop.permute.xlu0 %1809
        %1811 = vrot.lane.b32.xlu0 %v193, 107
        %v1812 = vpop.permute.xlu0 %1811
        %1813 = vrot.lane.b32.xlu0 %v194, 107
        %v1814 = vpop.permute.xlu0 %1813
        %1815 = vrot.lane.b32.xlu0 %v195, 107
        %v1816 = vpop.permute.xlu0 %1815
        %v1849 = vsel %vm463, %v1658, %v1754
        %v1850 = vsel %vm463, %v1660, %v1756
        %v1851 = vsel %vm463, %v1662, %v1758
        %v1852 = vsel %vm463, %v1664, %v1760
        %v1853 = vsel %vm463, %v1666, %v1762
        %v1854 = vsel %vm463, %v1668, %v1764
        %v1855 = vsel %vm463, %v1670, %v1766
        %v1856 = vsel %vm463, %v1672, %v1768
        %v1857 = vsel %vm463, %v1674, %v1770
        %v1858 = vsel %vm463, %v1676, %v1772
        %v1859 = vsel %vm463, %v1678, %v1774
        %v1860 = vsel %vm463, %v1680, %v1776
        %v1861 = vsel %vm463, %v1682, %v1778
        %v1862 = vsel %vm463, %v1684, %v1780
        %v1863 = vsel %vm463, %v1686, %v1782
        %v1864 = vsel %vm463, %v1688, %v1784
        %v1865 = vsel %vm463, %v1690, %v1786
        %v1866 = vsel %vm463, %v1692, %v1788
        %v1867 = vsel %vm463, %v1694, %v1790
        %v1868 = vsel %vm463, %v1696, %v1792
        %v1869 = vsel %vm463, %v1698, %v1794
        %v1870 = vsel %vm463, %v1700, %v1796
        %v1871 = vsel %vm463, %v1702, %v1798
        %v1872 = vsel %vm463, %v1704, %v1800
        %v1873 = vsel %vm463, %v1706, %v1802
        %v1874 = vsel %vm463, %v1708, %v1804
        %v1875 = vsel %vm463, %v1710, %v1806
        %v1876 = vsel %vm463, %v1712, %v1808
        %v1877 = vsel %vm463, %v1714, %v1810
        %v1878 = vsel %vm463, %v1716, %v1812
        %v1879 = vsel %vm463, %v1718, %v1814
        %v1880 = vsel %vm463, %v1720, %v1816
        %v1881 = vld [vmem:[%s1 + $0x28] sm:$0xff]
        %v1882 = vld [vmem:[%s1 + $0x30] sm:$0xff]
        %v1883 = vld [vmem:[%s1 + $0x38] sm:$0xff]
        %v1884 = vld [vmem:[%s1 + $0x40] sm:$0xff]
        %v1885 = vld [vmem:[%s1 + $0x48] sm:$0xff]
        %v1886 = vlaneseq
        %v1887 = vshrl.u32 %v1886, 7
        %v1888 = vsub.s32 0, %v1887
        %v1889 = vrot.slane %v197, %v1888
        %vm1890 = vcmask 326656
        %v1892 = vsel %vm1890, %v1849, 0
        %v1895 = vsel %vm1890, %v1850, 0
        %v1898 = vsel %vm1890, %v1851, 0
        %v1901 = vsel %vm1890, %v1852, 0
        %v1904 = vsel %vm1890, %v1853, 0
        %v1907 = vsel %vm1890, %v1854, 0
        %v1910 = vsel %vm1890, %v1855, 0
        %v1913 = vsel %vm1890, %v1856, 0
        %v1916 = vsel %vm1890, %v1857, 0
        %v1919 = vsel %vm1890, %v1858, 0
        %v1922 = vsel %vm1890, %v1859, 0
        %v1925 = vsel %vm1890, %v1860, 0
        %v1928 = vsel %vm1890, %v1861, 0
        %v1931 = vsel %vm1890, %v1862, 0
        %v1934 = vsel %vm1890, %v1863, 0
        %v1937 = vsel %vm1890, %v1864, 0
        %v1940 = vsel %vm1890, %v1865, 0
        %v1943 = vsel %vm1890, %v1866, 0
        %v1946 = vsel %vm1890, %v1867, 0
        %v1949 = vsel %vm1890, %v1868, 0
        %v1952 = vsel %vm1890, %v1869, 0
        %v1955 = vsel %vm1890, %v1870, 0
        %v1958 = vsel %vm1890, %v1871, 0
        %v1961 = vsel %vm1890, %v1872, 0
        %v1964 = vsel %vm1890, %v1873, 0
        %v1967 = vsel %vm1890, %v1874, 0
        %v1970 = vsel %vm1890, %v1875, 0
        %v1973 = vsel %vm1890, %v1876, 0
        %v1976 = vsel %vm1890, %v1877, 0
        %v1979 = vsel %vm1890, %v1878, 0
        %v1982 = vsel %vm1890, %v1879, 0
        %v1985 = vsel %vm1890, %v1880, 0
        %1987 = vmatprep.subr.mxu0 0.0
        %1988 = vmatpush1.msra.mxu0 %v1881
        %1989 = vmatprep.subr.mxu0 0.0
        %1990 = vmatpush1.msra.mxu0 %v1882
        %1991 = vmatprep.subr.mxu0 0.0
        %1992 = vmatpush1.msra.mxu0 %v1883
        %1993 = vmatprep.subr.mxu0 0.0
        %1994 = vmatpush1.msra.mxu0 %v1884
        %1995 = vmatprep.subr.mxu0 0.0
        %1996 = vmatpush1.msra.mxu0 %v1885
        %1997 = vmatprep.subr.mxu0 0.0
        %1998 = vmatpush1.msra.mxu0 0.0
        %1999 = vmatprep.subr.mxu0 0.0
        %2000 = vmatpush1.msra.mxu0 0.0
        %2001 = vmatprep.subr.mxu0 0.0
        %2002 = vmatpush1.msra.mxu0 0.0
        %2003 = vmatprep.subr.mxu0 0.0
        %2004 = vmatpush1.msra.mxu0 0.0
        %2005 = vmatprep.subr.mxu0 0.0
        %2006 = vmatpush1.msra.mxu0 0.0
        %2007 = vmatprep.subr.mxu0 0.0
        %2008 = vmatpush1.msra.mxu0 0.0
        %2009 = vmatprep.subr.mxu0 0.0
        %2010 = vmatpush1.msra.mxu0 0.0
        %2011 = vmatprep.subr.mxu0 0.0
        %2012 = vmatpush1.msra.mxu0 0.0
        %2013 = vmatprep.subr.mxu0 0.0
        %2014 = vmatpush1.msra.mxu0 0.0
        %2015 = vmatprep.subr.mxu0 0.0
        %2016 = vmatpush1.msra.mxu0 0.0
        %2017 = vmatprep.subr.mxu0 0.0
        %2018 = vmatpush1.msra.mxu0 0.0
        %2019 = vmatprep.subr.mxu0 0.0
        %2020 = vmatpush1.msra.mxu0 0.0
        %2021 = vmatprep.subr.mxu0 0.0
        %2022 = vmatpush1.msra.mxu0 0.0
        %2023 = vmatprep.subr.mxu0 0.0
        %2024 = vmatpush1.msra.mxu0 0.0
        %2025 = vmatprep.subr.mxu0 0.0
        %2026 = vmatpush1.msra.mxu0 0.0
        %2027 = vmatprep.subr.mxu0 0.0
        %2028 = vmatpush1.msra.mxu0 0.0
        %2029 = vmatprep.subr.mxu0 0.0
        %2030 = vmatpush1.msra.mxu0 0.0
        %2031 = vmatprep.subr.mxu0 0.0
        %2032 = vmatpush1.msra.mxu0 0.0
        %2033 = vmatprep.subr.mxu0 0.0
        %2034 = vmatpush1.msra.mxu0 0.0
        %2035 = vmatprep.subr.mxu0 0.0
        %2036 = vmatpush1.msra.mxu0 0.0
        %2037 = vmatprep.subr.mxu0 0.0
        %2038 = vmatpush1.msra.mxu0 0.0
        %2039 = vmatprep.subr.mxu0 0.0
        %2040 = vmatpush1.msra.mxu0 0.0
        %2041 = vmatprep.subr.mxu0 0.0
        %2042 = vmatpush1.msra.mxu0 0.0
        %2043 = vmatprep.subr.mxu0 0.0
        %2044 = vmatpush1.msra.mxu0 0.0
        %2045 = vmatprep.subr.mxu0 0.0
        %2046 = vmatpush1.msra.mxu0 0.0
        %2047 = vmatprep.subr.mxu0 0.0
        %2048 = vmatpush1.msra.mxu0 0.0
        %2049 = vmatprep.subr.mxu0 0.0
        %2050 = vmatpush1.msra.mxu0 0.0
        %2051 = vmatprep.mubr.f32.mxu0 0.0
        %2052 = vmatmul.mubr.f32.gmra.mrb[0].mxu0 %v1892
        %v2053 = vpop.f32.mrb[0].mxu0
        %v2054 = vadd.f32 %v1889, %v2053
        %v2055 = vpop.f32.mrb[0].mxu0
        %2056 = vmatprep.mubr.f32.mxu0 0.0
        %2057 = vmatmul.mubr.f32.gmra.mrb[0].mxu0 %v1895
        %v2058 = vpop.f32.mrb[0].mxu0
        %v2059 = vadd.f32 %v1889, %v2058
        %v2060 = vpop.f32.mrb[0].mxu0
        %2061 = vmatprep.mubr.f32.mxu0 0.0
        %2062 = vmatmul.mubr.f32.gmra.mrb[0].mxu0 %v1898
        %v2063 = vpop.f32.mrb[0].mxu0
        %v2064 = vadd.f32 %v1889, %v2063
        %v2065 = vpop.f32.mrb[0].mxu0
        %2066 = vmatprep.mubr.f32.mxu0 0.0
        %2067 = vmatmul.mubr.f32.gmra.mrb[0].mxu0 %v1901
        %v2068 = vpop.f32.mrb[0].mxu0
        %v2069 = vadd.f32 %v1889, %v2068
        %v2070 = vpop.f32.mrb[0].mxu0
        %2071 = vmatprep.mubr.f32.mxu0 0.0
        %2072 = vmatmul.mubr.f32.gmra.mrb[0].mxu0 %v1904
        %v2073 = vpop.f32.mrb[0].mxu0
        %v2074 = vadd.f32 %v1889, %v2073
        %v2075 = vpop.f32.mrb[0].mxu0
        %2076 = vmatprep.mubr.f32.mxu0 0.0
        %2077 = vmatmul.mubr.f32.gmra.mrb[0].mxu0 %v1907
        %v2078 = vpop.f32.mrb[0].mxu0
        %v2079 = vadd.f32 %v1889, %v2078
        %v2080 = vpop.f32.mrb[0].mxu0
        %2081 = vmatprep.mubr.f32.mxu0 0.0
        %2082 = vmatmul.mubr.f32.gmra.mrb[0].mxu0 %v1910
        %v2083 = vpop.f32.mrb[0].mxu0
        %v2084 = vadd.f32 %v1889, %v2083
        %v2085 = vpop.f32.mrb[0].mxu0
        %2086 = vmatprep.mubr.f32.mxu0 0.0
        %2087 = vmatmul.mubr.f32.gmra.mrb[0].mxu0 %v1913
        %v2088 = vpop.f32.mrb[0].mxu0
        %v2089 = vadd.f32 %v1889, %v2088
        %v2090 = vpop.f32.mrb[0].mxu0
        %2091 = vmatprep.mubr.f32.mxu0 0.0
        %2092 = vmatmul.mubr.f32.gmra.mrb[0].mxu0 %v1916
        %v2093 = vpop.f32.mrb[0].mxu0
        %v2094 = vadd.f32 %v1889, %v2093
        %v2095 = vpop.f32.mrb[0].mxu0
        %2096 = vmatprep.mubr.f32.mxu0 0.0
        %2097 = vmatmul.mubr.f32.gmra.mrb[0].mxu0 %v1919
        %v2098 = vpop.f32.mrb[0].mxu0
        %v2099 = vadd.f32 %v1889, %v2098
        %v2100 = vpop.f32.mrb[0].mxu0
        %2101 = vmatprep.mubr.f32.mxu0 0.0
        %2102 = vmatmul.mubr.f32.gmra.mrb[0].mxu0 %v1922
        %v2103 = vpop.f32.mrb[0].mxu0
        %v2104 = vadd.f32 %v1889, %v2103
        %v2105 = vpop.f32.mrb[0].mxu0
        %2106 = vmatprep.mubr.f32.mxu0 0.0
        %2107 = vmatmul.mubr.f32.gmra.mrb[0].mxu0 %v1925
        %v2108 = vpop.f32.mrb[0].mxu0
        %v2109 = vadd.f32 %v1889, %v2108
        %v2110 = vpop.f32.mrb[0].mxu0
        %2111 = vmatprep.mubr.f32.mxu0 0.0
        %2112 = vmatmul.mubr.f32.gmra.mrb[0].mxu0 %v1928
        %v2113 = vpop.f32.mrb[0].mxu0
        %v2114 = vadd.f32 %v1889, %v2113
        %v2115 = vpop.f32.mrb[0].mxu0
        %2116 = vmatprep.mubr.f32.mxu0 0.0
        %2117 = vmatmul.mubr.f32.gmra.mrb[0].mxu0 %v1931
        %v2118 = vpop.f32.mrb[0].mxu0
        %v2119 = vadd.f32 %v1889, %v2118
        %v2120 = vpop.f32.mrb[0].mxu0
        %2121 = vmatprep.mubr.f32.mxu0 0.0
        %2122 = vmatmul.mubr.f32.gmra.mrb[0].mxu0 %v1934
        %v2123 = vpop.f32.mrb[0].mxu0
        %v2124 = vadd.f32 %v1889, %v2123
        %v2125 = vpop.f32.mrb[0].mxu0
        %2126 = vmatprep.mubr.f32.mxu0 0.0
        %2127 = vmatmul.mubr.f32.gmra.mrb[0].mxu0 %v1937
        %v2128 = vpop.f32.mrb[0].mxu0
        %v2129 = vadd.f32 %v1889, %v2128
        %v2130 = vpop.f32.mrb[0].mxu0
        %2131 = vmatprep.mubr.f32.mxu0 0.0
        %2132 = vmatmul.mubr.f32.gmra.mrb[0].mxu0 %v1940
        %v2133 = vpop.f32.mrb[0].mxu0
        %v2134 = vadd.f32 %v1889, %v2133
        %v2135 = vpop.f32.mrb[0].mxu0
        %2136 = vmatprep.mubr.f32.mxu0 0.0
        %2137 = vmatmul.mubr.f32.gmra.mrb[0].mxu0 %v1943
        %v2138 = vpop.f32.mrb[0].mxu0
        %v2139 = vadd.f32 %v1889, %v2138
        %v2140 = vpop.f32.mrb[0].mxu0
        %2141 = vmatprep.mubr.f32.mxu0 0.0
        %2142 = vmatmul.mubr.f32.gmra.mrb[0].mxu0 %v1946
        %v2143 = vpop.f32.mrb[0].mxu0
        %v2144 = vadd.f32 %v1889, %v2143
        %v2145 = vpop.f32.mrb[0].mxu0
        %2146 = vmatprep.mubr.f32.mxu0 0.0
        %2147 = vmatmul.mubr.f32.gmra.mrb[0].mxu0 %v1949
        %v2148 = vpop.f32.mrb[0].mxu0
        %v2149 = vadd.f32 %v1889, %v2148
        %v2150 = vpop.f32.mrb[0].mxu0
        %2151 = vmatprep.mubr.f32.mxu0 0.0
        %2152 = vmatmul.mubr.f32.gmra.mrb[0].mxu0 %v1952
        %v2153 = vpop.f32.mrb[0].mxu0
        %v2154 = vadd.f32 %v1889, %v2153
        %v2155 = vpop.f32.mrb[0].mxu0
        %2156 = vmatprep.mubr.f32.mxu0 0.0
        %2157 = vmatmul.mubr.f32.gmra.mrb[0].mxu0 %v1955
        %v2158 = vpop.f32.mrb[0].mxu0
        %v2159 = vadd.f32 %v1889, %v2158
        %v2160 = vpop.f32.mrb[0].mxu0
        %2161 = vmatprep.mubr.f32.mxu0 0.0
        %2162 = vmatmul.mubr.f32.gmra.mrb[0].mxu0 %v1958
        %v2163 = vpop.f32.mrb[0].mxu0
        %v2164 = vadd.f32 %v1889, %v2163
        %v2165 = vpop.f32.mrb[0].mxu0
        %2166 = vmatprep.mubr.f32.mxu0 0.0
        %2167 = vmatmul.mubr.f32.gmra.mrb[0].mxu0 %v1961
        %v2168 = vpop.f32.mrb[0].mxu0
        %v2169 = vadd.f32 %v1889, %v2168
        %v2170 = vpop.f32.mrb[0].mxu0
        %2171 = vmatprep.mubr.f32.mxu0 0.0
        %2172 = vmatmul.mubr.f32.gmra.mrb[0].mxu0 %v1964
        %v2173 = vpop.f32.mrb[0].mxu0
        %v2174 = vadd.f32 %v1889, %v2173
        %v2175 = vpop.f32.mrb[0].mxu0
        %2176 = vmatprep.mubr.f32.mxu0 0.0
        %2177 = vmatmul.mubr.f32.gmra.mrb[0].mxu0 %v1967
        %v2178 = vpop.f32.mrb[0].mxu0
        %v2179 = vadd.f32 %v1889, %v2178
        %v2180 = vpop.f32.mrb[0].mxu0
        %2181 = vmatprep.mubr.f32.mxu0 0.0
        %2182 = vmatmul.mubr.f32.gmra.mrb[0].mxu0 %v1970
        %v2183 = vpop.f32.mrb[0].mxu0
        %v2184 = vadd.f32 %v1889, %v2183
        %v2185 = vpop.f32.mrb[0].mxu0
        %2186 = vmatprep.mubr.f32.mxu0 0.0
        %2187 = vmatmul.mubr.f32.gmra.mrb[0].mxu0 %v1973
        %v2188 = vpop.f32.mrb[0].mxu0
        %v2189 = vadd.f32 %v1889, %v2188
        %v2190 = vpop.f32.mrb[0].mxu0
        %2191 = vmatprep.mubr.f32.mxu0 0.0
        %2192 = vmatmul.mubr.f32.gmra.mrb[0].mxu0 %v1976
        %v2193 = vpop.f32.mrb[0].mxu0
        %v2194 = vadd.f32 %v1889, %v2193
        %v2195 = vpop.f32.mrb[0].mxu0
        %2196 = vmatprep.mubr.f32.mxu0 0.0
        %2197 = vmatmul.mubr.f32.gmra.mrb[0].mxu0 %v1979
        %v2198 = vpop.f32.mrb[0].mxu0
        %v2199 = vadd.f32 %v1889, %v2198
        %v2200 = vpop.f32.mrb[0].mxu0
        %2201 = vmatprep.mubr.f32.mxu0 0.0
        %2202 = vmatmul.mubr.f32.gmra.mrb[0].mxu0 %v1982
        %v2203 = vpop.f32.mrb[0].mxu0
        %v2204 = vadd.f32 %v1889, %v2203
        %v2205 = vpop.f32.mrb[0].mxu0
        %2206 = vmatprep.mubr.f32.mxu0 0.0
        %2207 = vmatmul.mubr.f32.gmra.mrb[0].mxu0 %v1985
        %v2208 = vpop.f32.mrb[0].mxu0
        %v2209 = vadd.f32 %v1889, %v2208
        %v2210 = vpop.f32.mrb[0].mxu0
        %2211 = vdwg.mxu0
        %v2212 = vxor.u32 %v2054, 2147483648
        %v2213 = vxor.u32 %v2059, 2147483648
        %v2214 = vxor.u32 %v2064, 2147483648
        %v2215 = vxor.u32 %v2069, 2147483648
        %v2216 = vxor.u32 %v2074, 2147483648
        %v2217 = vxor.u32 %v2079, 2147483648
        %v2218 = vxor.u32 %v2084, 2147483648
        %v2219 = vxor.u32 %v2089, 2147483648
        %v2220 = vxor.u32 %v2094, 2147483648
        %v2221 = vxor.u32 %v2099, 2147483648
        %v2222 = vxor.u32 %v2104, 2147483648
        %v2223 = vxor.u32 %v2109, 2147483648
        %v2224 = vxor.u32 %v2114, 2147483648
        %v2225 = vxor.u32 %v2119, 2147483648
        %v2226 = vxor.u32 %v2124, 2147483648
        %v2227 = vxor.u32 %v2129, 2147483648
        %v2228 = vxor.u32 %v2134, 2147483648
        %v2229 = vxor.u32 %v2139, 2147483648
        %v2230 = vxor.u32 %v2144, 2147483648
        %v2231 = vxor.u32 %v2149, 2147483648
        %v2232 = vxor.u32 %v2154, 2147483648
        %v2233 = vxor.u32 %v2159, 2147483648
        %v2234 = vxor.u32 %v2164, 2147483648
        %v2235 = vxor.u32 %v2169, 2147483648
        %v2236 = vxor.u32 %v2174, 2147483648
        %v2237 = vxor.u32 %v2179, 2147483648
        %v2238 = vxor.u32 %v2184, 2147483648
        %v2239 = vxor.u32 %v2189, 2147483648
        %v2240 = vxor.u32 %v2194, 2147483648
        %v2241 = vxor.u32 %v2199, 2147483648
        %v2242 = vxor.u32 %v2204, 2147483648
        %v2243 = vxor.u32 %v2209, 2147483648
        %v2244 = vmul.f32 %v2212, 1.442695
        %v2245 = vpow.pop %v2244
        %v2246 = vmul.f32 %v2213, 1.442695
        %v2247 = vpow.pop %v2246
        %v2248 = vmul.f32 %v2214, 1.442695
        %v2249 = vpow.pop %v2248
        %v2250 = vmul.f32 %v2215, 1.442695
        %v2251 = vpow.pop %v2250
        %v2252 = vmul.f32 %v2216, 1.442695
        %v2253 = vpow.pop %v2252
        %v2254 = vmul.f32 %v2217, 1.442695
        %v2255 = vpow.pop %v2254
        %v2256 = vmul.f32 %v2218, 1.442695
        %v2257 = vpow.pop %v2256
        %v2258 = vmul.f32 %v2219, 1.442695
        %v2259 = vpow.pop %v2258
        %v2260 = vmul.f32 %v2220, 1.442695
        %v2261 = vpow.pop %v2260
        %v2262 = vmul.f32 %v2221, 1.442695
        %v2263 = vpow.pop %v2262
        %v2264 = vmul.f32 %v2222, 1.442695
        %v2265 = vpow.pop %v2264
        %v2266 = vmul.f32 %v2223, 1.442695
        %v2267 = vpow.pop %v2266
        %v2268 = vmul.f32 %v2224, 1.442695
        %v2269 = vpow.pop %v2268
        %v2270 = vmul.f32 %v2225, 1.442695
        %v2271 = vpow.pop %v2270
        %v2272 = vmul.f32 %v2226, 1.442695
        %v2273 = vpow.pop %v2272
        %v2274 = vmul.f32 %v2227, 1.442695
        %v2275 = vpow.pop %v2274
        %v2276 = vmul.f32 %v2228, 1.442695
        %v2277 = vpow.pop %v2276
        %v2278 = vmul.f32 %v2229, 1.442695
        %v2279 = vpow.pop %v2278
        %v2280 = vmul.f32 %v2230, 1.442695
        %v2281 = vpow.pop %v2280
        %v2282 = vmul.f32 %v2231, 1.442695
        %v2283 = vpow.pop %v2282
        %v2284 = vmul.f32 %v2232, 1.442695
        %v2285 = vpow.pop %v2284
        %v2286 = vmul.f32 %v2233, 1.442695
        %v2287 = vpow.pop %v2286
        %v2288 = vmul.f32 %v2234, 1.442695
        %v2289 = vpow.pop %v2288
        %v2290 = vmul.f32 %v2235, 1.442695
        %v2291 = vpow.pop %v2290
        %v2292 = vmul.f32 %v2236, 1.442695
        %v2293 = vpow.pop %v2292
        %v2294 = vmul.f32 %v2237, 1.442695
        %v2295 = vpow.pop %v2294
        %v2296 = vmul.f32 %v2238, 1.442695
        %v2297 = vpow.pop %v2296
        %v2298 = vmul.f32 %v2239, 1.442695
        %v2299 = vpow.pop %v2298
        %v2300 = vmul.f32 %v2240, 1.442695
        %v2301 = vpow.pop %v2300
        %v2302 = vmul.f32 %v2241, 1.442695
        %v2303 = vpow.pop %v2302
        %v2304 = vmul.f32 %v2242, 1.442695
        %v2305 = vpow.pop %v2304
        %v2306 = vmul.f32 %v2243, 1.442695
        %v2307 = vpow.pop %v2306
        %v2308 = vadd.f32 %v2245, 1.0
        %v2309 = vadd.f32 %v2247, 1.0
        %v2310 = vadd.f32 %v2249, 1.0
        %v2311 = vadd.f32 %v2251, 1.0
        %v2312 = vadd.f32 %v2253, 1.0
        %v2313 = vadd.f32 %v2255, 1.0
        %v2314 = vadd.f32 %v2257, 1.0
        %v2315 = vadd.f32 %v2259, 1.0
        %v2316 = vadd.f32 %v2261, 1.0
        %v2317 = vadd.f32 %v2263, 1.0
        %v2318 = vadd.f32 %v2265, 1.0
        %v2319 = vadd.f32 %v2267, 1.0
        %v2320 = vadd.f32 %v2269, 1.0
        %v2321 = vadd.f32 %v2271, 1.0
        %v2322 = vadd.f32 %v2273, 1.0
        %v2323 = vadd.f32 %v2275, 1.0
        %v2324 = vadd.f32 %v2277, 1.0
        %v2325 = vadd.f32 %v2279, 1.0
        %v2326 = vadd.f32 %v2281, 1.0
        %v2327 = vadd.f32 %v2283, 1.0
        %v2328 = vadd.f32 %v2285, 1.0
        %v2329 = vadd.f32 %v2287, 1.0
        %v2330 = vadd.f32 %v2289, 1.0
        %v2331 = vadd.f32 %v2291, 1.0
        %v2332 = vadd.f32 %v2293, 1.0
        %v2333 = vadd.f32 %v2295, 1.0
        %v2334 = vadd.f32 %v2297, 1.0
        %v2335 = vadd.f32 %v2299, 1.0
        %v2336 = vadd.f32 %v2301, 1.0
        %v2337 = vadd.f32 %v2303, 1.0
        %v2338 = vadd.f32 %v2305, 1.0
        %v2339 = vadd.f32 %v2307, 1.0
        %v2340 = vrcp.pop %v2308
        %v2341 = vmul.f32 1.0, %v2340
        %v2342 = vrcp.pop %v2309
        %v2343 = vmul.f32 1.0, %v2342
        %v2344 = vrcp.pop %v2310
        %v2345 = vmul.f32 1.0, %v2344
        %v2346 = vrcp.pop %v2311
        %v2347 = vmul.f32 1.0, %v2346
        %v2348 = vrcp.pop %v2312
        %v2349 = vmul.f32 1.0, %v2348
        %v2350 = vrcp.pop %v2313
        %v2351 = vmul.f32 1.0, %v2350
        %v2352 = vrcp.pop %v2314
        %v2353 = vmul.f32 1.0, %v2352
        %v2354 = vrcp.pop %v2315
        %v2355 = vmul.f32 1.0, %v2354
        %v2356 = vrcp.pop %v2316
        %v2357 = vmul.f32 1.0, %v2356
        %v2358 = vrcp.pop %v2317
        %v2359 = vmul.f32 1.0, %v2358
        %v2360 = vrcp.pop %v2318
        %v2361 = vmul.f32 1.0, %v2360
        %v2362 = vrcp.pop %v2319
        %v2363 = vmul.f32 1.0, %v2362
        %v2364 = vrcp.pop %v2320
        %v2365 = vmul.f32 1.0, %v2364
        %v2366 = vrcp.pop %v2321
        %v2367 = vmul.f32 1.0, %v2366
        %v2368 = vrcp.pop %v2322
        %v2369 = vmul.f32 1.0, %v2368
        %v2370 = vrcp.pop %v2323
        %v2371 = vmul.f32 1.0, %v2370
        %v2372 = vrcp.pop %v2324
        %v2373 = vmul.f32 1.0, %v2372
        %v2374 = vrcp.pop %v2325
        %v2375 = vmul.f32 1.0, %v2374
        %v2376 = vrcp.pop %v2326
        %v2377 = vmul.f32 1.0, %v2376
        %v2378 = vrcp.pop %v2327
        %v2379 = vmul.f32 1.0, %v2378
        %v2380 = vrcp.pop %v2328
        %v2381 = vmul.f32 1.0, %v2380
        %v2382 = vrcp.pop %v2329
        %v2383 = vmul.f32 1.0, %v2382
        %v2384 = vrcp.pop %v2330
        %v2385 = vmul.f32 1.0, %v2384
        %v2386 = vrcp.pop %v2331
        %v2387 = vmul.f32 1.0, %v2386
        %v2388 = vrcp.pop %v2332
        %v2389 = vmul.f32 1.0, %v2388
        %v2390 = vrcp.pop %v2333
        %v2391 = vmul.f32 1.0, %v2390
        %v2392 = vrcp.pop %v2334
        %v2393 = vmul.f32 1.0, %v2392
        %v2394 = vrcp.pop %v2335
        %v2395 = vmul.f32 1.0, %v2394
        %v2396 = vrcp.pop %v2336
        %v2397 = vmul.f32 1.0, %v2396
        %v2398 = vrcp.pop %v2337
        %v2399 = vmul.f32 1.0, %v2398
        %v2400 = vrcp.pop %v2338
        %v2401 = vmul.f32 1.0, %v2400
        %v2402 = vrcp.pop %v2339
        %v2403 = vmul.f32 1.0, %v2402
        %v2404 = vtanh.pop %v2054
        %v2405 = vtanh.pop %v2059
        %v2406 = vtanh.pop %v2064
        %v2407 = vtanh.pop %v2069
        %v2408 = vtanh.pop %v2074
        %v2409 = vtanh.pop %v2079
        %v2410 = vtanh.pop %v2084
        %v2411 = vtanh.pop %v2089
        %v2412 = vtanh.pop %v2094
        %v2413 = vtanh.pop %v2099
        %v2414 = vtanh.pop %v2104
        %v2415 = vtanh.pop %v2109
        %v2416 = vtanh.pop %v2114
        %v2417 = vtanh.pop %v2119
        %v2418 = vtanh.pop %v2124
        %v2419 = vtanh.pop %v2129
        %v2420 = vtanh.pop %v2134
        %v2421 = vtanh.pop %v2139
        %v2422 = vtanh.pop %v2144
        %v2423 = vtanh.pop %v2149
        %v2424 = vtanh.pop %v2154
        %v2425 = vtanh.pop %v2159
        %v2426 = vtanh.pop %v2164
        %v2427 = vtanh.pop %v2169
        %v2428 = vtanh.pop %v2174
        %v2429 = vtanh.pop %v2179
        %v2430 = vtanh.pop %v2184
        %v2431 = vtanh.pop %v2189
        %v2432 = vtanh.pop %v2194
        %v2433 = vtanh.pop %v2199
        %v2434 = vtanh.pop %v2204
        %v2435 = vtanh.pop %v2209
        %2436 = vrot.lane.b32.xlu0 %v164, 87
        %v2437 = vpop.permute.xlu0 %2436
        %2438 = vrot.lane.b32.xlu0 %v165, 87
        %v2439 = vpop.permute.xlu0 %2438
        %2440 = vrot.lane.b32.xlu0 %v166, 87
        %v2441 = vpop.permute.xlu0 %2440
        %2442 = vrot.lane.b32.xlu0 %v167, 87
        %v2443 = vpop.permute.xlu0 %2442
        %2444 = vrot.lane.b32.xlu0 %v168, 87
        %v2445 = vpop.permute.xlu0 %2444
        %2446 = vrot.lane.b32.xlu0 %v169, 87
        %v2447 = vpop.permute.xlu0 %2446
        %2448 = vrot.lane.b32.xlu0 %v170, 87
        %v2449 = vpop.permute.xlu0 %2448
        %2450 = vrot.lane.b32.xlu0 %v171, 87
        %v2451 = vpop.permute.xlu0 %2450
        %2452 = vrot.lane.b32.xlu0 %v172, 87
        %v2453 = vpop.permute.xlu0 %2452
        %2454 = vrot.lane.b32.xlu0 %v173, 87
        %v2455 = vpop.permute.xlu0 %2454
        %2456 = vrot.lane.b32.xlu0 %v174, 87
        %v2457 = vpop.permute.xlu0 %2456
        %2458 = vrot.lane.b32.xlu0 %v175, 87
        %v2459 = vpop.permute.xlu0 %2458
        %2460 = vrot.lane.b32.xlu0 %v176, 87
        %v2461 = vpop.permute.xlu0 %2460
        %2462 = vrot.lane.b32.xlu0 %v177, 87
        %v2463 = vpop.permute.xlu0 %2462
        %2464 = vrot.lane.b32.xlu0 %v178, 87
        %v2465 = vpop.permute.xlu0 %2464
        %2466 = vrot.lane.b32.xlu0 %v179, 87
        %v2467 = vpop.permute.xlu0 %2466
        %2468 = vrot.lane.b32.xlu0 %v180, 87
        %v2469 = vpop.permute.xlu0 %2468
        %2470 = vrot.lane.b32.xlu0 %v181, 87
        %v2471 = vpop.permute.xlu0 %2470
        %2472 = vrot.lane.b32.xlu0 %v182, 87
        %v2473 = vpop.permute.xlu0 %2472
        %2474 = vrot.lane.b32.xlu0 %v183, 87
        %v2475 = vpop.permute.xlu0 %2474
        %2476 = vrot.lane.b32.xlu0 %v184, 87
        %v2477 = vpop.permute.xlu0 %2476
        %2478 = vrot.lane.b32.xlu0 %v185, 87
        %v2479 = vpop.permute.xlu0 %2478
        %2480 = vrot.lane.b32.xlu0 %v186, 87
        %v2481 = vpop.permute.xlu0 %2480
        %2482 = vrot.lane.b32.xlu0 %v187, 87
        %v2483 = vpop.permute.xlu0 %2482
        %2484 = vrot.lane.b32.xlu0 %v188, 87
        %v2485 = vpop.permute.xlu0 %2484
        %2486 = vrot.lane.b32.xlu0 %v189, 87
        %v2487 = vpop.permute.xlu0 %2486
        %2488 = vrot.lane.b32.xlu0 %v190, 87
        %v2489 = vpop.permute.xlu0 %2488
        %2490 = vrot.lane.b32.xlu0 %v191, 87
        %v2491 = vpop.permute.xlu0 %2490
        %2492 = vrot.lane.b32.xlu0 %v192, 87
        %v2493 = vpop.permute.xlu0 %2492
        %2494 = vrot.lane.b32.xlu0 %v193, 87
        %v2495 = vpop.permute.xlu0 %2494
        %2496 = vrot.lane.b32.xlu0 %v194, 87
        %v2497 = vpop.permute.xlu0 %2496
        %2498 = vrot.lane.b32.xlu0 %v195, 87
        %v2499 = vpop.permute.xlu0 %2498
        %v2532 = vmul.f32 %v2341, %v2437
        %v2533 = vmul.f32 %v2343, %v2439
        %v2534 = vmul.f32 %v2345, %v2441
        %v2535 = vmul.f32 %v2347, %v2443
        %v2536 = vmul.f32 %v2349, %v2445
        %v2537 = vmul.f32 %v2351, %v2447
        %v2538 = vmul.f32 %v2353, %v2449
        %v2539 = vmul.f32 %v2355, %v2451
        %v2540 = vmul.f32 %v2357, %v2453
        %v2541 = vmul.f32 %v2359, %v2455
        %v2542 = vmul.f32 %v2361, %v2457
        %v2543 = vmul.f32 %v2363, %v2459
        %v2544 = vmul.f32 %v2365, %v2461
        %v2545 = vmul.f32 %v2367, %v2463
        %v2546 = vmul.f32 %v2369, %v2465
        %v2547 = vmul.f32 %v2371, %v2467
        %v2548 = vmul.f32 %v2373, %v2469
        %v2549 = vmul.f32 %v2375, %v2471
        %v2550 = vmul.f32 %v2377, %v2473
        %v2551 = vmul.f32 %v2379, %v2475
        %v2552 = vmul.f32 %v2381, %v2477
        %v2553 = vmul.f32 %v2383, %v2479
        %v2554 = vmul.f32 %v2385, %v2481
        %v2555 = vmul.f32 %v2387, %v2483
        %v2556 = vmul.f32 %v2389, %v2485
        %v2557 = vmul.f32 %v2391, %v2487
        %v2558 = vmul.f32 %v2393, %v2489
        %v2559 = vmul.f32 %v2395, %v2491
        %v2560 = vmul.f32 %v2397, %v2493
        %v2561 = vmul.f32 %v2399, %v2495
        %v2562 = vmul.f32 %v2401, %v2497
        %v2563 = vmul.f32 %v2403, %v2499
        %2596 = vrot.lane.b32.xlu0 %v2404, 68
        %v2597 = vpop.permute.xlu0 %2596
        %2598 = vrot.lane.b32.xlu0 %v2405, 68
        %v2599 = vpop.permute.xlu0 %2598
        %2600 = vrot.lane.b32.xlu0 %v2406, 68
        %v2601 = vpop.permute.xlu0 %2600
        %2602 = vrot.lane.b32.xlu0 %v2407, 68
        %v2603 = vpop.permute.xlu0 %2602
        %2604 = vrot.lane.b32.xlu0 %v2408, 68
        %v2605 = vpop.permute.xlu0 %2604
        %2606 = vrot.lane.b32.xlu0 %v2409, 68
        %v2607 = vpop.permute.xlu0 %2606
        %2608 = vrot.lane.b32.xlu0 %v2410, 68
        %v2609 = vpop.permute.xlu0 %2608
        %2610 = vrot.lane.b32.xlu0 %v2411, 68
        %v2611 = vpop.permute.xlu0 %2610
        %2612 = vrot.lane.b32.xlu0 %v2412, 68
        %v2613 = vpop.permute.xlu0 %2612
        %2614 = vrot.lane.b32.xlu0 %v2413, 68
        %v2615 = vpop.permute.xlu0 %2614
        %2616 = vrot.lane.b32.xlu0 %v2414, 68
        %v2617 = vpop.permute.xlu0 %2616
        %2618 = vrot.lane.b32.xlu0 %v2415, 68
        %v2619 = vpop.permute.xlu0 %2618
        %2620 = vrot.lane.b32.xlu0 %v2416, 68
        %v2621 = vpop.permute.xlu0 %2620
        %2622 = vrot.lane.b32.xlu0 %v2417, 68
        %v2623 = vpop.permute.xlu0 %2622
        %2624 = vrot.lane.b32.xlu0 %v2418, 68
        %v2625 = vpop.permute.xlu0 %2624
        %2626 = vrot.lane.b32.xlu0 %v2419, 68
        %v2627 = vpop.permute.xlu0 %2626
        %2628 = vrot.lane.b32.xlu0 %v2420, 68
        %v2629 = vpop.permute.xlu0 %2628
        %2630 = vrot.lane.b32.xlu0 %v2421, 68
        %v2631 = vpop.permute.xlu0 %2630
        %2632 = vrot.lane.b32.xlu0 %v2422, 68
        %v2633 = vpop.permute.xlu0 %2632
        %2634 = vrot.lane.b32.xlu0 %v2423, 68
        %v2635 = vpop.permute.xlu0 %2634
        %2636 = vrot.lane.b32.xlu0 %v2424, 68
        %v2637 = vpop.permute.xlu0 %2636
        %2638 = vrot.lane.b32.xlu0 %v2425, 68
        %v2639 = vpop.permute.xlu0 %2638
        %2640 = vrot.lane.b32.xlu0 %v2426, 68
        %v2641 = vpop.permute.xlu0 %2640
        %2642 = vrot.lane.b32.xlu0 %v2427, 68
        %v2643 = vpop.permute.xlu0 %2642
        %2644 = vrot.lane.b32.xlu0 %v2428, 68
        %v2645 = vpop.permute.xlu0 %2644
        %2646 = vrot.lane.b32.xlu0 %v2429, 68
        %v2647 = vpop.permute.xlu0 %2646
        %2648 = vrot.lane.b32.xlu0 %v2430, 68
        %v2649 = vpop.permute.xlu0 %2648
        %2650 = vrot.lane.b32.xlu0 %v2431, 68
        %v2651 = vpop.permute.xlu0 %2650
        %2652 = vrot.lane.b32.xlu0 %v2432, 68
        %v2653 = vpop.permute.xlu0 %2652
        %2654 = vrot.lane.b32.xlu0 %v2433, 68
        %v2655 = vpop.permute.xlu0 %2654
        %2656 = vrot.lane.b32.xlu0 %v2434, 68
        %v2657 = vpop.permute.xlu0 %2656
        %2658 = vrot.lane.b32.xlu0 %v2435, 68
        %v2659 = vpop.permute.xlu0 %2658
        %v2692 = vmul.f32 %v2341, %v2597
        %v2693 = vmul.f32 %v2343, %v2599
        %v2694 = vmul.f32 %v2345, %v2601
        %v2695 = vmul.f32 %v2347, %v2603
        %v2696 = vmul.f32 %v2349, %v2605
        %v2697 = vmul.f32 %v2351, %v2607
        %v2698 = vmul.f32 %v2353, %v2609
        %v2699 = vmul.f32 %v2355, %v2611
        %v2700 = vmul.f32 %v2357, %v2613
        %v2701 = vmul.f32 %v2359, %v2615
        %v2702 = vmul.f32 %v2361, %v2617
        %v2703 = vmul.f32 %v2363, %v2619
        %v2704 = vmul.f32 %v2365, %v2621
        %v2705 = vmul.f32 %v2367, %v2623
        %v2706 = vmul.f32 %v2369, %v2625
        %v2707 = vmul.f32 %v2371, %v2627
        %v2708 = vmul.f32 %v2373, %v2629
        %v2709 = vmul.f32 %v2375, %v2631
        %v2710 = vmul.f32 %v2377, %v2633
        %v2711 = vmul.f32 %v2379, %v2635
        %v2712 = vmul.f32 %v2381, %v2637
        %v2713 = vmul.f32 %v2383, %v2639
        %v2714 = vmul.f32 %v2385, %v2641
        %v2715 = vmul.f32 %v2387, %v2643
        %v2716 = vmul.f32 %v2389, %v2645
        %v2717 = vmul.f32 %v2391, %v2647
        %v2718 = vmul.f32 %v2393, %v2649
        %v2719 = vmul.f32 %v2395, %v2651
        %v2720 = vmul.f32 %v2397, %v2653
        %v2721 = vmul.f32 %v2399, %v2655
        %v2722 = vmul.f32 %v2401, %v2657
        %v2723 = vmul.f32 %v2403, %v2659
        %2756 = vrot.lane.b32.xlu0 %v2692, 20
        %v2757 = vpop.permute.xlu0 %2756
        %2758 = vrot.lane.b32.xlu0 %v2693, 20
        %v2759 = vpop.permute.xlu0 %2758
        %2760 = vrot.lane.b32.xlu0 %v2694, 20
        %v2761 = vpop.permute.xlu0 %2760
        %2762 = vrot.lane.b32.xlu0 %v2695, 20
        %v2763 = vpop.permute.xlu0 %2762
        %2764 = vrot.lane.b32.xlu0 %v2696, 20
        %v2765 = vpop.permute.xlu0 %2764
        %2766 = vrot.lane.b32.xlu0 %v2697, 20
        %v2767 = vpop.permute.xlu0 %2766
        %2768 = vrot.lane.b32.xlu0 %v2698, 20
        %v2769 = vpop.permute.xlu0 %2768
        %2770 = vrot.lane.b32.xlu0 %v2699, 20
        %v2771 = vpop.permute.xlu0 %2770
        %2772 = vrot.lane.b32.xlu0 %v2700, 20
        %v2773 = vpop.permute.xlu0 %2772
        %2774 = vrot.lane.b32.xlu0 %v2701, 20
        %v2775 = vpop.permute.xlu0 %2774
        %2776 = vrot.lane.b32.xlu0 %v2702, 20
        %v2777 = vpop.permute.xlu0 %2776
        %2778 = vrot.lane.b32.xlu0 %v2703, 20
        %v2779 = vpop.permute.xlu0 %2778
        %2780 = vrot.lane.b32.xlu0 %v2704, 20
        %v2781 = vpop.permute.xlu0 %2780
        %2782 = vrot.lane.b32.xlu0 %v2705, 20
        %v2783 = vpop.permute.xlu0 %2782
        %2784 = vrot.lane.b32.xlu0 %v2706, 20
        %v2785 = vpop.permute.xlu0 %2784
        %2786 = vrot.lane.b32.xlu0 %v2707, 20
        %v2787 = vpop.permute.xlu0 %2786
        %2788 = vrot.lane.b32.xlu0 %v2708, 20
        %v2789 = vpop.permute.xlu0 %2788
        %2790 = vrot.lane.b32.xlu0 %v2709, 20
        %v2791 = vpop.permute.xlu0 %2790
        %2792 = vrot.lane.b32.xlu0 %v2710, 20
        %v2793 = vpop.permute.xlu0 %2792
        %2794 = vrot.lane.b32.xlu0 %v2711, 20
        %v2795 = vpop.permute.xlu0 %2794
        %2796 = vrot.lane.b32.xlu0 %v2712, 20
        %v2797 = vpop.permute.xlu0 %2796
        %2798 = vrot.lane.b32.xlu0 %v2713, 20
        %v2799 = vpop.permute.xlu0 %2798
        %2800 = vrot.lane.b32.xlu0 %v2714, 20
        %v2801 = vpop.permute.xlu0 %2800
        %2802 = vrot.lane.b32.xlu0 %v2715, 20
        %v2803 = vpop.permute.xlu0 %2802
        %2804 = vrot.lane.b32.xlu0 %v2716, 20
        %v2805 = vpop.permute.xlu0 %2804
        %2806 = vrot.lane.b32.xlu0 %v2717, 20
        %v2807 = vpop.permute.xlu0 %2806
        %2808 = vrot.lane.b32.xlu0 %v2718, 20
        %v2809 = vpop.permute.xlu0 %2808
        %2810 = vrot.lane.b32.xlu0 %v2719, 20
        %v2811 = vpop.permute.xlu0 %2810
        %2812 = vrot.lane.b32.xlu0 %v2720, 20
        %v2813 = vpop.permute.xlu0 %2812
        %2814 = vrot.lane.b32.xlu0 %v2721, 20
        %v2815 = vpop.permute.xlu0 %2814
        %2816 = vrot.lane.b32.xlu0 %v2722, 20
        %v2817 = vpop.permute.xlu0 %2816
        %2818 = vrot.lane.b32.xlu0 %v2723, 20
        %v2819 = vpop.permute.xlu0 %2818
        %v2852 = vadd.f32 %v2532, %v2757
        %v2853 = vadd.f32 %v2533, %v2759
        %v2854 = vadd.f32 %v2534, %v2761
        %v2855 = vadd.f32 %v2535, %v2763
        %v2856 = vadd.f32 %v2536, %v2765
        %v2857 = vadd.f32 %v2537, %v2767
        %v2858 = vadd.f32 %v2538, %v2769
        %v2859 = vadd.f32 %v2539, %v2771
        %v2860 = vadd.f32 %v2540, %v2773
        %v2861 = vadd.f32 %v2541, %v2775
        %v2862 = vadd.f32 %v2542, %v2777
        %v2863 = vadd.f32 %v2543, %v2779
        %v2864 = vadd.f32 %v2544, %v2781
        %v2865 = vadd.f32 %v2545, %v2783
        %v2866 = vadd.f32 %v2546, %v2785
        %v2867 = vadd.f32 %v2547, %v2787
        %v2868 = vadd.f32 %v2548, %v2789
        %v2869 = vadd.f32 %v2549, %v2791
        %v2870 = vadd.f32 %v2550, %v2793
        %v2871 = vadd.f32 %v2551, %v2795
        %v2872 = vadd.f32 %v2552, %v2797
        %v2873 = vadd.f32 %v2553, %v2799
        %v2874 = vadd.f32 %v2554, %v2801
        %v2875 = vadd.f32 %v2555, %v2803
        %v2876 = vadd.f32 %v2556, %v2805
        %v2877 = vadd.f32 %v2557, %v2807
        %v2878 = vadd.f32 %v2558, %v2809
        %v2879 = vadd.f32 %v2559, %v2811
        %v2880 = vadd.f32 %v2560, %v2813
        %v2881 = vadd.f32 %v2561, %v2815
        %v2882 = vadd.f32 %v2562, %v2817
        %v2883 = vadd.f32 %v2563, %v2819
        %v2884 = vtanh.pop %v2852
        %v2885 = vtanh.pop %v2853
        %v2886 = vtanh.pop %v2854
        %v2887 = vtanh.pop %v2855
        %v2888 = vtanh.pop %v2856
        %v2889 = vtanh.pop %v2857
        %v2890 = vtanh.pop %v2858
        %v2891 = vtanh.pop %v2859
        %v2892 = vtanh.pop %v2860
        %v2893 = vtanh.pop %v2861
        %v2894 = vtanh.pop %v2862
        %v2895 = vtanh.pop %v2863
        %v2896 = vtanh.pop %v2864
        %v2897 = vtanh.pop %v2865
        %v2898 = vtanh.pop %v2866
        %v2899 = vtanh.pop %v2867
        %v2900 = vtanh.pop %v2868
        %v2901 = vtanh.pop %v2869
        %v2902 = vtanh.pop %v2870
        %v2903 = vtanh.pop %v2871
        %v2904 = vtanh.pop %v2872
        %v2905 = vtanh.pop %v2873
        %v2906 = vtanh.pop %v2874
        %v2907 = vtanh.pop %v2875
        %v2908 = vtanh.pop %v2876
        %v2909 = vtanh.pop %v2877
        %v2910 = vtanh.pop %v2878
        %v2911 = vtanh.pop %v2879
        %v2912 = vtanh.pop %v2880
        %v2913 = vtanh.pop %v2881
        %v2914 = vtanh.pop %v2882
        %v2915 = vtanh.pop %v2883
        %2948 = vrot.lane.b32.xlu0 %v2884, 20
        %v2949 = vpop.permute.xlu0 %2948
        %2950 = vrot.lane.b32.xlu0 %v2885, 20
        %v2951 = vpop.permute.xlu0 %2950
        %2952 = vrot.lane.b32.xlu0 %v2886, 20
        %v2953 = vpop.permute.xlu0 %2952
        %2954 = vrot.lane.b32.xlu0 %v2887, 20
        %v2955 = vpop.permute.xlu0 %2954
        %2956 = vrot.lane.b32.xlu0 %v2888, 20
        %v2957 = vpop.permute.xlu0 %2956
        %2958 = vrot.lane.b32.xlu0 %v2889, 20
        %v2959 = vpop.permute.xlu0 %2958
        %2960 = vrot.lane.b32.xlu0 %v2890, 20
        %v2961 = vpop.permute.xlu0 %2960
        %2962 = vrot.lane.b32.xlu0 %v2891, 20
        %v2963 = vpop.permute.xlu0 %2962
        %2964 = vrot.lane.b32.xlu0 %v2892, 20
        %v2965 = vpop.permute.xlu0 %2964
        %2966 = vrot.lane.b32.xlu0 %v2893, 20
        %v2967 = vpop.permute.xlu0 %2966
        %2968 = vrot.lane.b32.xlu0 %v2894, 20
        %v2969 = vpop.permute.xlu0 %2968
        %2970 = vrot.lane.b32.xlu0 %v2895, 20
        %v2971 = vpop.permute.xlu0 %2970
        %2972 = vrot.lane.b32.xlu0 %v2896, 20
        %v2973 = vpop.permute.xlu0 %2972
        %2974 = vrot.lane.b32.xlu0 %v2897, 20
        %v2975 = vpop.permute.xlu0 %2974
        %2976 = vrot.lane.b32.xlu0 %v2898, 20
        %v2977 = vpop.permute.xlu0 %2976
        %2978 = vrot.lane.b32.xlu0 %v2899, 20
        %v2979 = vpop.permute.xlu0 %2978
        %2980 = vrot.lane.b32.xlu0 %v2900, 20
        %v2981 = vpop.permute.xlu0 %2980
        %2982 = vrot.lane.b32.xlu0 %v2901, 20
        %v2983 = vpop.permute.xlu0 %2982
        %2984 = vrot.lane.b32.xlu0 %v2902, 20
        %v2985 = vpop.permute.xlu0 %2984
        %2986 = vrot.lane.b32.xlu0 %v2903, 20
        %v2987 = vpop.permute.xlu0 %2986
        %2988 = vrot.lane.b32.xlu0 %v2904, 20
        %v2989 = vpop.permute.xlu0 %2988
        %2990 = vrot.lane.b32.xlu0 %v2905, 20
        %v2991 = vpop.permute.xlu0 %2990
        %2992 = vrot.lane.b32.xlu0 %v2906, 20
        %v2993 = vpop.permute.xlu0 %2992
        %2994 = vrot.lane.b32.xlu0 %v2907, 20
        %v2995 = vpop.permute.xlu0 %2994
        %2996 = vrot.lane.b32.xlu0 %v2908, 20
        %v2997 = vpop.permute.xlu0 %2996
        %2998 = vrot.lane.b32.xlu0 %v2909, 20
        %v2999 = vpop.permute.xlu0 %2998
        %3000 = vrot.lane.b32.xlu0 %v2910, 20
        %v3001 = vpop.permute.xlu0 %3000
        %3002 = vrot.lane.b32.xlu0 %v2911, 20
        %v3003 = vpop.permute.xlu0 %3002
        %3004 = vrot.lane.b32.xlu0 %v2912, 20
        %v3005 = vpop.permute.xlu0 %3004
        %3006 = vrot.lane.b32.xlu0 %v2913, 20
        %v3007 = vpop.permute.xlu0 %3006
        %3008 = vrot.lane.b32.xlu0 %v2914, 20
        %v3009 = vpop.permute.xlu0 %3008
        %3010 = vrot.lane.b32.xlu0 %v2915, 20
        %v3011 = vpop.permute.xlu0 %3010
        %v3044 = vmul.f32 %v2341, %v2949
        %v3045 = vmul.f32 %v2343, %v2951
        %v3046 = vmul.f32 %v2345, %v2953
        %v3047 = vmul.f32 %v2347, %v2955
        %v3048 = vmul.f32 %v2349, %v2957
        %v3049 = vmul.f32 %v2351, %v2959
        %v3050 = vmul.f32 %v2353, %v2961
        %v3051 = vmul.f32 %v2355, %v2963
        %v3052 = vmul.f32 %v2357, %v2965
        %v3053 = vmul.f32 %v2359, %v2967
        %v3054 = vmul.f32 %v2361, %v2969
        %v3055 = vmul.f32 %v2363, %v2971
        %v3056 = vmul.f32 %v2365, %v2973
        %v3057 = vmul.f32 %v2367, %v2975
        %v3058 = vmul.f32 %v2369, %v2977
        %v3059 = vmul.f32 %v2371, %v2979
        %v3060 = vmul.f32 %v2373, %v2981
        %v3061 = vmul.f32 %v2375, %v2983
        %v3062 = vmul.f32 %v2377, %v2985
        %v3063 = vmul.f32 %v2379, %v2987
        %v3064 = vmul.f32 %v2381, %v2989
        %v3065 = vmul.f32 %v2383, %v2991
        %v3066 = vmul.f32 %v2385, %v2993
        %v3067 = vmul.f32 %v2387, %v2995
        %v3068 = vmul.f32 %v2389, %v2997
        %v3069 = vmul.f32 %v2391, %v2999
        %v3070 = vmul.f32 %v2393, %v3001
        %v3071 = vmul.f32 %v2395, %v3003
        %v3072 = vmul.f32 %v2397, %v3005
        %v3073 = vmul.f32 %v2399, %v3007
        %v3074 = vmul.f32 %v2401, %v3009
        %v3075 = vmul.f32 %v2403, %v3011
        %v3076 = vlaneseq
        %v3077 = vshrl.u32 %v3076, 7
        %v3078 = vsub.s32 0, %v3077
        %v3079 = vrot.slane %v198, %v3078
        %3081 = vrot.lane.b32.xlu0 %v3079, 40
        %v3082 = vpop.permute.xlu0 %3081
        %v3084 = vmul.f32 %v3044, %v3082
        %v3085 = vmul.f32 %v3045, %v3082
        %v3086 = vmul.f32 %v3046, %v3082
        %v3087 = vmul.f32 %v3047, %v3082
        %v3088 = vmul.f32 %v3048, %v3082
        %v3089 = vmul.f32 %v3049, %v3082
        %v3090 = vmul.f32 %v3050, %v3082
        %v3091 = vmul.f32 %v3051, %v3082
        %v3092 = vmul.f32 %v3052, %v3082
        %v3093 = vmul.f32 %v3053, %v3082
        %v3094 = vmul.f32 %v3054, %v3082
        %v3095 = vmul.f32 %v3055, %v3082
        %v3096 = vmul.f32 %v3056, %v3082
        %v3097 = vmul.f32 %v3057, %v3082
        %v3098 = vmul.f32 %v3058, %v3082
        %v3099 = vmul.f32 %v3059, %v3082
        %v3100 = vmul.f32 %v3060, %v3082
        %v3101 = vmul.f32 %v3061, %v3082
        %v3102 = vmul.f32 %v3062, %v3082
        %v3103 = vmul.f32 %v3063, %v3082
        %v3104 = vmul.f32 %v3064, %v3082
        %v3105 = vmul.f32 %v3065, %v3082
        %v3106 = vmul.f32 %v3066, %v3082
        %v3107 = vmul.f32 %v3067, %v3082
        %v3108 = vmul.f32 %v3068, %v3082
        %v3109 = vmul.f32 %v3069, %v3082
        %v3110 = vmul.f32 %v3070, %v3082
        %v3111 = vmul.f32 %v3071, %v3082
        %v3112 = vmul.f32 %v3072, %v3082
        %v3113 = vmul.f32 %v3073, %v3082
        %v3114 = vmul.f32 %v3074, %v3082
        %v3115 = vmul.f32 %v3075, %v3082
        %3148 = vrot.lane.b32.xlu0 %v3084, 88
        %v3149 = vpop.permute.xlu0 %3148
        %3150 = vrot.lane.b32.xlu0 %v3085, 88
        %v3151 = vpop.permute.xlu0 %3150
        %3152 = vrot.lane.b32.xlu0 %v3086, 88
        %v3153 = vpop.permute.xlu0 %3152
        %3154 = vrot.lane.b32.xlu0 %v3087, 88
        %v3155 = vpop.permute.xlu0 %3154
        %3156 = vrot.lane.b32.xlu0 %v3088, 88
        %v3157 = vpop.permute.xlu0 %3156
        %3158 = vrot.lane.b32.xlu0 %v3089, 88
        %v3159 = vpop.permute.xlu0 %3158
        %3160 = vrot.lane.b32.xlu0 %v3090, 88
        %v3161 = vpop.permute.xlu0 %3160
        %3162 = vrot.lane.b32.xlu0 %v3091, 88
        %v3163 = vpop.permute.xlu0 %3162
        %3164 = vrot.lane.b32.xlu0 %v3092, 88
        %v3165 = vpop.permute.xlu0 %3164
        %3166 = vrot.lane.b32.xlu0 %v3093, 88
        %v3167 = vpop.permute.xlu0 %3166
        %3168 = vrot.lane.b32.xlu0 %v3094, 88
        %v3169 = vpop.permute.xlu0 %3168
        %3170 = vrot.lane.b32.xlu0 %v3095, 88
        %v3171 = vpop.permute.xlu0 %3170
        %3172 = vrot.lane.b32.xlu0 %v3096, 88
        %v3173 = vpop.permute.xlu0 %3172
        %3174 = vrot.lane.b32.xlu0 %v3097, 88
        %v3175 = vpop.permute.xlu0 %3174
        %3176 = vrot.lane.b32.xlu0 %v3098, 88
        %v3177 = vpop.permute.xlu0 %3176
        %3178 = vrot.lane.b32.xlu0 %v3099, 88
        %v3179 = vpop.permute.xlu0 %3178
        %3180 = vrot.lane.b32.xlu0 %v3100, 88
        %v3181 = vpop.permute.xlu0 %3180
        %3182 = vrot.lane.b32.xlu0 %v3101, 88
        %v3183 = vpop.permute.xlu0 %3182
        %3184 = vrot.lane.b32.xlu0 %v3102, 88
        %v3185 = vpop.permute.xlu0 %3184
        %3186 = vrot.lane.b32.xlu0 %v3103, 88
        %v3187 = vpop.permute.xlu0 %3186
        %3188 = vrot.lane.b32.xlu0 %v3104, 88
        %v3189 = vpop.permute.xlu0 %3188
        %3190 = vrot.lane.b32.xlu0 %v3105, 88
        %v3191 = vpop.permute.xlu0 %3190
        %3192 = vrot.lane.b32.xlu0 %v3106, 88
        %v3193 = vpop.permute.xlu0 %3192
        %3194 = vrot.lane.b32.xlu0 %v3107, 88
        %v3195 = vpop.permute.xlu0 %3194
        %3196 = vrot.lane.b32.xlu0 %v3108, 88
        %v3197 = vpop.permute.xlu0 %3196
        %3198 = vrot.lane.b32.xlu0 %v3109, 88
        %v3199 = vpop.permute.xlu0 %3198
        %3200 = vrot.lane.b32.xlu0 %v3110, 88
        %v3201 = vpop.permute.xlu0 %3200
        %3202 = vrot.lane.b32.xlu0 %v3111, 88
        %v3203 = vpop.permute.xlu0 %3202
        %3204 = vrot.lane.b32.xlu0 %v3112, 88
        %v3205 = vpop.permute.xlu0 %3204
        %3206 = vrot.lane.b32.xlu0 %v3113, 88
        %v3207 = vpop.permute.xlu0 %3206
        %3208 = vrot.lane.b32.xlu0 %v3114, 88
        %v3209 = vpop.permute.xlu0 %3208
        %3210 = vrot.lane.b32.xlu0 %v3115, 88
        %v3211 = vpop.permute.xlu0 %3210
        %v3244 = vsel %vm463, %v3149, 0.0
        %3245 = vadd.xlane.f32.xlu0 %v3244
        %v3246 = vpop.xlane.xlu0 %3245
        %v3247 = vsel %vm463, %v3151, 0.0
        %3248 = vadd.xlane.f32.xlu0 %v3247
        %v3249 = vpop.xlane.xlu0 %3248
        %v3250 = vsel %vm463, %v3153, 0.0
        %3251 = vadd.xlane.f32.xlu0 %v3250
        %v3252 = vpop.xlane.xlu0 %3251
        %v3253 = vsel %vm463, %v3155, 0.0
        %3254 = vadd.xlane.f32.xlu0 %v3253
        %v3255 = vpop.xlane.xlu0 %3254
        %v3256 = vsel %vm463, %v3157, 0.0
        %3257 = vadd.xlane.f32.xlu0 %v3256
        %v3258 = vpop.xlane.xlu0 %3257
        %v3259 = vsel %vm463, %v3159, 0.0
        %3260 = vadd.xlane.f32.xlu0 %v3259
        %v3261 = vpop.xlane.xlu0 %3260
        %v3262 = vsel %vm463, %v3161, 0.0
        %3263 = vadd.xlane.f32.xlu0 %v3262
        %v3264 = vpop.xlane.xlu0 %3263
        %v3265 = vsel %vm463, %v3163, 0.0
        %3266 = vadd.xlane.f32.xlu0 %v3265
        %v3267 = vpop.xlane.xlu0 %3266
        %v3268 = vsel %vm463, %v3165, 0.0
        %3269 = vadd.xlane.f32.xlu0 %v3268
        %v3270 = vpop.xlane.xlu0 %3269
        %v3271 = vsel %vm463, %v3167, 0.0
        %3272 = vadd.xlane.f32.xlu0 %v3271
        %v3273 = vpop.xlane.xlu0 %3272
        %v3274 = vsel %vm463, %v3169, 0.0
        %3275 = vadd.xlane.f32.xlu0 %v3274
        %v3276 = vpop.xlane.xlu0 %3275
        %v3277 = vsel %vm463, %v3171, 0.0
        %3278 = vadd.xlane.f32.xlu0 %v3277
        %v3279 = vpop.xlane.xlu0 %3278
        %v3280 = vsel %vm463, %v3173, 0.0
        %3281 = vadd.xlane.f32.xlu0 %v3280
        %v3282 = vpop.xlane.xlu0 %3281
        %v3283 = vsel %vm463, %v3175, 0.0
        %3284 = vadd.xlane.f32.xlu0 %v3283
        %v3285 = vpop.xlane.xlu0 %3284
        %v3286 = vsel %vm463, %v3177, 0.0
        %3287 = vadd.xlane.f32.xlu0 %v3286
        %v3288 = vpop.xlane.xlu0 %3287
        %v3289 = vsel %vm463, %v3179, 0.0
        %3290 = vadd.xlane.f32.xlu0 %v3289
        %v3291 = vpop.xlane.xlu0 %3290
        %v3292 = vsel %vm463, %v3181, 0.0
        %3293 = vadd.xlane.f32.xlu0 %v3292
        %v3294 = vpop.xlane.xlu0 %3293
        %v3295 = vsel %vm463, %v3183, 0.0
        %3296 = vadd.xlane.f32.xlu0 %v3295
        %v3297 = vpop.xlane.xlu0 %3296
        %v3298 = vsel %vm463, %v3185, 0.0
        %3299 = vadd.xlane.f32.xlu0 %v3298
        %v3300 = vpop.xlane.xlu0 %3299
        %v3301 = vsel %vm463, %v3187, 0.0
        %3302 = vadd.xlane.f32.xlu0 %v3301
        %v3303 = vpop.xlane.xlu0 %3302
        %v3304 = vsel %vm463, %v3189, 0.0
        %3305 = vadd.xlane.f32.xlu0 %v3304
        %v3306 = vpop.xlane.xlu0 %3305
        %v3307 = vsel %vm463, %v3191, 0.0
        %3308 = vadd.xlane.f32.xlu0 %v3307
        %v3309 = vpop.xlane.xlu0 %3308
        %v3310 = vsel %vm463, %v3193, 0.0
        %3311 = vadd.xlane.f32.xlu0 %v3310
        %v3312 = vpop.xlane.xlu0 %3311
        %v3313 = vsel %vm463, %v3195, 0.0
        %3314 = vadd.xlane.f32.xlu0 %v3313
        %v3315 = vpop.xlane.xlu0 %3314
        %v3316 = vsel %vm463, %v3197, 0.0
        %3317 = vadd.xlane.f32.xlu0 %v3316
        %v3318 = vpop.xlane.xlu0 %3317
        %v3319 = vsel %vm463, %v3199, 0.0
        %3320 = vadd.xlane.f32.xlu0 %v3319
        %v3321 = vpop.xlane.xlu0 %3320
        %v3322 = vsel %vm463, %v3201, 0.0
        %3323 = vadd.xlane.f32.xlu0 %v3322
        %v3324 = vpop.xlane.xlu0 %3323
        %v3325 = vsel %vm463, %v3203, 0.0
        %3326 = vadd.xlane.f32.xlu0 %v3325
        %v3327 = vpop.xlane.xlu0 %3326
        %v3328 = vsel %vm463, %v3205, 0.0
        %3329 = vadd.xlane.f32.xlu0 %v3328
        %v3330 = vpop.xlane.xlu0 %3329
        %v3331 = vsel %vm463, %v3207, 0.0
        %3332 = vadd.xlane.f32.xlu0 %v3331
        %v3333 = vpop.xlane.xlu0 %3332
        %v3334 = vsel %vm463, %v3209, 0.0
        %3335 = vadd.xlane.f32.xlu0 %v3334
        %v3336 = vpop.xlane.xlu0 %3335
        %v3337 = vsel %vm463, %v3211, 0.0
        %3338 = vadd.xlane.f32.xlu0 %v3337
        %v3339 = vpop.xlane.xlu0 %3338
        %v3340 = vadd.f32 %v3246, %v3079
        %v3341 = vadd.f32 %v3249, %v3079
        %v3342 = vadd.f32 %v3252, %v3079
        %v3343 = vadd.f32 %v3255, %v3079
        %v3344 = vadd.f32 %v3258, %v3079
        %v3345 = vadd.f32 %v3261, %v3079
        %v3346 = vadd.f32 %v3264, %v3079
        %v3347 = vadd.f32 %v3267, %v3079
        %v3348 = vadd.f32 %v3270, %v3079
        %v3349 = vadd.f32 %v3273, %v3079
        %v3350 = vadd.f32 %v3276, %v3079
        %v3351 = vadd.f32 %v3279, %v3079
        %v3352 = vadd.f32 %v3282, %v3079
        %v3353 = vadd.f32 %v3285, %v3079
        %v3354 = vadd.f32 %v3288, %v3079
        %v3355 = vadd.f32 %v3291, %v3079
        %v3356 = vadd.f32 %v3294, %v3079
        %v3357 = vadd.f32 %v3297, %v3079
        %v3358 = vadd.f32 %v3300, %v3079
        %v3359 = vadd.f32 %v3303, %v3079
        %v3360 = vadd.f32 %v3306, %v3079
        %v3361 = vadd.f32 %v3309, %v3079
        %v3362 = vadd.f32 %v3312, %v3079
        %v3363 = vadd.f32 %v3315, %v3079
        %v3364 = vadd.f32 %v3318, %v3079
        %v3365 = vadd.f32 %v3321, %v3079
        %v3366 = vadd.f32 %v3324, %v3079
        %v3367 = vadd.f32 %v3327, %v3079
        %v3368 = vadd.f32 %v3330, %v3079
        %v3369 = vadd.f32 %v3333, %v3079
        %v3370 = vadd.f32 %v3336, %v3079
        %v3371 = vadd.f32 %v3339, %v3079
        %3404 = vrot.lane.b32.xlu0 %v3340, 108
        %v3405 = vpop.permute.xlu0 %3404
        %3406 = vrot.lane.b32.xlu0 %v3341, 108
        %v3407 = vpop.permute.xlu0 %3406
        %3408 = vrot.lane.b32.xlu0 %v3342, 108
        %v3409 = vpop.permute.xlu0 %3408
        %3410 = vrot.lane.b32.xlu0 %v3343, 108
        %v3411 = vpop.permute.xlu0 %3410
        %3412 = vrot.lane.b32.xlu0 %v3344, 108
        %v3413 = vpop.permute.xlu0 %3412
        %3414 = vrot.lane.b32.xlu0 %v3345, 108
        %v3415 = vpop.permute.xlu0 %3414
        %3416 = vrot.lane.b32.xlu0 %v3346, 108
        %v3417 = vpop.permute.xlu0 %3416
        %3418 = vrot.lane.b32.xlu0 %v3347, 108
        %v3419 = vpop.permute.xlu0 %3418
        %3420 = vrot.lane.b32.xlu0 %v3348, 108
        %v3421 = vpop.permute.xlu0 %3420
        %3422 = vrot.lane.b32.xlu0 %v3349, 108
        %v3423 = vpop.permute.xlu0 %3422
        %3424 = vrot.lane.b32.xlu0 %v3350, 108
        %v3425 = vpop.permute.xlu0 %3424
        %3426 = vrot.lane.b32.xlu0 %v3351, 108
        %v3427 = vpop.permute.xlu0 %3426
        %3428 = vrot.lane.b32.xlu0 %v3352, 108
        %v3429 = vpop.permute.xlu0 %3428
        %3430 = vrot.lane.b32.xlu0 %v3353, 108
        %v3431 = vpop.permute.xlu0 %3430
        %3432 = vrot.lane.b32.xlu0 %v3354, 108
        %v3433 = vpop.permute.xlu0 %3432
        %3434 = vrot.lane.b32.xlu0 %v3355, 108
        %v3435 = vpop.permute.xlu0 %3434
        %3436 = vrot.lane.b32.xlu0 %v3356, 108
        %v3437 = vpop.permute.xlu0 %3436
        %3438 = vrot.lane.b32.xlu0 %v3357, 108
        %v3439 = vpop.permute.xlu0 %3438
        %3440 = vrot.lane.b32.xlu0 %v3358, 108
        %v3441 = vpop.permute.xlu0 %3440
        %3442 = vrot.lane.b32.xlu0 %v3359, 108
        %v3443 = vpop.permute.xlu0 %3442
        %3444 = vrot.lane.b32.xlu0 %v3360, 108
        %v3445 = vpop.permute.xlu0 %3444
        %3446 = vrot.lane.b32.xlu0 %v3361, 108
        %v3447 = vpop.permute.xlu0 %3446
        %3448 = vrot.lane.b32.xlu0 %v3362, 108
        %v3449 = vpop.permute.xlu0 %3448
        %3450 = vrot.lane.b32.xlu0 %v3363, 108
        %v3451 = vpop.permute.xlu0 %3450
        %3452 = vrot.lane.b32.xlu0 %v3364, 108
        %v3453 = vpop.permute.xlu0 %3452
        %3454 = vrot.lane.b32.xlu0 %v3365, 108
        %v3455 = vpop.permute.xlu0 %3454
        %3456 = vrot.lane.b32.xlu0 %v3366, 108
        %v3457 = vpop.permute.xlu0 %3456
        %3458 = vrot.lane.b32.xlu0 %v3367, 108
        %v3459 = vpop.permute.xlu0 %3458
        %3460 = vrot.lane.b32.xlu0 %v3368, 108
        %v3461 = vpop.permute.xlu0 %3460
        %3462 = vrot.lane.b32.xlu0 %v3369, 108
        %v3463 = vpop.permute.xlu0 %3462
        %3464 = vrot.lane.b32.xlu0 %v3370, 108
        %v3465 = vpop.permute.xlu0 %3464
        %3466 = vrot.lane.b32.xlu0 %v3371, 108
        %v3467 = vpop.permute.xlu0 %3466
        %vm3500 = vcmask 7168
        %3501 = vst.msk [vmem:[%s161] sm:$0xff] %vm3500, %v3405
        %3502 = vst.msk [vmem:[%s161 + $0x8] sm:$0xff] %vm3500, %v3407
        %3503 = vst.msk [vmem:[%s161 + $0x10] sm:$0xff] %vm3500, %v3409
        %3504 = vst.msk [vmem:[%s161 + $0x18] sm:$0xff] %vm3500, %v3411
        %3505 = vst.msk [vmem:[%s161 + $0x20] sm:$0xff] %vm3500, %v3413
        %3506 = vst.msk [vmem:[%s161 + $0x28] sm:$0xff] %vm3500, %v3415
        %3507 = vst.msk [vmem:[%s161 + $0x30] sm:$0xff] %vm3500, %v3417
        %3508 = vst.msk [vmem:[%s161 + $0x38] sm:$0xff] %vm3500, %v3419
        %3509 = vst.msk [vmem:[%s161 + $0x40] sm:$0xff] %vm3500, %v3421
        %3510 = vst.msk [vmem:[%s161 + $0x48] sm:$0xff] %vm3500, %v3423
        %3511 = vst.msk [vmem:[%s161 + $0x50] sm:$0xff] %vm3500, %v3425
        %3512 = vst.msk [vmem:[%s161 + $0x58] sm:$0xff] %vm3500, %v3427
        %3513 = vst.msk [vmem:[%s161 + $0x60] sm:$0xff] %vm3500, %v3429
        %3514 = vst.msk [vmem:[%s161 + $0x68] sm:$0xff] %vm3500, %v3431
        %3515 = vst.msk [vmem:[%s161 + $0x70] sm:$0xff] %vm3500, %v3433
        %3516 = vst.msk [vmem:[%s161 + $0x78] sm:$0xff] %vm3500, %v3435
        %3517 = vst.msk [vmem:[%s161 + $0x80] sm:$0xff] %vm3500, %v3437
        %3518 = vst.msk [vmem:[%s161 + $0x88] sm:$0xff] %vm3500, %v3439
        %3519 = vst.msk [vmem:[%s161 + $0x90] sm:$0xff] %vm3500, %v3441
        %3520 = vst.msk [vmem:[%s161 + $0x98] sm:$0xff] %vm3500, %v3443
        %3521 = vst.msk [vmem:[%s161 + $0xa0] sm:$0xff] %vm3500, %v3445
        %3522 = vst.msk [vmem:[%s161 + $0xa8] sm:$0xff] %vm3500, %v3447
        %3523 = vst.msk [vmem:[%s161 + $0xb0] sm:$0xff] %vm3500, %v3449
        %3524 = vst.msk [vmem:[%s161 + $0xb8] sm:$0xff] %vm3500, %v3451
        %3525 = vst.msk [vmem:[%s161 + $0xc0] sm:$0xff] %vm3500, %v3453
        %3526 = vst.msk [vmem:[%s161 + $0xc8] sm:$0xff] %vm3500, %v3455
        %3527 = vst.msk [vmem:[%s161 + $0xd0] sm:$0xff] %vm3500, %v3457
        %3528 = vst.msk [vmem:[%s161 + $0xd8] sm:$0xff] %vm3500, %v3459
        %3529 = vst.msk [vmem:[%s161 + $0xe0] sm:$0xff] %vm3500, %v3461
        %3530 = vst.msk [vmem:[%s161 + $0xe8] sm:$0xff] %vm3500, %v3463
        %3531 = vst.msk [vmem:[%s161 + $0xf0] sm:$0xff] %vm3500, %v3465
        %3532 = vst.msk [vmem:[%s161 + $0xf8] sm:$0xff] %vm3500, %v3467
        %3533 = vrot.lane.b32.xlu0 %v1593, 89
        %v3534 = vpop.permute.xlu0 %3533
        %3535 = vrot.lane.b32.xlu0 %v1594, 89
        %v3536 = vpop.permute.xlu0 %3535
        %3537 = vrot.lane.b32.xlu0 %v1595, 89
        %v3538 = vpop.permute.xlu0 %3537
        %3539 = vrot.lane.b32.xlu0 %v1596, 89
        %v3540 = vpop.permute.xlu0 %3539
        %3541 = vrot.lane.b32.xlu0 %v1597, 89
        %v3542 = vpop.permute.xlu0 %3541
        %3543 = vrot.lane.b32.xlu0 %v1598, 89
        %v3544 = vpop.permute.xlu0 %3543
        %3545 = vrot.lane.b32.xlu0 %v1599, 89
        %v3546 = vpop.permute.xlu0 %3545
        %3547 = vrot.lane.b32.xlu0 %v1600, 89
        %v3548 = vpop.permute.xlu0 %3547
        %3549 = vrot.lane.b32.xlu0 %v1601, 89
        %v3550 = vpop.permute.xlu0 %3549
        %3551 = vrot.lane.b32.xlu0 %v1602, 89
        %v3552 = vpop.permute.xlu0 %3551
        %3553 = vrot.lane.b32.xlu0 %v1603, 89
        %v3554 = vpop.permute.xlu0 %3553
        %3555 = vrot.lane.b32.xlu0 %v1604, 89
        %v3556 = vpop.permute.xlu0 %3555
        %3557 = vrot.lane.b32.xlu0 %v1605, 89
        %v3558 = vpop.permute.xlu0 %3557
        %3559 = vrot.lane.b32.xlu0 %v1606, 89
        %v3560 = vpop.permute.xlu0 %3559
        %3561 = vrot.lane.b32.xlu0 %v1607, 89
        %v3562 = vpop.permute.xlu0 %3561
        %3563 = vrot.lane.b32.xlu0 %v1608, 89
        %v3564 = vpop.permute.xlu0 %3563
        %3565 = vrot.lane.b32.xlu0 %v1609, 89
        %v3566 = vpop.permute.xlu0 %3565
        %3567 = vrot.lane.b32.xlu0 %v1610, 89
        %v3568 = vpop.permute.xlu0 %3567
        %3569 = vrot.lane.b32.xlu0 %v1611, 89
        %v3570 = vpop.permute.xlu0 %3569
        %3571 = vrot.lane.b32.xlu0 %v1612, 89
        %v3572 = vpop.permute.xlu0 %3571
        %3573 = vrot.lane.b32.xlu0 %v1613, 89
        %v3574 = vpop.permute.xlu0 %3573
        %3575 = vrot.lane.b32.xlu0 %v1614, 89
        %v3576 = vpop.permute.xlu0 %3575
        %3577 = vrot.lane.b32.xlu0 %v1615, 89
        %v3578 = vpop.permute.xlu0 %3577
        %3579 = vrot.lane.b32.xlu0 %v1616, 89
        %v3580 = vpop.permute.xlu0 %3579
        %3581 = vrot.lane.b32.xlu0 %v1617, 89
        %v3582 = vpop.permute.xlu0 %3581
        %3583 = vrot.lane.b32.xlu0 %v1618, 89
        %v3584 = vpop.permute.xlu0 %3583
        %3585 = vrot.lane.b32.xlu0 %v1619, 89
        %v3586 = vpop.permute.xlu0 %3585
        %3587 = vrot.lane.b32.xlu0 %v1620, 89
        %v3588 = vpop.permute.xlu0 %3587
        %3589 = vrot.lane.b32.xlu0 %v1621, 89
        %v3590 = vpop.permute.xlu0 %3589
        %3591 = vrot.lane.b32.xlu0 %v1622, 89
        %v3592 = vpop.permute.xlu0 %3591
        %3593 = vrot.lane.b32.xlu0 %v1623, 89
        %v3594 = vpop.permute.xlu0 %3593
        %3595 = vrot.lane.b32.xlu0 %v1624, 89
        %v3596 = vpop.permute.xlu0 %3595
        %vm3629 = vcmask 171016
        %3630 = vst.msk [vmem:[%s161] sm:$0xff] %vm3629, %v3534
        %3631 = vst.msk [vmem:[%s161 + $0x8] sm:$0xff] %vm3629, %v3536
        %3632 = vst.msk [vmem:[%s161 + $0x10] sm:$0xff] %vm3629, %v3538
        %3633 = vst.msk [vmem:[%s161 + $0x18] sm:$0xff] %vm3629, %v3540
        %3634 = vst.msk [vmem:[%s161 + $0x20] sm:$0xff] %vm3629, %v3542
        %3635 = vst.msk [vmem:[%s161 + $0x28] sm:$0xff] %vm3629, %v3544
        %3636 = vst.msk [vmem:[%s161 + $0x30] sm:$0xff] %vm3629, %v3546
        %3637 = vst.msk [vmem:[%s161 + $0x38] sm:$0xff] %vm3629, %v3548
        %3638 = vst.msk [vmem:[%s161 + $0x40] sm:$0xff] %vm3629, %v3550
        %3639 = vst.msk [vmem:[%s161 + $0x48] sm:$0xff] %vm3629, %v3552
        %3640 = vst.msk [vmem:[%s161 + $0x50] sm:$0xff] %vm3629, %v3554
        %3641 = vst.msk [vmem:[%s161 + $0x58] sm:$0xff] %vm3629, %v3556
        %3642 = vst.msk [vmem:[%s161 + $0x60] sm:$0xff] %vm3629, %v3558
        %3643 = vst.msk [vmem:[%s161 + $0x68] sm:$0xff] %vm3629, %v3560
        %3644 = vst.msk [vmem:[%s161 + $0x70] sm:$0xff] %vm3629, %v3562
        %3645 = vst.msk [vmem:[%s161 + $0x78] sm:$0xff] %vm3629, %v3564
        %3646 = vst.msk [vmem:[%s161 + $0x80] sm:$0xff] %vm3629, %v3566
        %3647 = vst.msk [vmem:[%s161 + $0x88] sm:$0xff] %vm3629, %v3568
        %3648 = vst.msk [vmem:[%s161 + $0x90] sm:$0xff] %vm3629, %v3570
        %3649 = vst.msk [vmem:[%s161 + $0x98] sm:$0xff] %vm3629, %v3572
        %3650 = vst.msk [vmem:[%s161 + $0xa0] sm:$0xff] %vm3629, %v3574
        %3651 = vst.msk [vmem:[%s161 + $0xa8] sm:$0xff] %vm3629, %v3576
        %3652 = vst.msk [vmem:[%s161 + $0xb0] sm:$0xff] %vm3629, %v3578
        %3653 = vst.msk [vmem:[%s161 + $0xb8] sm:$0xff] %vm3629, %v3580
        %3654 = vst.msk [vmem:[%s161 + $0xc0] sm:$0xff] %vm3629, %v3582
        %3655 = vst.msk [vmem:[%s161 + $0xc8] sm:$0xff] %vm3629, %v3584
        %3656 = vst.msk [vmem:[%s161 + $0xd0] sm:$0xff] %vm3629, %v3586
        %3657 = vst.msk [vmem:[%s161 + $0xd8] sm:$0xff] %vm3629, %v3588
        %3658 = vst.msk [vmem:[%s161 + $0xe0] sm:$0xff] %vm3629, %v3590
        %3659 = vst.msk [vmem:[%s161 + $0xe8] sm:$0xff] %vm3629, %v3592
        %3660 = vst.msk [vmem:[%s161 + $0xf0] sm:$0xff] %vm3629, %v3594
        %3661 = vst.msk [vmem:[%s161 + $0xf8] sm:$0xff] %vm3629, %v3596
        %3694 = vrot.lane.b32.xlu0 %v1401, 1
        %v3695 = vpop.permute.xlu0 %3694
        %3696 = vrot.lane.b32.xlu0 %v1402, 1
        %v3697 = vpop.permute.xlu0 %3696
        %3698 = vrot.lane.b32.xlu0 %v1403, 1
        %v3699 = vpop.permute.xlu0 %3698
        %3700 = vrot.lane.b32.xlu0 %v1404, 1
        %v3701 = vpop.permute.xlu0 %3700
        %3702 = vrot.lane.b32.xlu0 %v1405, 1
        %v3703 = vpop.permute.xlu0 %3702
        %3704 = vrot.lane.b32.xlu0 %v1406, 1
        %v3705 = vpop.permute.xlu0 %3704
        %3706 = vrot.lane.b32.xlu0 %v1407, 1
        %v3707 = vpop.permute.xlu0 %3706
        %3708 = vrot.lane.b32.xlu0 %v1408, 1
        %v3709 = vpop.permute.xlu0 %3708
        %3710 = vrot.lane.b32.xlu0 %v1409, 1
        %v3711 = vpop.permute.xlu0 %3710
        %3712 = vrot.lane.b32.xlu0 %v1410, 1
        %v3713 = vpop.permute.xlu0 %3712
        %3714 = vrot.lane.b32.xlu0 %v1411, 1
        %v3715 = vpop.permute.xlu0 %3714
        %3716 = vrot.lane.b32.xlu0 %v1412, 1
        %v3717 = vpop.permute.xlu0 %3716
        %3718 = vrot.lane.b32.xlu0 %v1413, 1
        %v3719 = vpop.permute.xlu0 %3718
        %3720 = vrot.lane.b32.xlu0 %v1414, 1
        %v3721 = vpop.permute.xlu0 %3720
        %3722 = vrot.lane.b32.xlu0 %v1415, 1
        %v3723 = vpop.permute.xlu0 %3722
        %3724 = vrot.lane.b32.xlu0 %v1416, 1
        %v3725 = vpop.permute.xlu0 %3724
        %3726 = vrot.lane.b32.xlu0 %v1417, 1
        %v3727 = vpop.permute.xlu0 %3726
        %3728 = vrot.lane.b32.xlu0 %v1418, 1
        %v3729 = vpop.permute.xlu0 %3728
        %3730 = vrot.lane.b32.xlu0 %v1419, 1
        %v3731 = vpop.permute.xlu0 %3730
        %3732 = vrot.lane.b32.xlu0 %v1420, 1
        %v3733 = vpop.permute.xlu0 %3732
        %3734 = vrot.lane.b32.xlu0 %v1421, 1
        %v3735 = vpop.permute.xlu0 %3734
        %3736 = vrot.lane.b32.xlu0 %v1422, 1
        %v3737 = vpop.permute.xlu0 %3736
        %3738 = vrot.lane.b32.xlu0 %v1423, 1
        %v3739 = vpop.permute.xlu0 %3738
        %3740 = vrot.lane.b32.xlu0 %v1424, 1
        %v3741 = vpop.permute.xlu0 %3740
        %3742 = vrot.lane.b32.xlu0 %v1425, 1
        %v3743 = vpop.permute.xlu0 %3742
        %3744 = vrot.lane.b32.xlu0 %v1426, 1
        %v3745 = vpop.permute.xlu0 %3744
        %3746 = vrot.lane.b32.xlu0 %v1427, 1
        %v3747 = vpop.permute.xlu0 %3746
        %3748 = vrot.lane.b32.xlu0 %v1428, 1
        %v3749 = vpop.permute.xlu0 %3748
        %3750 = vrot.lane.b32.xlu0 %v1429, 1
        %v3751 = vpop.permute.xlu0 %3750
        %3752 = vrot.lane.b32.xlu0 %v1430, 1
        %v3753 = vpop.permute.xlu0 %3752
        %3754 = vrot.lane.b32.xlu0 %v1431, 1
        %v3755 = vpop.permute.xlu0 %3754
        %3756 = vrot.lane.b32.xlu0 %v1432, 1
        %v3757 = vpop.permute.xlu0 %3756
        %vm3790 = vcmask 335016
        %3791 = vst.msk [vmem:[%s161] sm:$0xff] %vm3790, %v3695
        %3792 = vst.msk [vmem:[%s161 + $0x8] sm:$0xff] %vm3790, %v3697
        %3793 = vst.msk [vmem:[%s161 + $0x10] sm:$0xff] %vm3790, %v3699
        %3794 = vst.msk [vmem:[%s161 + $0x18] sm:$0xff] %vm3790, %v3701
        %3795 = vst.msk [vmem:[%s161 + $0x20] sm:$0xff] %vm3790, %v3703
        %3796 = vst.msk [vmem:[%s161 + $0x28] sm:$0xff] %vm3790, %v3705
        %3797 = vst.msk [vmem:[%s161 + $0x30] sm:$0xff] %vm3790, %v3707
        %3798 = vst.msk [vmem:[%s161 + $0x38] sm:$0xff] %vm3790, %v3709
        %3799 = vst.msk [vmem:[%s161 + $0x40] sm:$0xff] %vm3790, %v3711
        %3800 = vst.msk [vmem:[%s161 + $0x48] sm:$0xff] %vm3790, %v3713
        %3801 = vst.msk [vmem:[%s161 + $0x50] sm:$0xff] %vm3790, %v3715
        %3802 = vst.msk [vmem:[%s161 + $0x58] sm:$0xff] %vm3790, %v3717
        %3803 = vst.msk [vmem:[%s161 + $0x60] sm:$0xff] %vm3790, %v3719
        %3804 = vst.msk [vmem:[%s161 + $0x68] sm:$0xff] %vm3790, %v3721
        %3805 = vst.msk [vmem:[%s161 + $0x70] sm:$0xff] %vm3790, %v3723
        %3806 = vst.msk [vmem:[%s161 + $0x78] sm:$0xff] %vm3790, %v3725
        %3807 = vst.msk [vmem:[%s161 + $0x80] sm:$0xff] %vm3790, %v3727
        %3808 = vst.msk [vmem:[%s161 + $0x88] sm:$0xff] %vm3790, %v3729
        %3809 = vst.msk [vmem:[%s161 + $0x90] sm:$0xff] %vm3790, %v3731
        %3810 = vst.msk [vmem:[%s161 + $0x98] sm:$0xff] %vm3790, %v3733
        %3811 = vst.msk [vmem:[%s161 + $0xa0] sm:$0xff] %vm3790, %v3735
        %3812 = vst.msk [vmem:[%s161 + $0xa8] sm:$0xff] %vm3790, %v3737
        %3813 = vst.msk [vmem:[%s161 + $0xb0] sm:$0xff] %vm3790, %v3739
        %3814 = vst.msk [vmem:[%s161 + $0xb8] sm:$0xff] %vm3790, %v3741
        %3815 = vst.msk [vmem:[%s161 + $0xc0] sm:$0xff] %vm3790, %v3743
        %3816 = vst.msk [vmem:[%s161 + $0xc8] sm:$0xff] %vm3790, %v3745
        %3817 = vst.msk [vmem:[%s161 + $0xd0] sm:$0xff] %vm3790, %v3747
        %3818 = vst.msk [vmem:[%s161 + $0xd8] sm:$0xff] %vm3790, %v3749
        %3819 = vst.msk [vmem:[%s161 + $0xe0] sm:$0xff] %vm3790, %v3751
        %3820 = vst.msk [vmem:[%s161 + $0xe8] sm:$0xff] %vm3790, %v3753
        %3821 = vst.msk [vmem:[%s161 + $0xf0] sm:$0xff] %vm3790, %v3755
        %3822 = vst.msk [vmem:[%s161 + $0xf8] sm:$0xff] %vm3790, %v3757
        %3855 = vrot.lane.b32.xlu0 %v3044, 1
        %v3856 = vpop.permute.xlu0 %3855
        %3857 = vrot.lane.b32.xlu0 %v3045, 1
        %v3858 = vpop.permute.xlu0 %3857
        %3859 = vrot.lane.b32.xlu0 %v3046, 1
        %v3860 = vpop.permute.xlu0 %3859
        %3861 = vrot.lane.b32.xlu0 %v3047, 1
        %v3862 = vpop.permute.xlu0 %3861
        %3863 = vrot.lane.b32.xlu0 %v3048, 1
        %v3864 = vpop.permute.xlu0 %3863
        %3865 = vrot.lane.b32.xlu0 %v3049, 1
        %v3866 = vpop.permute.xlu0 %3865
        %3867 = vrot.lane.b32.xlu0 %v3050, 1
        %v3868 = vpop.permute.xlu0 %3867
        %3869 = vrot.lane.b32.xlu0 %v3051, 1
        %v3870 = vpop.permute.xlu0 %3869
        %3871 = vrot.lane.b32.xlu0 %v3052, 1
        %v3872 = vpop.permute.xlu0 %3871
        %3873 = vrot.lane.b32.xlu0 %v3053, 1
        %v3874 = vpop.permute.xlu0 %3873
        %3875 = vrot.lane.b32.xlu0 %v3054, 1
        %v3876 = vpop.permute.xlu0 %3875
        %3877 = vrot.lane.b32.xlu0 %v3055, 1
        %v3878 = vpop.permute.xlu0 %3877
        %3879 = vrot.lane.b32.xlu0 %v3056, 1
        %v3880 = vpop.permute.xlu0 %3879
        %3881 = vrot.lane.b32.xlu0 %v3057, 1
        %v3882 = vpop.permute.xlu0 %3881
        %3883 = vrot.lane.b32.xlu0 %v3058, 1
        %v3884 = vpop.permute.xlu0 %3883
        %3885 = vrot.lane.b32.xlu0 %v3059, 1
        %v3886 = vpop.permute.xlu0 %3885
        %3887 = vrot.lane.b32.xlu0 %v3060, 1
        %v3888 = vpop.permute.xlu0 %3887
        %3889 = vrot.lane.b32.xlu0 %v3061, 1
        %v3890 = vpop.permute.xlu0 %3889
        %3891 = vrot.lane.b32.xlu0 %v3062, 1
        %v3892 = vpop.permute.xlu0 %3891
        %3893 = vrot.lane.b32.xlu0 %v3063, 1
        %v3894 = vpop.permute.xlu0 %3893
        %3895 = vrot.lane.b32.xlu0 %v3064, 1
        %v3896 = vpop.permute.xlu0 %3895
        %3897 = vrot.lane.b32.xlu0 %v3065, 1
        %v3898 = vpop.permute.xlu0 %3897
        %3899 = vrot.lane.b32.xlu0 %v3066, 1
        %v3900 = vpop.permute.xlu0 %3899
        %3901 = vrot.lane.b32.xlu0 %v3067, 1
        %v3902 = vpop.permute.xlu0 %3901
        %3903 = vrot.lane.b32.xlu0 %v3068, 1
        %v3904 = vpop.permute.xlu0 %3903
        %3905 = vrot.lane.b32.xlu0 %v3069, 1
        %v3906 = vpop.permute.xlu0 %3905
        %3907 = vrot.lane.b32.xlu0 %v3070, 1
        %v3908 = vpop.permute.xlu0 %3907
        %3909 = vrot.lane.b32.xlu0 %v3071, 1
        %v3910 = vpop.permute.xlu0 %3909
        %3911 = vrot.lane.b32.xlu0 %v3072, 1
        %v3912 = vpop.permute.xlu0 %3911
        %3913 = vrot.lane.b32.xlu0 %v3073, 1
        %v3914 = vpop.permute.xlu0 %3913
        %3915 = vrot.lane.b32.xlu0 %v3074, 1
        %v3916 = vpop.permute.xlu0 %3915
        %3917 = vrot.lane.b32.xlu0 %v3075, 1
        %v3918 = vpop.permute.xlu0 %3917
        %vm3951 = vcmask 499016
        %3952 = vst.msk [vmem:[%s161] sm:$0xff] %vm3951, %v3856
        %3953 = vst.msk [vmem:[%s161 + $0x8] sm:$0xff] %vm3951, %v3858
        %3954 = vst.msk [vmem:[%s161 + $0x10] sm:$0xff] %vm3951, %v3860
        %3955 = vst.msk [vmem:[%s161 + $0x18] sm:$0xff] %vm3951, %v3862
        %3956 = vst.msk [vmem:[%s161 + $0x20] sm:$0xff] %vm3951, %v3864
        %3957 = vst.msk [vmem:[%s161 + $0x28] sm:$0xff] %vm3951, %v3866
        %3958 = vst.msk [vmem:[%s161 + $0x30] sm:$0xff] %vm3951, %v3868
        %3959 = vst.msk [vmem:[%s161 + $0x38] sm:$0xff] %vm3951, %v3870
        %3960 = vst.msk [vmem:[%s161 + $0x40] sm:$0xff] %vm3951, %v3872
        %3961 = vst.msk [vmem:[%s161 + $0x48] sm:$0xff] %vm3951, %v3874
        %3962 = vst.msk [vmem:[%s161 + $0x50] sm:$0xff] %vm3951, %v3876
        %3963 = vst.msk [vmem:[%s161 + $0x58] sm:$0xff] %vm3951, %v3878
        %3964 = vst.msk [vmem:[%s161 + $0x60] sm:$0xff] %vm3951, %v3880
        %3965 = vst.msk [vmem:[%s161 + $0x68] sm:$0xff] %vm3951, %v3882
        %3966 = vst.msk [vmem:[%s161 + $0x70] sm:$0xff] %vm3951, %v3884
        %3967 = vst.msk [vmem:[%s161 + $0x78] sm:$0xff] %vm3951, %v3886
        %3968 = vst.msk [vmem:[%s161 + $0x80] sm:$0xff] %vm3951, %v3888
        %3969 = vst.msk [vmem:[%s161 + $0x88] sm:$0xff] %vm3951, %v3890
        %3970 = vst.msk [vmem:[%s161 + $0x90] sm:$0xff] %vm3951, %v3892
        %3971 = vst.msk [vmem:[%s161 + $0x98] sm:$0xff] %vm3951, %v3894
        %3972 = vst.msk [vmem:[%s161 + $0xa0] sm:$0xff] %vm3951, %v3896
        %3973 = vst.msk [vmem:[%s161 + $0xa8] sm:$0xff] %vm3951, %v3898
        %3974 = vst.msk [vmem:[%s161 + $0xb0] sm:$0xff] %vm3951, %v3900
        %3975 = vst.msk [vmem:[%s161 + $0xb8] sm:$0xff] %vm3951, %v3902
        %3976 = vst.msk [vmem:[%s161 + $0xc0] sm:$0xff] %vm3951, %v3904
        %3977 = vst.msk [vmem:[%s161 + $0xc8] sm:$0xff] %vm3951, %v3906
        %3978 = vst.msk [vmem:[%s161 + $0xd0] sm:$0xff] %vm3951, %v3908
        %3979 = vst.msk [vmem:[%s161 + $0xd8] sm:$0xff] %vm3951, %v3910
        %3980 = vst.msk [vmem:[%s161 + $0xe0] sm:$0xff] %vm3951, %v3912
        %3981 = vst.msk [vmem:[%s161 + $0xe8] sm:$0xff] %vm3951, %v3914
        %3982 = vst.msk [vmem:[%s161 + $0xf0] sm:$0xff] %vm3951, %v3916
        %3983 = vst.msk [vmem:[%s161 + $0xf8] sm:$0xff] %vm3951, %v3918
        %4016 = vrot.lane.b32.xlu0 %v2852, 41
        %v4017 = vpop.permute.xlu0 %4016
        %4018 = vrot.lane.b32.xlu0 %v2853, 41
        %v4019 = vpop.permute.xlu0 %4018
        %4020 = vrot.lane.b32.xlu0 %v2854, 41
        %v4021 = vpop.permute.xlu0 %4020
        %4022 = vrot.lane.b32.xlu0 %v2855, 41
        %v4023 = vpop.permute.xlu0 %4022
        %4024 = vrot.lane.b32.xlu0 %v2856, 41
        %v4025 = vpop.permute.xlu0 %4024
        %4026 = vrot.lane.b32.xlu0 %v2857, 41
        %v4027 = vpop.permute.xlu0 %4026
        %4028 = vrot.lane.b32.xlu0 %v2858, 41
        %v4029 = vpop.permute.xlu0 %4028
        %4030 = vrot.lane.b32.xlu0 %v2859, 41
        %v4031 = vpop.permute.xlu0 %4030
        %4032 = vrot.lane.b32.xlu0 %v2860, 41
        %v4033 = vpop.permute.xlu0 %4032
        %4034 = vrot.lane.b32.xlu0 %v2861, 41
        %v4035 = vpop.permute.xlu0 %4034
        %4036 = vrot.lane.b32.xlu0 %v2862, 41
        %v4037 = vpop.permute.xlu0 %4036
        %4038 = vrot.lane.b32.xlu0 %v2863, 41
        %v4039 = vpop.permute.xlu0 %4038
        %4040 = vrot.lane.b32.xlu0 %v2864, 41
        %v4041 = vpop.permute.xlu0 %4040
        %4042 = vrot.lane.b32.xlu0 %v2865, 41
        %v4043 = vpop.permute.xlu0 %4042
        %4044 = vrot.lane.b32.xlu0 %v2866, 41
        %v4045 = vpop.permute.xlu0 %4044
        %4046 = vrot.lane.b32.xlu0 %v2867, 41
        %v4047 = vpop.permute.xlu0 %4046
        %4048 = vrot.lane.b32.xlu0 %v2868, 41
        %v4049 = vpop.permute.xlu0 %4048
        %4050 = vrot.lane.b32.xlu0 %v2869, 41
        %v4051 = vpop.permute.xlu0 %4050
        %4052 = vrot.lane.b32.xlu0 %v2870, 41
        %v4053 = vpop.permute.xlu0 %4052
        %4054 = vrot.lane.b32.xlu0 %v2871, 41
        %v4055 = vpop.permute.xlu0 %4054
        %4056 = vrot.lane.b32.xlu0 %v2872, 41
        %v4057 = vpop.permute.xlu0 %4056
        %4058 = vrot.lane.b32.xlu0 %v2873, 41
        %v4059 = vpop.permute.xlu0 %4058
        %4060 = vrot.lane.b32.xlu0 %v2874, 41
        %v4061 = vpop.permute.xlu0 %4060
        %4062 = vrot.lane.b32.xlu0 %v2875, 41
        %v4063 = vpop.permute.xlu0 %4062
        %4064 = vrot.lane.b32.xlu0 %v2876, 41
        %v4065 = vpop.permute.xlu0 %4064
        %4066 = vrot.lane.b32.xlu0 %v2877, 41
        %v4067 = vpop.permute.xlu0 %4066
        %4068 = vrot.lane.b32.xlu0 %v2878, 41
        %v4069 = vpop.permute.xlu0 %4068
        %4070 = vrot.lane.b32.xlu0 %v2879, 41
        %v4071 = vpop.permute.xlu0 %4070
        %4072 = vrot.lane.b32.xlu0 %v2880, 41
        %v4073 = vpop.permute.xlu0 %4072
        %4074 = vrot.lane.b32.xlu0 %v2881, 41
        %v4075 = vpop.permute.xlu0 %4074
        %4076 = vrot.lane.b32.xlu0 %v2882, 41
        %v4077 = vpop.permute.xlu0 %4076
        %4078 = vrot.lane.b32.xlu0 %v2883, 41
        %v4079 = vpop.permute.xlu0 %4078
        %vm4112 = vcmask 663016
        %4113 = vst.msk [vmem:[%s161] sm:$0xff] %vm4112, %v4017
        %4114 = vst.msk [vmem:[%s161 + $0x8] sm:$0xff] %vm4112, %v4019
        %4115 = vst.msk [vmem:[%s161 + $0x10] sm:$0xff] %vm4112, %v4021
        %4116 = vst.msk [vmem:[%s161 + $0x18] sm:$0xff] %vm4112, %v4023
        %4117 = vst.msk [vmem:[%s161 + $0x20] sm:$0xff] %vm4112, %v4025
        %4118 = vst.msk [vmem:[%s161 + $0x28] sm:$0xff] %vm4112, %v4027
        %4119 = vst.msk [vmem:[%s161 + $0x30] sm:$0xff] %vm4112, %v4029
        %4120 = vst.msk [vmem:[%s161 + $0x38] sm:$0xff] %vm4112, %v4031
        %4121 = vst.msk [vmem:[%s161 + $0x40] sm:$0xff] %vm4112, %v4033
        %4122 = vst.msk [vmem:[%s161 + $0x48] sm:$0xff] %vm4112, %v4035
        %4123 = vst.msk [vmem:[%s161 + $0x50] sm:$0xff] %vm4112, %v4037
        %4124 = vst.msk [vmem:[%s161 + $0x58] sm:$0xff] %vm4112, %v4039
        %4125 = vst.msk [vmem:[%s161 + $0x60] sm:$0xff] %vm4112, %v4041
        %4126 = vst.msk [vmem:[%s161 + $0x68] sm:$0xff] %vm4112, %v4043
        %4127 = vst.msk [vmem:[%s161 + $0x70] sm:$0xff] %vm4112, %v4045
        %4128 = vst.msk [vmem:[%s161 + $0x78] sm:$0xff] %vm4112, %v4047
        %4129 = vst.msk [vmem:[%s161 + $0x80] sm:$0xff] %vm4112, %v4049
        %4130 = vst.msk [vmem:[%s161 + $0x88] sm:$0xff] %vm4112, %v4051
        %4131 = vst.msk [vmem:[%s161 + $0x90] sm:$0xff] %vm4112, %v4053
        %4132 = vst.msk [vmem:[%s161 + $0x98] sm:$0xff] %vm4112, %v4055
        %4133 = vst.msk [vmem:[%s161 + $0xa0] sm:$0xff] %vm4112, %v4057
        %4134 = vst.msk [vmem:[%s161 + $0xa8] sm:$0xff] %vm4112, %v4059
        %4135 = vst.msk [vmem:[%s161 + $0xb0] sm:$0xff] %vm4112, %v4061
        %4136 = vst.msk [vmem:[%s161 + $0xb8] sm:$0xff] %vm4112, %v4063
        %4137 = vst.msk [vmem:[%s161 + $0xc0] sm:$0xff] %vm4112, %v4065
        %4138 = vst.msk [vmem:[%s161 + $0xc8] sm:$0xff] %vm4112, %v4067
        %4139 = vst.msk [vmem:[%s161 + $0xd0] sm:$0xff] %vm4112, %v4069
        %4140 = vst.msk [vmem:[%s161 + $0xd8] sm:$0xff] %vm4112, %v4071
        %4141 = vst.msk [vmem:[%s161 + $0xe0] sm:$0xff] %vm4112, %v4073
        %4142 = vst.msk [vmem:[%s161 + $0xe8] sm:$0xff] %vm4112, %v4075
        %4143 = vst.msk [vmem:[%s161 + $0xf0] sm:$0xff] %vm4112, %v4077
        %4144 = vst.msk [vmem:[%s161 + $0xf8] sm:$0xff] %vm4112, %v4079
        %s4145 = sand.u32 %s74, 1
        %s4146 = scalar_lea.sflag [#allocation4], %s4145
        %s4147 = sand.u32 %s74, 1
        %s4148 = smul.addr %s4147, 256
        %s4149 = scalar_lea.vmem [#allocation5], %s4148
        // Predicated region
        $region33: #{tpu_custom_call.1} parent=27 // pred_check
          %p4150 = pneg %p84
        $region34: #{tpu_custom_call.1} parent=27 // pred_check_branch
          %4152 = sbr.rel (%p4150) target = $region36
        $region35: #{tpu_custom_call.1} parent=27 // pred_region
          %s4153 = smul.u32 32, %s19
          %s4155 = ssub.s32 4096, 4096
          %4156 = vsyncadd %s4146, %s4155
          %s4157 = smul.addr %s4153, 128
          %s4158 = scalar_lea.hbm %s2, %s4157
          %s4159 = sshll.u32 %s4149, 4
          %s4160 = int_to_ptr.vmem [resolvable:$true] %s4159
          %4165 = dma.vmem_to_hbm [thread:$0]  %s4160, 4096, %s4158, %s4146, 128, 128, 8
        $region36: #{tpu_custom_call.1} parent=27 // pred_fallthru
          _
      $region28: #{tpu_custom_call.1} parent=5 // pred_fallthru
        _
      %p4166 = scmp.le.s32.totalorder 2, %s14
      // Predicated region
      $region37: #{tpu_custom_call.1} parent=5 // pred_check
        %p4167 = pneg %p4166
      $region38: #{tpu_custom_call.1} parent=5 // pred_check_branch
        %4169 = sbr.rel (%p4167) target = $region40
      $region39: #{tpu_custom_call.1} parent=5 // pred_region
        %s4170 = ssub.s32 %s14, 2
        // Predicated region
        $region41: #{tpu_custom_call.1} parent=39 // pred_check
          %p4171 = pneg %p90
        $region42: #{tpu_custom_call.1} parent=39 // pred_check_branch
          %4173 = sbr.rel (%p4171) target = $region44
        $region43: #{tpu_custom_call.1} parent=39 // pred_region
          %s4174 = sand.u32 %s75, 1
          %s4175 = scalar_lea.sflag [#allocation4], %s4174
          %s4176 = sand.u32 %s75, 1
          %s4177 = smul.addr %s4176, 256
          %s4178 = scalar_lea.vmem [#allocation5], %s4177
          %4179 = dma.done %s4175, 4096
        $region44: #{tpu_custom_call.1} parent=39 // pred_fallthru
          _
      $region40: #{tpu_custom_call.1} parent=5 // pred_fallthru
        _
    $region6: #{tpu_custom_call.1} parent=1 // loop_footer
      %s18 = sadd.s32 1, %s14
    $region7: #{tpu_custom_call.1} parent=1 // loop_footer_branch
      %13 = sbr.rel target = $region3
    $region8: #{tpu_custom_call.1} parent=1 // loop_exit
      _
    %4180 = vsyncpa [#allocation3], 1
    %s4181 = scalar_lea.sflag [#allocation3], 1
    %4182 = vsyncpa %s4181, 1
    %4183 = vsyncpa [#allocation4], 1
    %s4184 = scalar_lea.sflag [#allocation4], 1
    %4185 = vsyncpa %s4184, 1

</llo_original>
